<compile_context>
chip_gen: v5e
topology: v5e:2x2
jax: 0.10.0
libtpu: 0.0.40
codegen_flags: <defaults>
</compile_context>

<pallas_src>
import functools
import math

import numpy as np
import jax
import jax.numpy as jnp
from jax.experimental import pallas as pl
from jax.experimental.pallas import tpu as pltpu


F_PAD = 128        # lane-dense output / obs-state width (real F masked out)
NEG_BIG = 1e30

WEIGHT_ORDER = ['w_in_obs', 'w_gap', 'wq', 'wk', 'wv', 'wo',
                'w1', 'b1', 'w2', 'b2', 'w_out', 'b_out']


# ----------------------------------------------------------------------------
# Pallas kernel: one grid step == one scheduling level of the NRTSI imputer.
# Batch folded into the sublane axis (B*T rows); obs state resident in VMEM.
# ----------------------------------------------------------------------------
def imputer_kernel(n_layers, n_heads, f_real, teacher_forcing,
                   gaps_ref,                        # scalar-prefetch (SMEM)
                   colv_ref, tgtv_ref,              # per-level blocks
                   sameb_ref, hbase_ref, obs0_ref, gt_ref, mm_ref, pair_ref,
                   w_in_obs_ref, w_gap_ref, wq_ref, wk_ref, wv_ref, wo_ref,
                   w1_ref, b1_ref, w2_ref, b2_ref, w_out_ref, b_out_ref,
                   loss_ref, dist_ref, miss_ref,    # SMEM scalar outputs
                   obs_state):                      # VMEM scratch (BT, F_PAD)
    f32 = jnp.float32
    bf16 = jnp.bfloat16
    lvl = pl.program_id(0)

    @pl.when(lvl == 0)
    def _init():
        obs_state[...] = obs0_ref[...]
        loss_ref[0] = 0.0
        dist_ref[0] = 0.0
        miss_ref[0] = 0.0

    gap = gaps_ref[lvl].astype(f32)         # per-level gap scalar (SMEM)
    colv = colv_ref[0]                      # (1, BT)  attendable columns
    tv = tgtv_ref[0]                        # (BT, 1)  target rows this level

    def layer_norm(x):                      # f32 on the VPU
        m = jnp.mean(x, axis=-1, keepdims=True)
        v = jnp.mean(jnp.square(x - m), axis=-1, keepdims=True)
        return (x - m) * jax.lax.rsqrt(v + 1e-5)

    # Decomposed input projection: [obs_vals | time_enc | gap] @ W_in + b_in
    gap_term = gap * w_gap_ref[...]                              # (1, D)
    h_tgt = hbase_ref[...] + gap_term                            # query tokens
    h_obs = h_tgt + jnp.dot(obs_state[...].astype(bf16), w_in_obs_ref[...],
                            preferred_element_type=f32)          # key/value tokens

    # Block-diagonal additive attention mask: same batch item AND valid column
    bias = (sameb_ref[...] * colv - 1.0) * NEG_BIG   # 0 valid / -1e30 masked

    h_obs_b = h_obs.astype(bf16)            # fixed K/V source for all layers
    for l in range(n_layers):
        h_tgt_b = h_tgt.astype(bf16)
        attn = None
        for h in range(n_heads):
            wi = l * n_heads + h
            # Per-head weights indexed on the leading ref axis.
            q = jnp.dot(h_tgt_b, wq_ref[wi], preferred_element_type=f32)
            k = jnp.dot(h_obs_b, wk_ref[wi], preferred_element_type=f32)
            v = jnp.dot(h_obs_b, wv_ref[wi], preferred_element_type=f32)
            # 1/sqrt(hd) already folded into w_q on the host.
            s = jax.lax.dot_general(q, k, (((1,), (1,)), ((), ())),
                                    preferred_element_type=f32) + bias
            s = s - jnp.max(s, axis=-1, keepdims=True)
            p = jnp.exp(s)
            p = p * pl.reciprocal(jnp.sum(p, axis=-1, keepdims=True), approx=True)
            ctx = jnp.dot(p.astype(bf16), v.astype(bf16),
                          preferred_element_type=f32)
            contrib = jnp.dot(ctx.astype(bf16), wo_ref[wi],
                              preferred_element_type=f32)
            attn = contrib if attn is None else attn + contrib
        h_tgt = layer_norm(h_tgt + attn)

        ff = jnp.dot(h_tgt.astype(bf16), w1_ref[l],
                     preferred_element_type=f32) + b1_ref[l]
        ff = jnp.maximum(ff, 0.0)
        ff = jnp.dot(ff.astype(bf16), w2_ref[l],
                     preferred_element_type=f32) + b2_ref[l]
        h_tgt = layer_norm(h_tgt + ff)

    # Lane-dense (BT, 128) output; padded columns of w_out/b_out are zero.
    out = jnp.dot(h_tgt.astype(bf16), w_out_ref[...],
                  preferred_element_type=f32) + b_out_ref[...]

    # ---- carry the observation state to the next level ----
    fill = gt_ref[...] if teacher_forcing else out
    obs_state[...] = jnp.where(tv > 0.5, fill, obs_state[...])

    # ---- fused per-level metrics, accumulated in SMEM across levels ----
    diff = (out - gt_ref[...]) * tv          # padded cols / non-target rows = 0
    l1 = jnp.sum(jnp.abs(diff)) / (jnp.sum(tv) * f_real)   # torch.mean(|imp-gt|)

    sq = diff * diff
    # pair matrix sums per-player (x, y) squared diffs, upscale factors folded
    pair_sums = jnp.dot(sq, pair_ref[...], preferred_element_type=f32)
    dist = jnp.sum(jnp.sqrt(pair_sums))

    miss = jnp.sum((1.0 - mm_ref[...]) * tv) * 0.5

    loss_ref[0] += l1
    dist_ref[0] += dist
    miss_ref[0] += miss


# ----------------------------------------------------------------------------
# Fused multi-level forward (one pallas_call per distinct schedule length)
# ----------------------------------------------------------------------------
def _build_fused_forward(hp, n_levels, teacher_forcing):
    B, T = hp['bs'], hp['seq_len']
    F = hp['n_players'] * hp['n_features']
    BT = B * T
    L, H = hp['n_layers'], hp['n_heads']

    vmem = pl.BlockSpec(memory_space=pltpu.MemorySpace.VMEM)
    smem = pl.BlockSpec(memory_space=pltpu.MemorySpace.SMEM)
    kern = functools.partial(imputer_kernel, L, H, float(F), teacher_forcing)

    grid_spec = pltpu.PrefetchScalarGridSpec(
        num_scalar_prefetch=1,                       # gaps -> SMEM
        grid=(n_levels,),
        in_specs=[pl.BlockSpec((1, 1, BT), lambda l, gaps: (l, 0, 0)),  # colv
                  pl.BlockSpec((1, BT, 1), lambda l, gaps: (l, 0, 0))]  # tgtv
                 + [vmem] * 18,                      # consts + weights, resident
        out_specs=(smem, smem, smem),
        scratch_shapes=[pltpu.VMEM((BT, F_PAD), jnp.float32)])

    @jax.jit
    def fwd(weights, consts, gaps, colv, tgtv, obs_init):
        wlist = [weights[k] for k in WEIGHT_ORDER]
        loss, dist, miss = pl.pallas_call(
            kern,
            grid_spec=grid_spec,
            out_shape=(jax.ShapeDtypeStruct((1,), jnp.float32),
                       jax.ShapeDtypeStruct((1,), jnp.float32),
                       jax.ShapeDtypeStruct((1,), jnp.float32)),
            compiler_params=pltpu.CompilerParams(
                dimension_semantics=("arbitrary",)),
        )(gaps, colv, tgtv,
          consts['same_b'], consts['h_base'], obs_init,
          consts['gt_pad'], consts['miss_pad'], consts['pair'], *wlist)
        return loss[0], dist[0], miss[0]

    return fwd


# ----------------------------------------------------------------------------
# Host-side helpers: time encoding, weights, constants, schedule
# ----------------------------------------------------------------------------
def time_encoding(times, dim):
    t = np.asarray(times, np.float32)[:, None]
    i = np.arange(dim // 2, dtype=np.float32)[None, :]
    freq = np.exp(-np.log(10000.0) * (2.0 * i / dim))
    ang = t * freq
    return np.concatenate([np.sin(ang), np.cos(ang)], axis=-1)      # (T, dim)


def init_weights(key, hp, F):
    D, Din, L, E = hp['model_dim'], hp['inner_dim'], hp['n_layers'], hp['time_enc_dim']
    Fin = F + E + 1
    ks = jax.random.split(key, 8)

    def w(k, shape, fan_in):
        return jax.random.normal(k, shape, jnp.float32) / jnp.sqrt(float(fan_in))

    return dict(
        w_in=w(ks[0], (Fin, D), Fin), b_in=jnp.zeros((1, D), jnp.float32),
        wq=w(ks[1], (L, D, D), D), wk=w(ks[2], (L, D, D), D),
        wv=w(ks[3], (L, D, D), D), wo=w(ks[4], (L, D, D), D),
        w1=w(ks[5], (L, D, Din), D), b1=jnp.zeros((L, 1, Din), jnp.float32),
        w2=w(ks[6], (L, Din, D), Din), b2=jnp.zeros((L, 1, D), jnp.float32),
        w_out=w(ks[7], (D, F), D), b_out=jnp.zeros((1, F), jnp.float32),
    )


def prepare_weights(raw, hp):
    """Per-head layout, 1/sqrt(hd) folding, bf16 MXU operands, lane padding."""
    D = hp['model_dim']; H = hp['n_heads']; hd = D // H; L = hp['n_layers']
    F = hp['n_players'] * hp['n_features']
    E = hp['time_enc_dim']
    inv_sqrt_hd = 1.0 / math.sqrt(hd)
    bf16 = jnp.bfloat16

    def split_qkv(w, scale=1.0):     # (L, D, D) -> (L*H, D, hd), column-grouped
        return (w.reshape(L, D, H, hd).transpose(0, 2, 1, 3)
                 .reshape(L * H, D, hd) * scale).astype(bf16)

    def split_o(w):                   # (L, D, D) -> (L*H, hd, D), row-grouped
        return w.reshape(L, H, hd, D).reshape(L * H, hd, D).astype(bf16)

    w_in = raw['w_in']
    return dict(
        w_in_obs=jnp.pad(w_in[:F], ((0, F_PAD - F), (0, 0))).astype(bf16),
        w_gap=w_in[F + E:F + E + 1].astype(jnp.float32),            # (1, D)
        wq=split_qkv(raw['wq'], inv_sqrt_hd),
        wk=split_qkv(raw['wk']),
        wv=split_qkv(raw['wv']),
        wo=split_o(raw['wo']),
        w1=raw['w1'].astype(bf16), b1=raw['b1'].astype(jnp.float32),
        w2=raw['w2'].astype(bf16), b2=raw['b2'].astype(jnp.float32),
        w_out=jnp.pad(raw['w_out'], ((0, 0), (0, F_PAD - F))).astype(bf16),
        b_out=jnp.pad(raw['b_out'], ((0, 0), (0, F_PAD - F))).astype(jnp.float32),
    )


def build_consts(hp, raw_weights, target_data, mask_np):
    B, T = hp['bs'], hp['seq_len']
    F = hp['n_players'] * hp['n_features']
    E = hp['time_enc_dim']
    BT = B * T
    P = hp['n_players']; nf = hp['n_features']

    te_bt = np.tile(time_encoding(np.arange(T), E), (B, 1))        # (BT, E)
    w_in = np.asarray(raw_weights['w_in'], np.float32)
    b_in = np.asarray(raw_weights['b_in'], np.float32)
    h_base = te_bt @ w_in[F:F + E] + b_in                          # (BT, D)

    idx = np.arange(BT)
    same_b = (idx[:, None] // T == idx[None, :] // T).astype(np.float32)

    gt = np.asarray(target_data, np.float32).reshape(BT, F)
    gt_pad = np.pad(gt, ((0, 0), (0, F_PAD - F)))
    miss = np.asarray(mask_np, np.float32).reshape(BT, F)
    miss_pad = np.pad(miss, ((0, 0), (0, F_PAD - F)), constant_values=1.0)

    # Pair-sum matrix with upscale factors folded in (per-player squared norm).
    # TODO(synk): reshape_tensor(upscale=True) internals not given; per-feature
    # pitch scales (scale_x, scale_y) assumed for features 0/1 of each player.
    pair = np.zeros((F_PAD, 128), np.float32)
    for p in range(P):
        pair[nf * p + 0, p] = hp['scale_x'] ** 2
        pair[nf * p + 1, p] = hp['scale_y'] ** 2

    return dict(h_base=jnp.asarray(h_base, jnp.float32),
                same_b=jnp.asarray(same_b),
                gt_pad=jnp.asarray(gt_pad),
                miss_pad=jnp.asarray(miss_pad),
                pair=jnp.asarray(pair))


def get_next_to_impute(mask, n_max_level):
    seq_len = mask.shape[1]
    obs = np.nonzero(mask[0, :, 0] == 1)[0]
    min_dist = np.zeros(seq_len)
    for i in range(seq_len):
        if i not in obs:
            min_dist[i] = np.abs(obs - i).min()
    gap = int(min_dist.max())
    if gap > 2 ** n_max_level:
        gap = 2 ** n_max_level
        next_list = np.nonzero(min_dist >= gap)[0].tolist()
    else:
        next_list = np.nonzero(min_dist == gap)[0].tolist()
    return [int(i) for i in next_list], gap


def build_schedule(mask_np, hp, min_gap, max_gap):
    """Host scalar control flow (same bookkeeping as the original while loop),
    turned into static per-level (gap, attendable-columns, target-rows) arrays."""
    seq_len = mask_np.shape[1]
    mask_work = mask_np.copy()
    obs_count = [int(i) for i in np.nonzero(mask_np[0, :, 0] == 1)[0]]
    cur_valid = np.zeros(seq_len, np.float32)
    cur_valid[obs_count] = 1.0

    gaps, col_valids, tgt_valids = [], [], []
    while len(obs_count) < seq_len:
        next_list, gap = get_next_to_impute(mask_work, hp['n_max_level'])
        obs_count += next_list
        mask_work[:, next_list, :] = 1
        if min_gap < gap <= max_gap:
            tgt = np.zeros(seq_len, np.float32)
            tgt[next_list] = 1.0
            gaps.append(int(gap))
            col_valids.append(cur_valid.copy())
            tgt_valids.append(tgt)
            cur_valid = np.maximum(cur_valid, tgt)
        # levels outside (min_gap, max_gap] are skipped (never imputed /
        # never become attendable), matching the original control flow
    if not gaps:
        return (np.zeros((0,), np.int32), np.zeros((0, seq_len), np.float32),
                np.zeros((0, seq_len), np.float32))
    return (np.asarray(gaps, np.int32), np.stack(col_valids), np.stack(tgt_valids))


def nrtsi_forward(hp, weights, consts, input_data, mask_np, min_gap, max_gap,
                  fwd_cache, teacher_forcing=False):
    B, T = hp['bs'], hp['seq_len']
    F = hp['n_players'] * hp['n_features']
    BT = B * T

    ret = {'loss': 0, 'pred_dist': 0}
    gaps_np, colv_np, tgtv_np = build_schedule(mask_np, hp, min_gap, max_gap)
    n_levels = int(gaps_np.shape[0])
    if n_levels == 0:
        ret['total_loss'] = jnp.float32(0.0)
        ret['pred_dist'] = jnp.float32(1.0)
        return ret

    key = (n_levels, bool(teacher_forcing))
    if key not in fwd_cache:
        fwd_cache[key] = _build_fused_forward(hp, n_levels, teacher_forcing)
    fwd = fwd_cache[key]

    # Batch-major tiling of the per-level masks (row/col index = b*T + t).
    colv = np.tile(colv_np, (1, B)).reshape(n_levels, 1, BT).astype(np.float32)
    tgtv = np.tile(tgtv_np, (1, B)).reshape(n_levels, BT, 1).astype(np.float32)

    obs_init = (np.asarray(input_data, np.float32)
                * np.asarray(mask_np, np.float32)).reshape(BT, F)
    obs_init = jnp.asarray(np.pad(obs_init, ((0, 0), (0, F_PAD - F))))

    loss_sum, dist_sum, miss_sum = fwd(weights, consts,
                                       jnp.asarray(gaps_np),
                                       jnp.asarray(colv), jnp.asarray(tgtv),
                                       obs_init)

    num_levels = n_levels + 1e-6
    ret['total_loss'] = loss_sum / num_levels
    ret['pred_dist'] = (dist_sum + 1e-6) / (miss_sum + 1e-6)
    return ret


if __name__ == "__main__":
    hp = dict(n_players=6, n_features=2, seq_len=8, bs=2,
              time_enc_dim=16, model_dim=32, inner_dim=64,
              n_layers=2, n_heads=4, n_max_level=3,
              scale_x=28.0, scale_y=15.0)
    F = hp['n_players'] * hp['n_features']

    key = jax.random.PRNGKey(0)
    k_data, k_w = jax.random.split(key)
    input_data = np.asarray(
        jax.random.normal(k_data, (hp['bs'], hp['seq_len'], F), jnp.float32))
    target_data = input_data                          # data[1] = data[0].clone()

    # TODO(synk): deterministic observed-frame mask instead of random generate_mask().
    observed_idx = [0, hp['seq_len'] - 1]
    mask_np = np.zeros((hp['bs'], hp['seq_len'], F), np.float32)
    mask_np[:, observed_idx, :] = 1.0

    raw_weights = init_weights(k_w, hp, F)
    weights = prepare_weights(raw_weights, hp)
    consts = build_consts(hp, raw_weights, target_data, mask_np)

    fwd_cache = {}
    ret = nrtsi_forward(hp, weights, consts, input_data, mask_np,
                        min_gap=0, max_gap=100, fwd_cache=fwd_cache,
                        teacher_forcing=False)
    jax.block_until_ready((ret['total_loss'], ret['pred_dist']))
    print("KERNEL_OK")
</pallas_src>

<mosaic_0001>
module attributes {stable_mosaic.version = 11 : i64} {
  func.func @imputer_kernel(%arg0: i32, %arg1: memref<2xi32, #tpu.memory_space<smem>>, %arg2: memref<1x1x16xf32, #tpu.memory_space<vmem>>, %arg3: memref<1x16x1xf32, #tpu.memory_space<vmem>>, %arg4: memref<16x16xf32, #tpu.memory_space<vmem>>, %arg5: memref<16x32xf32, #tpu.memory_space<vmem>>, %arg6: memref<16x128xf32, #tpu.memory_space<vmem>>, %arg7: memref<16x128xf32, #tpu.memory_space<vmem>>, %arg8: memref<16x128xf32, #tpu.memory_space<vmem>>, %arg9: memref<128x128xf32, #tpu.memory_space<vmem>>, %arg10: memref<128x32xbf16, #tpu.memory_space<vmem>>, %arg11: memref<1x32xf32, #tpu.memory_space<vmem>>, %arg12: memref<8x32x8xbf16, #tpu.memory_space<vmem>>, %arg13: memref<8x32x8xbf16, #tpu.memory_space<vmem>>, %arg14: memref<8x32x8xbf16, #tpu.memory_space<vmem>>, %arg15: memref<8x8x32xbf16, #tpu.memory_space<vmem>>, %arg16: memref<2x32x64xbf16, #tpu.memory_space<vmem>>, %arg17: memref<2x1x64xf32, #tpu.memory_space<vmem>>, %arg18: memref<2x64x32xbf16, #tpu.memory_space<vmem>>, %arg19: memref<2x1x32xf32, #tpu.memory_space<vmem>>, %arg20: memref<32x128xbf16, #tpu.memory_space<vmem>>, %arg21: memref<1x128xf32, #tpu.memory_space<vmem>>, %arg22: memref<1xf32, #tpu.memory_space<smem>>, %arg23: memref<1xf32, #tpu.memory_space<smem>>, %arg24: memref<1xf32, #tpu.memory_space<smem>>, %arg25: memref<16x128xf32, #tpu.memory_space<vmem>>) attributes {dimension_semantics = [#tpu.dimension_semantics<arbitrary>], iteration_bounds = array<i64: 2>, scalar_prefetch = 1 : i64, scratch_operands = 1 : i64, tpu.core_type = #tpu.core_type<tc>, window_params = [{transform_indices = @transform_0, window_bounds = array<i64: 1, 1, 16>}, {transform_indices = @transform_1, window_bounds = array<i64: 1, 16, 1>}, {pipeline_mode = #tpu.pipeline_mode<synchronous>, transform_indices = @transform_2, window_bounds = array<i64: 16, 16>}, {pipeline_mode = #tpu.pipeline_mode<synchronous>, transform_indices = @transform_3, window_bounds = array<i64: 16, 32>}, {pipeline_mode = #tpu.pipeline_mode<synchronous>, transform_indices = @transform_4, window_bounds = array<i64: 16, 128>}, {pipeline_mode = #tpu.pipeline_mode<synchronous>, transform_indices = @transform_5, window_bounds = array<i64: 16, 128>}, {pipeline_mode = #tpu.pipeline_mode<synchronous>, transform_indices = @transform_6, window_bounds = array<i64: 16, 128>}, {pipeline_mode = #tpu.pipeline_mode<synchronous>, transform_indices = @transform_7, window_bounds = array<i64: 128, 128>}, {pipeline_mode = #tpu.pipeline_mode<synchronous>, transform_indices = @transform_8, window_bounds = array<i64: 128, 32>}, {pipeline_mode = #tpu.pipeline_mode<synchronous>, transform_indices = @transform_9, window_bounds = array<i64: 1, 32>}, {pipeline_mode = #tpu.pipeline_mode<synchronous>, transform_indices = @transform_10, window_bounds = array<i64: 8, 32, 8>}, {pipeline_mode = #tpu.pipeline_mode<synchronous>, transform_indices = @transform_11, window_bounds = array<i64: 8, 32, 8>}, {pipeline_mode = #tpu.pipeline_mode<synchronous>, transform_indices = @transform_12, window_bounds = array<i64: 8, 32, 8>}, {pipeline_mode = #tpu.pipeline_mode<synchronous>, transform_indices = @transform_13, window_bounds = array<i64: 8, 8, 32>}, {pipeline_mode = #tpu.pipeline_mode<synchronous>, transform_indices = @transform_14, window_bounds = array<i64: 2, 32, 64>}, {pipeline_mode = #tpu.pipeline_mode<synchronous>, transform_indices = @transform_15, window_bounds = array<i64: 2, 1, 64>}, {pipeline_mode = #tpu.pipeline_mode<synchronous>, transform_indices = @transform_16, window_bounds = array<i64: 2, 64, 32>}, {pipeline_mode = #tpu.pipeline_mode<synchronous>, transform_indices = @transform_17, window_bounds = array<i64: 2, 1, 32>}, {pipeline_mode = #tpu.pipeline_mode<synchronous>, transform_indices = @transform_18, window_bounds = array<i64: 32, 128>}, {pipeline_mode = #tpu.pipeline_mode<synchronous>, transform_indices = @transform_19, window_bounds = array<i64: 1, 128>}, {transform_indices = @transform_20, window_bounds = array<i64: 1>}, {transform_indices = @transform_21, window_bounds = array<i64: 1>}, {transform_indices = @transform_22, window_bounds = array<i64: 1>}]} {
    %c0_i32 = arith.constant 0 : i32
    %0 = arith.cmpi eq, %arg0, %c0_i32 : i32
    %1 = arith.extui %0 : i1 to i32
    %c0_i32_0 = arith.constant 0 : i32
    %2 = arith.cmpi ne, %1, %c0_i32_0 : i32
    scf.if %2 {
      %c0_251 = arith.constant 0 : index
      %c0_252 = arith.constant 0 : index
      %428 = vector.load %arg6[%c0_251, %c0_252] : memref<16x128xf32, #tpu.memory_space<vmem>>, vector<16x128xf32>
      %c0_253 = arith.constant 0 : index
      %c0_254 = arith.constant 0 : index
      %429 = vector.load %arg25[%c0_253, %c0_254] : memref<16x128xf32, #tpu.memory_space<vmem>>, vector<16x128xf32>
      tpu.vector_store %arg25[%c0_253, %c0_254], %428 {strides = array<i32>} : memref<16x128xf32, #tpu.memory_space<vmem>>, vector<16x128xf32>,
      %cst_255 = arith.constant 0.000000e+00 : f32
      %c0_256 = arith.constant 0 : index
      %430 = memref.load %arg22[%c0_256] : memref<1xf32, #tpu.memory_space<smem>>
      memref.store %cst_255, %arg22[%c0_256] : memref<1xf32, #tpu.memory_space<smem>>
      %cst_257 = arith.constant 0.000000e+00 : f32
      %c0_258 = arith.constant 0 : index
      %431 = memref.load %arg23[%c0_258] : memref<1xf32, #tpu.memory_space<smem>>
      memref.store %cst_257, %arg23[%c0_258] : memref<1xf32, #tpu.memory_space<smem>>
      %cst_259 = arith.constant 0.000000e+00 : f32
      %c0_260 = arith.constant 0 : index
      %432 = memref.load %arg24[%c0_260] : memref<1xf32, #tpu.memory_space<smem>>
      memref.store %cst_259, %arg24[%c0_260] : memref<1xf32, #tpu.memory_space<smem>>
    } else {
    }
    %3 = arith.index_cast %arg0 : i32 to index
    %4 = memref.load %arg1[%3] : memref<2xi32, #tpu.memory_space<smem>>
    %5 = arith.sitofp %4 : i32 to f32
    %c0 = arith.constant 0 : index
    %c0_1 = arith.constant 0 : index
    %c0_2 = arith.constant 0 : index
    %6 = vector.load %arg2[%c0, %c0_1, %c0_2] : memref<1x1x16xf32, #tpu.memory_space<vmem>>, vector<1x1x16xf32>
    %7 = vector.shape_cast %6 : vector<1x1x16xf32> to vector<1x16xf32>
    %c0_3 = arith.constant 0 : index
    %c0_4 = arith.constant 0 : index
    %c0_5 = arith.constant 0 : index
    %8 = vector.load %arg3[%c0_3, %c0_4, %c0_5] : memref<1x16x1xf32, #tpu.memory_space<vmem>>, vector<1x16x1xf32>
    %9 = vector.shape_cast %8 : vector<1x16x1xf32> to vector<16x1xf32>
    %c0_6 = arith.constant 0 : index
    %c0_7 = arith.constant 0 : index
    %10 = vector.load %arg11[%c0_6, %c0_7] : memref<1x32xf32, #tpu.memory_space<vmem>>, vector<1x32xf32>
    %11 = vector.broadcast %5 : f32 to vector<1x32xf32>
    %12 = arith.mulf %11, %10 : vector<1x32xf32>
    %c0_8 = arith.constant 0 : index
    %c0_9 = arith.constant 0 : index
    %13 = vector.load %arg5[%c0_8, %c0_9] : memref<16x32xf32, #tpu.memory_space<vmem>>, vector<16x32xf32>
    %14 = vector.broadcast %12 : vector<1x32xf32> to vector<16x32xf32>
    %15 = arith.addf %13, %14 : vector<16x32xf32>
    %c0_10 = arith.constant 0 : index
    %c0_11 = arith.constant 0 : index
    %16 = vector.load %arg25[%c0_10, %c0_11] : memref<16x128xf32, #tpu.memory_space<vmem>>, vector<16x128xf32>
    %17 = arith.truncf %16 : vector<16x128xf32> to vector<16x128xbf16>
    %c0_12 = arith.constant 0 : index
    %c0_13 = arith.constant 0 : index
    %18 = vector.load %arg10[%c0_12, %c0_13] : memref<128x32xbf16, #tpu.memory_space<vmem>>, vector<128x32xbf16>
    %cst = arith.constant dense<0.000000e+00> : vector<16x32xf32>
    %19 = tpu.matmul %17, %18, %cst {dimension_numbers = #tpu.dot_dimension_numbers<[1], [0], [0], [1], [0, 0, 1, 1], [], []>} : vector<16x128xbf16>, vector<128x32xbf16>, vector<16x32xf32> -> vector<16x32xf32>
    %20 = arith.addf %15, %19 : vector<16x32xf32>
    %c0_14 = arith.constant 0 : index
    %c0_15 = arith.constant 0 : index
    %21 = vector.load %arg4[%c0_14, %c0_15] : memref<16x16xf32, #tpu.memory_space<vmem>>, vector<16x16xf32>
    %22 = vector.broadcast %7 : vector<1x16xf32> to vector<16x16xf32>
    %23 = arith.mulf %21, %22 : vector<16x16xf32>
    %cst_16 = arith.constant 1.000000e+00 : f32
    %24 = vector.broadcast %cst_16 : f32 to vector<16x16xf32>
    %25 = arith.subf %23, %24 : vector<16x16xf32>
    %cst_17 = arith.constant 1.000000e+30 : f32
    %26 = vector.broadcast %cst_17 : f32 to vector<16x16xf32>
    %27 = arith.mulf %25, %26 : vector<16x16xf32>
    %28 = arith.truncf %20 : vector<16x32xf32> to vector<16x32xbf16>
    %29 = arith.truncf %15 : vector<16x32xf32> to vector<16x32xbf16>
    %c0_18 = arith.constant 0 : index
    %c0_19 = arith.constant 0 : index
    %c0_20 = arith.constant 0 : index
    %30 = vector.load %arg12[%c0_18, %c0_19, %c0_20] : memref<8x32x8xbf16, #tpu.memory_space<vmem>>, vector<1x32x8xbf16>
    %31 = vector.shape_cast %30 : vector<1x32x8xbf16> to vector<32x8xbf16>
    %cst_21 = arith.constant dense<0.000000e+00> : vector<16x8xf32>
    %32 = tpu.matmul %29, %31, %cst_21 {dimension_numbers = #tpu.dot_dimension_numbers<[1], [0], [0], [1], [0, 0, 1, 1], [], []>} : vector<16x32xbf16>, vector<32x8xbf16>, vector<16x8xf32> -> vector<16x8xf32>
    %c0_22 = arith.constant 0 : index
    %c0_23 = arith.constant 0 : index
    %c0_24 = arith.constant 0 : index
    %33 = vector.load %arg13[%c0_22, %c0_23, %c0_24] : memref<8x32x8xbf16, #tpu.memory_space<vmem>>, vector<1x32x8xbf16>
    %34 = vector.shape_cast %33 : vector<1x32x8xbf16> to vector<32x8xbf16>
    %cst_25 = arith.constant dense<0.000000e+00> : vector<16x8xf32>
    %35 = tpu.matmul %28, %34, %cst_25 {dimension_numbers = #tpu.dot_dimension_numbers<[1], [0], [0], [1], [0, 0, 1, 1], [], []>} : vector<16x32xbf16>, vector<32x8xbf16>, vector<16x8xf32> -> vector<16x8xf32>
    %c0_26 = arith.constant 0 : index
    %c0_27 = arith.constant 0 : index
    %c0_28 = arith.constant 0 : index
    %36 = vector.load %arg14[%c0_26, %c0_27, %c0_28] : memref<8x32x8xbf16, #tpu.memory_space<vmem>>, vector<1x32x8xbf16>
    %37 = vector.shape_cast %36 : vector<1x32x8xbf16> to vector<32x8xbf16>
    %cst_29 = arith.constant dense<0.000000e+00> : vector<16x8xf32>
    %38 = tpu.matmul %28, %37, %cst_29 {dimension_numbers = #tpu.dot_dimension_numbers<[1], [0], [0], [1], [0, 0, 1, 1], [], []>} : vector<16x32xbf16>, vector<32x8xbf16>, vector<16x8xf32> -> vector<16x8xf32>
    %cst_30 = arith.constant dense<0.000000e+00> : vector<16x16xf32>
    %39 = tpu.matmul %32, %35, %cst_30 {dimension_numbers = #tpu.dot_dimension_numbers<[1], [1], [0], [0], [0, 0, 1, 0], [], []>} : vector<16x8xf32>, vector<16x8xf32>, vector<16x16xf32> -> vector<16x16xf32>
    %40 = arith.addf %39, %27 : vector<16x16xf32>
    %cst_31 = arith.constant dense<0xFF800000> : vector<16xf32>
    %41 = vector.multi_reduction <maximumf>, %40, %cst_31 [1] : vector<16x16xf32> to vector<16xf32>
    %42 = vector.shape_cast %41 : vector<16xf32> to vector<16x1xf32>
    %43 = vector.broadcast %42 : vector<16x1xf32> to vector<16x16xf32>
    %44 = arith.subf %40, %43 : vector<16x16xf32>
    %45 = math.exp %44 : vector<16x16xf32>
    %cst_32 = arith.constant dense<0.000000e+00> : vector<16xf32>
    %46 = vector.multi_reduction <add>, %45, %cst_32 [1] : vector<16x16xf32> to vector<16xf32>
    %47 = vector.shape_cast %46 : vector<16xf32> to vector<16x1xf32>
    %48 = tpu.reciprocal %47 {approx = true} : vector<16x1xf32> -> vector<16x1xf32>
    %49 = vector.broadcast %48 : vector<16x1xf32> to vector<16x16xf32>
    %50 = arith.mulf %45, %49 : vector<16x16xf32>
    %51 = arith.truncf %50 : vector<16x16xf32> to vector<16x16xbf16>
    %52 = arith.truncf %38 : vector<16x8xf32> to vector<16x8xbf16>
    %cst_33 = arith.constant dense<0.000000e+00> : vector<16x8xf32>
    %53 = tpu.matmul %51, %52, %cst_33 {dimension_numbers = #tpu.dot_dimension_numbers<[1], [0], [0], [1], [0, 0, 1, 1], [], []>} : vector<16x16xbf16>, vector<16x8xbf16>, vector<16x8xf32> -> vector<16x8xf32>
    %54 = arith.truncf %53 : vector<16x8xf32> to vector<16x8xbf16>
    %c0_34 = arith.constant 0 : index
    %c0_35 = arith.constant 0 : index
    %c0_36 = arith.constant 0 : index
    %55 = vector.load %arg15[%c0_34, %c0_35, %c0_36] : memref<8x8x32xbf16, #tpu.memory_space<vmem>>, vector<1x8x32xbf16>
    %56 = vector.shape_cast %55 : vector<1x8x32xbf16> to vector<8x32xbf16>
    %cst_37 = arith.constant dense<0.000000e+00> : vector<16x32xf32>
    %57 = tpu.matmul %54, %56, %cst_37 {dimension_numbers = #tpu.dot_dimension_numbers<[1], [0], [0], [1], [0, 0, 1, 1], [], []>} : vector<16x8xbf16>, vector<8x32xbf16>, vector<16x32xf32> -> vector<16x32xf32>
    %c1 = arith.constant 1 : index
    %c0_38 = arith.constant 0 : index
    %c0_39 = arith.constant 0 : index
    %58 = vector.load %arg12[%c1, %c0_38, %c0_39] : memref<8x32x8xbf16, #tpu.memory_space<vmem>>, vector<1x32x8xbf16>
    %59 = vector.shape_cast %58 : vector<1x32x8xbf16> to vector<32x8xbf16>
    %cst_40 = arith.constant dense<0.000000e+00> : vector<16x8xf32>
    %60 = tpu.matmul %29, %59, %cst_40 {dimension_numbers = #tpu.dot_dimension_numbers<[1], [0], [0], [1], [0, 0, 1, 1], [], []>} : vector<16x32xbf16>, vector<32x8xbf16>, vector<16x8xf32> -> vector<16x8xf32>
    %c1_41 = arith.constant 1 : index
    %c0_42 = arith.constant 0 : index
    %c0_43 = arith.constant 0 : index
    %61 = vector.load %arg13[%c1_41, %c0_42, %c0_43] : memref<8x32x8xbf16, #tpu.memory_space<vmem>>, vector<1x32x8xbf16>
    %62 = vector.shape_cast %61 : vector<1x32x8xbf16> to vector<32x8xbf16>
    %cst_44 = arith.constant dense<0.000000e+00> : vector<16x8xf32>
    %63 = tpu.matmul %28, %62, %cst_44 {dimension_numbers = #tpu.dot_dimension_numbers<[1], [0], [0], [1], [0, 0, 1, 1], [], []>} : vector<16x32xbf16>, vector<32x8xbf16>, vector<16x8xf32> -> vector<16x8xf32>
    %c1_45 = arith.constant 1 : index
    %c0_46 = arith.constant 0 : index
    %c0_47 = arith.constant 0 : index
    %64 = vector.load %arg14[%c1_45, %c0_46, %c0_47] : memref<8x32x8xbf16, #tpu.memory_space<vmem>>, vector<1x32x8xbf16>
    %65 = vector.shape_cast %64 : vector<1x32x8xbf16> to vector<32x8xbf16>
    %cst_48 = arith.constant dense<0.000000e+00> : vector<16x8xf32>
    %66 = tpu.matmul %28, %65, %cst_48 {dimension_numbers = #tpu.dot_dimension_numbers<[1], [0], [0], [1], [0, 0, 1, 1], [], []>} : vector<16x32xbf16>, vector<32x8xbf16>, vector<16x8xf32> -> vector<16x8xf32>
    %cst_49 = arith.constant dense<0.000000e+00> : vector<16x16xf32>
    %67 = tpu.matmul %60, %63, %cst_49 {dimension_numbers = #tpu.dot_dimension_numbers<[1], [1], [0], [0], [0, 0, 1, 0], [], []>} : vector<16x8xf32>, vector<16x8xf32>, vector<16x16xf32> -> vector<16x16xf32>
    %68 = arith.addf %67, %27 : vector<16x16xf32>
    %cst_50 = arith.constant dense<0xFF800000> : vector<16xf32>
    %69 = vector.multi_reduction <maximumf>, %68, %cst_50 [1] : vector<16x16xf32> to vector<16xf32>
    %70 = vector.shape_cast %69 : vector<16xf32> to vector<16x1xf32>
    %71 = vector.broadcast %70 : vector<16x1xf32> to vector<16x16xf32>
    %72 = arith.subf %68, %71 : vector<16x16xf32>
    %73 = math.exp %72 : vector<16x16xf32>
    %cst_51 = arith.constant dense<0.000000e+00> : vector<16xf32>
    %74 = vector.multi_reduction <add>, %73, %cst_51 [1] : vector<16x16xf32> to vector<16xf32>
    %75 = vector.shape_cast %74 : vector<16xf32> to vector<16x1xf32>
    %76 = tpu.reciprocal %75 {approx = true} : vector<16x1xf32> -> vector<16x1xf32>
    %77 = vector.broadcast %76 : vector<16x1xf32> to vector<16x16xf32>
    %78 = arith.mulf %73, %77 : vector<16x16xf32>
    %79 = arith.truncf %78 : vector<16x16xf32> to vector<16x16xbf16>
    %80 = arith.truncf %66 : vector<16x8xf32> to vector<16x8xbf16>
    %cst_52 = arith.constant dense<0.000000e+00> : vector<16x8xf32>
    %81 = tpu.matmul %79, %80, %cst_52 {dimension_numbers = #tpu.dot_dimension_numbers<[1], [0], [0], [1], [0, 0, 1, 1], [], []>} : vector<16x16xbf16>, vector<16x8xbf16>, vector<16x8xf32> -> vector<16x8xf32>
    %82 = arith.truncf %81 : vector<16x8xf32> to vector<16x8xbf16>
    %c1_53 = arith.constant 1 : index
    %c0_54 = arith.constant 0 : index
    %c0_55 = arith.constant 0 : index
    %83 = vector.load %arg15[%c1_53, %c0_54, %c0_55] : memref<8x8x32xbf16, #tpu.memory_space<vmem>>, vector<1x8x32xbf16>
    %84 = vector.shape_cast %83 : vector<1x8x32xbf16> to vector<8x32xbf16>
    %cst_56 = arith.constant dense<0.000000e+00> : vector<16x32xf32>
    %85 = tpu.matmul %82, %84, %cst_56 {dimension_numbers = #tpu.dot_dimension_numbers<[1], [0], [0], [1], [0, 0, 1, 1], [], []>} : vector<16x8xbf16>, vector<8x32xbf16>, vector<16x32xf32> -> vector<16x32xf32>
    %86 = arith.addf %57, %85 : vector<16x32xf32>
    %c2 = arith.constant 2 : index
    %c0_57 = arith.constant 0 : index
    %c0_58 = arith.constant 0 : index
    %87 = vector.load %arg12[%c2, %c0_57, %c0_58] : memref<8x32x8xbf16, #tpu.memory_space<vmem>>, vector<1x32x8xbf16>
    %88 = vector.shape_cast %87 : vector<1x32x8xbf16> to vector<32x8xbf16>
    %cst_59 = arith.constant dense<0.000000e+00> : vector<16x8xf32>
    %89 = tpu.matmul %29, %88, %cst_59 {dimension_numbers = #tpu.dot_dimension_numbers<[1], [0], [0], [1], [0, 0, 1, 1], [], []>} : vector<16x32xbf16>, vector<32x8xbf16>, vector<16x8xf32> -> vector<16x8xf32>
    %c2_60 = arith.constant 2 : index
    %c0_61 = arith.constant 0 : index
    %c0_62 = arith.constant 0 : index
    %90 = vector.load %arg13[%c2_60, %c0_61, %c0_62] : memref<8x32x8xbf16, #tpu.memory_space<vmem>>, vector<1x32x8xbf16>
    %91 = vector.shape_cast %90 : vector<1x32x8xbf16> to vector<32x8xbf16>
    %cst_63 = arith.constant dense<0.000000e+00> : vector<16x8xf32>
    %92 = tpu.matmul %28, %91, %cst_63 {dimension_numbers = #tpu.dot_dimension_numbers<[1], [0], [0], [1], [0, 0, 1, 1], [], []>} : vector<16x32xbf16>, vector<32x8xbf16>, vector<16x8xf32> -> vector<16x8xf32>
    %c2_64 = arith.constant 2 : index
    %c0_65 = arith.constant 0 : index
    %c0_66 = arith.constant 0 : index
    %93 = vector.load %arg14[%c2_64, %c0_65, %c0_66] : memref<8x32x8xbf16, #tpu.memory_space<vmem>>, vector<1x32x8xbf16>
    %94 = vector.shape_cast %93 : vector<1x32x8xbf16> to vector<32x8xbf16>
    %cst_67 = arith.constant dense<0.000000e+00> : vector<16x8xf32>
    %95 = tpu.matmul %28, %94, %cst_67 {dimension_numbers = #tpu.dot_dimension_numbers<[1], [0], [0], [1], [0, 0, 1, 1], [], []>} : vector<16x32xbf16>, vector<32x8xbf16>, vector<16x8xf32> -> vector<16x8xf32>
    %cst_68 = arith.constant dense<0.000000e+00> : vector<16x16xf32>
    %96 = tpu.matmul %89, %92, %cst_68 {dimension_numbers = #tpu.dot_dimension_numbers<[1], [1], [0], [0], [0, 0, 1, 0], [], []>} : vector<16x8xf32>, vector<16x8xf32>, vector<16x16xf32> -> vector<16x16xf32>
    %97 = arith.addf %96, %27 : vector<16x16xf32>
    %cst_69 = arith.constant dense<0xFF800000> : vector<16xf32>
    %98 = vector.multi_reduction <maximumf>, %97, %cst_69 [1] : vector<16x16xf32> to vector<16xf32>
    %99 = vector.shape_cast %98 : vector<16xf32> to vector<16x1xf32>
    %100 = vector.broadcast %99 : vector<16x1xf32> to vector<16x16xf32>
    %101 = arith.subf %97, %100 : vector<16x16xf32>
    %102 = math.exp %101 : vector<16x16xf32>
    %cst_70 = arith.constant dense<0.000000e+00> : vector<16xf32>
    %103 = vector.multi_reduction <add>, %102, %cst_70 [1] : vector<16x16xf32> to vector<16xf32>
    %104 = vector.shape_cast %103 : vector<16xf32> to vector<16x1xf32>
    %105 = tpu.reciprocal %104 {approx = true} : vector<16x1xf32> -> vector<16x1xf32>
    %106 = vector.broadcast %105 : vector<16x1xf32> to vector<16x16xf32>
    %107 = arith.mulf %102, %106 : vector<16x16xf32>
    %108 = arith.truncf %107 : vector<16x16xf32> to vector<16x16xbf16>
    %109 = arith.truncf %95 : vector<16x8xf32> to vector<16x8xbf16>
    %cst_71 = arith.constant dense<0.000000e+00> : vector<16x8xf32>
    %110 = tpu.matmul %108, %109, %cst_71 {dimension_numbers = #tpu.dot_dimension_numbers<[1], [0], [0], [1], [0, 0, 1, 1], [], []>} : vector<16x16xbf16>, vector<16x8xbf16>, vector<16x8xf32> -> vector<16x8xf32>
    %111 = arith.truncf %110 : vector<16x8xf32> to vector<16x8xbf16>
    %c2_72 = arith.constant 2 : index
    %c0_73 = arith.constant 0 : index
    %c0_74 = arith.constant 0 : index
    %112 = vector.load %arg15[%c2_72, %c0_73, %c0_74] : memref<8x8x32xbf16, #tpu.memory_space<vmem>>, vector<1x8x32xbf16>
    %113 = vector.shape_cast %112 : vector<1x8x32xbf16> to vector<8x32xbf16>
    %cst_75 = arith.constant dense<0.000000e+00> : vector<16x32xf32>
    %114 = tpu.matmul %111, %113, %cst_75 {dimension_numbers = #tpu.dot_dimension_numbers<[1], [0], [0], [1], [0, 0, 1, 1], [], []>} : vector<16x8xbf16>, vector<8x32xbf16>, vector<16x32xf32> -> vector<16x32xf32>
    %115 = arith.addf %86, %114 : vector<16x32xf32>
    %c3 = arith.constant 3 : index
    %c0_76 = arith.constant 0 : index
    %c0_77 = arith.constant 0 : index
    %116 = vector.load %arg12[%c3, %c0_76, %c0_77] : memref<8x32x8xbf16, #tpu.memory_space<vmem>>, vector<1x32x8xbf16>
    %117 = vector.shape_cast %116 : vector<1x32x8xbf16> to vector<32x8xbf16>
    %cst_78 = arith.constant dense<0.000000e+00> : vector<16x8xf32>
    %118 = tpu.matmul %29, %117, %cst_78 {dimension_numbers = #tpu.dot_dimension_numbers<[1], [0], [0], [1], [0, 0, 1, 1], [], []>} : vector<16x32xbf16>, vector<32x8xbf16>, vector<16x8xf32> -> vector<16x8xf32>
    %c3_79 = arith.constant 3 : index
    %c0_80 = arith.constant 0 : index
    %c0_81 = arith.constant 0 : index
    %119 = vector.load %arg13[%c3_79, %c0_80, %c0_81] : memref<8x32x8xbf16, #tpu.memory_space<vmem>>, vector<1x32x8xbf16>
    %120 = vector.shape_cast %119 : vector<1x32x8xbf16> to vector<32x8xbf16>
    %cst_82 = arith.constant dense<0.000000e+00> : vector<16x8xf32>
    %121 = tpu.matmul %28, %120, %cst_82 {dimension_numbers = #tpu.dot_dimension_numbers<[1], [0], [0], [1], [0, 0, 1, 1], [], []>} : vector<16x32xbf16>, vector<32x8xbf16>, vector<16x8xf32> -> vector<16x8xf32>
    %c3_83 = arith.constant 3 : index
    %c0_84 = arith.constant 0 : index
    %c0_85 = arith.constant 0 : index
    %122 = vector.load %arg14[%c3_83, %c0_84, %c0_85] : memref<8x32x8xbf16, #tpu.memory_space<vmem>>, vector<1x32x8xbf16>
    %123 = vector.shape_cast %122 : vector<1x32x8xbf16> to vector<32x8xbf16>
    %cst_86 = arith.constant dense<0.000000e+00> : vector<16x8xf32>
    %124 = tpu.matmul %28, %123, %cst_86 {dimension_numbers = #tpu.dot_dimension_numbers<[1], [0], [0], [1], [0, 0, 1, 1], [], []>} : vector<16x32xbf16>, vector<32x8xbf16>, vector<16x8xf32> -> vector<16x8xf32>
    %cst_87 = arith.constant dense<0.000000e+00> : vector<16x16xf32>
    %125 = tpu.matmul %118, %121, %cst_87 {dimension_numbers = #tpu.dot_dimension_numbers<[1], [1], [0], [0], [0, 0, 1, 0], [], []>} : vector<16x8xf32>, vector<16x8xf32>, vector<16x16xf32> -> vector<16x16xf32>
    %126 = arith.addf %125, %27 : vector<16x16xf32>
    %cst_88 = arith.constant dense<0xFF800000> : vector<16xf32>
    %127 = vector.multi_reduction <maximumf>, %126, %cst_88 [1] : vector<16x16xf32> to vector<16xf32>
    %128 = vector.shape_cast %127 : vector<16xf32> to vector<16x1xf32>
    %129 = vector.broadcast %128 : vector<16x1xf32> to vector<16x16xf32>
    %130 = arith.subf %126, %129 : vector<16x16xf32>
    %131 = math.exp %130 : vector<16x16xf32>
    %cst_89 = arith.constant dense<0.000000e+00> : vector<16xf32>
    %132 = vector.multi_reduction <add>, %131, %cst_89 [1] : vector<16x16xf32> to vector<16xf32>
    %133 = vector.shape_cast %132 : vector<16xf32> to vector<16x1xf32>
    %134 = tpu.reciprocal %133 {approx = true} : vector<16x1xf32> -> vector<16x1xf32>
    %135 = vector.broadcast %134 : vector<16x1xf32> to vector<16x16xf32>
    %136 = arith.mulf %131, %135 : vector<16x16xf32>
    %137 = arith.truncf %136 : vector<16x16xf32> to vector<16x16xbf16>
    %138 = arith.truncf %124 : vector<16x8xf32> to vector<16x8xbf16>
    %cst_90 = arith.constant dense<0.000000e+00> : vector<16x8xf32>
    %139 = tpu.matmul %137, %138, %cst_90 {dimension_numbers = #tpu.dot_dimension_numbers<[1], [0], [0], [1], [0, 0, 1, 1], [], []>} : vector<16x16xbf16>, vector<16x8xbf16>, vector<16x8xf32> -> vector<16x8xf32>
    %140 = arith.truncf %139 : vector<16x8xf32> to vector<16x8xbf16>
    %c3_91 = arith.constant 3 : index
    %c0_92 = arith.constant 0 : index
    %c0_93 = arith.constant 0 : index
    %141 = vector.load %arg15[%c3_91, %c0_92, %c0_93] : memref<8x8x32xbf16, #tpu.memory_space<vmem>>, vector<1x8x32xbf16>
    %142 = vector.shape_cast %141 : vector<1x8x32xbf16> to vector<8x32xbf16>
    %cst_94 = arith.constant dense<0.000000e+00> : vector<16x32xf32>
    %143 = tpu.matmul %140, %142, %cst_94 {dimension_numbers = #tpu.dot_dimension_numbers<[1], [0], [0], [1], [0, 0, 1, 1], [], []>} : vector<16x8xbf16>, vector<8x32xbf16>, vector<16x32xf32> -> vector<16x32xf32>
    %144 = arith.addf %115, %143 : vector<16x32xf32>
    %145 = arith.addf %15, %144 : vector<16x32xf32>
    %cst_95 = arith.constant dense<0.000000e+00> : vector<16xf32>
    %146 = vector.multi_reduction <add>, %145, %cst_95 [1] : vector<16x32xf32> to vector<16xf32>
    %147 = vector.shape_cast %146 : vector<16xf32> to vector<16x1xf32>
    %cst_96 = arith.constant 3.200000e+01 : f32
    %148 = vector.broadcast %cst_96 : f32 to vector<16x1xf32>
    %149 = arith.divf %147, %148 : vector<16x1xf32>
    %150 = vector.broadcast %149 : vector<16x1xf32> to vector<16x32xf32>
    %151 = arith.subf %145, %150 : vector<16x32xf32>
    %152 = arith.mulf %151, %151 : vector<16x32xf32>
    %cst_97 = arith.constant dense<0.000000e+00> : vector<16xf32>
    %153 = vector.multi_reduction <add>, %152, %cst_97 [1] : vector<16x32xf32> to vector<16xf32>
    %154 = vector.shape_cast %153 : vector<16xf32> to vector<16x1xf32>
    %cst_98 = arith.constant 3.200000e+01 : f32
    %155 = vector.broadcast %cst_98 : f32 to vector<16x1xf32>
    %156 = arith.divf %154, %155 : vector<16x1xf32>
    %157 = vector.broadcast %149 : vector<16x1xf32> to vector<16x32xf32>
    %158 = arith.subf %145, %157 : vector<16x32xf32>
    %cst_99 = arith.constant 9.99999974E-6 : f32
    %159 = vector.broadcast %cst_99 : f32 to vector<16x1xf32>
    %160 = arith.addf %156, %159 : vector<16x1xf32>
    %161 = math.rsqrt %160 : vector<16x1xf32>
    %162 = vector.broadcast %161 : vector<16x1xf32> to vector<16x32xf32>
    %163 = arith.mulf %158, %162 : vector<16x32xf32>
    %164 = arith.truncf %163 : vector<16x32xf32> to vector<16x32xbf16>
    %c0_100 = arith.constant 0 : index
    %c0_101 = arith.constant 0 : index
    %c0_102 = arith.constant 0 : index
    %165 = vector.load %arg16[%c0_100, %c0_101, %c0_102] : memref<2x32x64xbf16, #tpu.memory_space<vmem>>, vector<1x32x64xbf16>
    %166 = vector.shape_cast %165 : vector<1x32x64xbf16> to vector<32x64xbf16>
    %cst_103 = arith.constant dense<0.000000e+00> : vector<16x64xf32>
    %167 = tpu.matmul %164, %166, %cst_103 {dimension_numbers = #tpu.dot_dimension_numbers<[1], [0], [0], [1], [0, 0, 1, 1], [], []>} : vector<16x32xbf16>, vector<32x64xbf16>, vector<16x64xf32> -> vector<16x64xf32>
    %c0_104 = arith.constant 0 : index
    %c0_105 = arith.constant 0 : index
    %c0_106 = arith.constant 0 : index
    %168 = vector.load %arg17[%c0_104, %c0_105, %c0_106] : memref<2x1x64xf32, #tpu.memory_space<vmem>>, vector<1x1x64xf32>
    %169 = vector.shape_cast %168 : vector<1x1x64xf32> to vector<1x64xf32>
    %170 = vector.broadcast %169 : vector<1x64xf32> to vector<16x64xf32>
    %171 = arith.addf %167, %170 : vector<16x64xf32>
    %cst_107 = arith.constant 0.000000e+00 : f32
    %172 = vector.broadcast %cst_107 : f32 to vector<16x64xf32>
    %173 = arith.maximumf %171, %172 : vector<16x64xf32>
    %174 = arith.truncf %173 : vector<16x64xf32> to vector<16x64xbf16>
    %c0_108 = arith.constant 0 : index
    %c0_109 = arith.constant 0 : index
    %c0_110 = arith.constant 0 : index
    %175 = vector.load %arg18[%c0_108, %c0_109, %c0_110] : memref<2x64x32xbf16, #tpu.memory_space<vmem>>, vector<1x64x32xbf16>
    %176 = vector.shape_cast %175 : vector<1x64x32xbf16> to vector<64x32xbf16>
    %cst_111 = arith.constant dense<0.000000e+00> : vector<16x32xf32>
    %177 = tpu.matmul %174, %176, %cst_111 {dimension_numbers = #tpu.dot_dimension_numbers<[1], [0], [0], [1], [0, 0, 1, 1], [], []>} : vector<16x64xbf16>, vector<64x32xbf16>, vector<16x32xf32> -> vector<16x32xf32>
    %c0_112 = arith.constant 0 : index
    %c0_113 = arith.constant 0 : index
    %c0_114 = arith.constant 0 : index
    %178 = vector.load %arg19[%c0_112, %c0_113, %c0_114] : memref<2x1x32xf32, #tpu.memory_space<vmem>>, vector<1x1x32xf32>
    %179 = vector.shape_cast %178 : vector<1x1x32xf32> to vector<1x32xf32>
    %180 = vector.broadcast %179 : vector<1x32xf32> to vector<16x32xf32>
    %181 = arith.addf %177, %180 : vector<16x32xf32>
    %182 = arith.addf %163, %181 : vector<16x32xf32>
    %cst_115 = arith.constant dense<0.000000e+00> : vector<16xf32>
    %183 = vector.multi_reduction <add>, %182, %cst_115 [1] : vector<16x32xf32> to vector<16xf32>
    %184 = vector.shape_cast %183 : vector<16xf32> to vector<16x1xf32>
    %cst_116 = arith.constant 3.200000e+01 : f32
    %185 = vector.broadcast %cst_116 : f32 to vector<16x1xf32>
    %186 = arith.divf %184, %185 : vector<16x1xf32>
    %187 = vector.broadcast %186 : vector<16x1xf32> to vector<16x32xf32>
    %188 = arith.subf %182, %187 : vector<16x32xf32>
    %189 = arith.mulf %188, %188 : vector<16x32xf32>
    %cst_117 = arith.constant dense<0.000000e+00> : vector<16xf32>
    %190 = vector.multi_reduction <add>, %189, %cst_117 [1] : vector<16x32xf32> to vector<16xf32>
    %191 = vector.shape_cast %190 : vector<16xf32> to vector<16x1xf32>
    %cst_118 = arith.constant 3.200000e+01 : f32
    %192 = vector.broadcast %cst_118 : f32 to vector<16x1xf32>
    %193 = arith.divf %191, %192 : vector<16x1xf32>
    %194 = vector.broadcast %186 : vector<16x1xf32> to vector<16x32xf32>
    %195 = arith.subf %182, %194 : vector<16x32xf32>
    %cst_119 = arith.constant 9.99999974E-6 : f32
    %196 = vector.broadcast %cst_119 : f32 to vector<16x1xf32>
    %197 = arith.addf %193, %196 : vector<16x1xf32>
    %198 = math.rsqrt %197 : vector<16x1xf32>
    %199 = vector.broadcast %198 : vector<16x1xf32> to vector<16x32xf32>
    %200 = arith.mulf %195, %199 : vector<16x32xf32>
    %201 = arith.truncf %200 : vector<16x32xf32> to vector<16x32xbf16>
    %c4 = arith.constant 4 : index
    %c0_120 = arith.constant 0 : index
    %c0_121 = arith.constant 0 : index
    %202 = vector.load %arg12[%c4, %c0_120, %c0_121] : memref<8x32x8xbf16, #tpu.memory_space<vmem>>, vector<1x32x8xbf16>
    %203 = vector.shape_cast %202 : vector<1x32x8xbf16> to vector<32x8xbf16>
    %cst_122 = arith.constant dense<0.000000e+00> : vector<16x8xf32>
    %204 = tpu.matmul %201, %203, %cst_122 {dimension_numbers = #tpu.dot_dimension_numbers<[1], [0], [0], [1], [0, 0, 1, 1], [], []>} : vector<16x32xbf16>, vector<32x8xbf16>, vector<16x8xf32> -> vector<16x8xf32>
    %c4_123 = arith.constant 4 : index
    %c0_124 = arith.constant 0 : index
    %c0_125 = arith.constant 0 : index
    %205 = vector.load %arg13[%c4_123, %c0_124, %c0_125] : memref<8x32x8xbf16, #tpu.memory_space<vmem>>, vector<1x32x8xbf16>
    %206 = vector.shape_cast %205 : vector<1x32x8xbf16> to vector<32x8xbf16>
    %cst_126 = arith.constant dense<0.000000e+00> : vector<16x8xf32>
    %207 = tpu.matmul %28, %206, %cst_126 {dimension_numbers = #tpu.dot_dimension_numbers<[1], [0], [0], [1], [0, 0, 1, 1], [], []>} : vector<16x32xbf16>, vector<32x8xbf16>, vector<16x8xf32> -> vector<16x8xf32>
    %c4_127 = arith.constant 4 : index
    %c0_128 = arith.constant 0 : index
    %c0_129 = arith.constant 0 : index
    %208 = vector.load %arg14[%c4_127, %c0_128, %c0_129] : memref<8x32x8xbf16, #tpu.memory_space<vmem>>, vector<1x32x8xbf16>
    %209 = vector.shape_cast %208 : vector<1x32x8xbf16> to vector<32x8xbf16>
    %cst_130 = arith.constant dense<0.000000e+00> : vector<16x8xf32>
    %210 = tpu.matmul %28, %209, %cst_130 {dimension_numbers = #tpu.dot_dimension_numbers<[1], [0], [0], [1], [0, 0, 1, 1], [], []>} : vector<16x32xbf16>, vector<32x8xbf16>, vector<16x8xf32> -> vector<16x8xf32>
    %cst_131 = arith.constant dense<0.000000e+00> : vector<16x16xf32>
    %211 = tpu.matmul %204, %207, %cst_131 {dimension_numbers = #tpu.dot_dimension_numbers<[1], [1], [0], [0], [0, 0, 1, 0], [], []>} : vector<16x8xf32>, vector<16x8xf32>, vector<16x16xf32> -> vector<16x16xf32>
    %212 = arith.addf %211, %27 : vector<16x16xf32>
    %cst_132 = arith.constant dense<0xFF800000> : vector<16xf32>
    %213 = vector.multi_reduction <maximumf>, %212, %cst_132 [1] : vector<16x16xf32> to vector<16xf32>
    %214 = vector.shape_cast %213 : vector<16xf32> to vector<16x1xf32>
    %215 = vector.broadcast %214 : vector<16x1xf32> to vector<16x16xf32>
    %216 = arith.subf %212, %215 : vector<16x16xf32>
    %217 = math.exp %216 : vector<16x16xf32>
    %cst_133 = arith.constant dense<0.000000e+00> : vector<16xf32>
    %218 = vector.multi_reduction <add>, %217, %cst_133 [1] : vector<16x16xf32> to vector<16xf32>
    %219 = vector.shape_cast %218 : vector<16xf32> to vector<16x1xf32>
    %220 = tpu.reciprocal %219 {approx = true} : vector<16x1xf32> -> vector<16x1xf32>
    %221 = vector.broadcast %220 : vector<16x1xf32> to vector<16x16xf32>
    %222 = arith.mulf %217, %221 : vector<16x16xf32>
    %223 = arith.truncf %222 : vector<16x16xf32> to vector<16x16xbf16>
    %224 = arith.truncf %210 : vector<16x8xf32> to vector<16x8xbf16>
    %cst_134 = arith.constant dense<0.000000e+00> : vector<16x8xf32>
    %225 = tpu.matmul %223, %224, %cst_134 {dimension_numbers = #tpu.dot_dimension_numbers<[1], [0], [0], [1], [0, 0, 1, 1], [], []>} : vector<16x16xbf16>, vector<16x8xbf16>, vector<16x8xf32> -> vector<16x8xf32>
    %226 = arith.truncf %225 : vector<16x8xf32> to vector<16x8xbf16>
    %c4_135 = arith.constant 4 : index
    %c0_136 = arith.constant 0 : index
    %c0_137 = arith.constant 0 : index
    %227 = vector.load %arg15[%c4_135, %c0_136, %c0_137] : memref<8x8x32xbf16, #tpu.memory_space<vmem>>, vector<1x8x32xbf16>
    %228 = vector.shape_cast %227 : vector<1x8x32xbf16> to vector<8x32xbf16>
    %cst_138 = arith.constant dense<0.000000e+00> : vector<16x32xf32>
    %229 = tpu.matmul %226, %228, %cst_138 {dimension_numbers = #tpu.dot_dimension_numbers<[1], [0], [0], [1], [0, 0, 1, 1], [], []>} : vector<16x8xbf16>, vector<8x32xbf16>, vector<16x32xf32> -> vector<16x32xf32>
    %c5 = arith.constant 5 : index
    %c0_139 = arith.constant 0 : index
    %c0_140 = arith.constant 0 : index
    %230 = vector.load %arg12[%c5, %c0_139, %c0_140] : memref<8x32x8xbf16, #tpu.memory_space<vmem>>, vector<1x32x8xbf16>
    %231 = vector.shape_cast %230 : vector<1x32x8xbf16> to vector<32x8xbf16>
    %cst_141 = arith.constant dense<0.000000e+00> : vector<16x8xf32>
    %232 = tpu.matmul %201, %231, %cst_141 {dimension_numbers = #tpu.dot_dimension_numbers<[1], [0], [0], [1], [0, 0, 1, 1], [], []>} : vector<16x32xbf16>, vector<32x8xbf16>, vector<16x8xf32> -> vector<16x8xf32>
    %c5_142 = arith.constant 5 : index
    %c0_143 = arith.constant 0 : index
    %c0_144 = arith.constant 0 : index
    %233 = vector.load %arg13[%c5_142, %c0_143, %c0_144] : memref<8x32x8xbf16, #tpu.memory_space<vmem>>, vector<1x32x8xbf16>
    %234 = vector.shape_cast %233 : vector<1x32x8xbf16> to vector<32x8xbf16>
    %cst_145 = arith.constant dense<0.000000e+00> : vector<16x8xf32>
    %235 = tpu.matmul %28, %234, %cst_145 {dimension_numbers = #tpu.dot_dimension_numbers<[1], [0], [0], [1], [0, 0, 1, 1], [], []>} : vector<16x32xbf16>, vector<32x8xbf16>, vector<16x8xf32> -> vector<16x8xf32>
    %c5_146 = arith.constant 5 : index
    %c0_147 = arith.constant 0 : index
    %c0_148 = arith.constant 0 : index
    %236 = vector.load %arg14[%c5_146, %c0_147, %c0_148] : memref<8x32x8xbf16, #tpu.memory_space<vmem>>, vector<1x32x8xbf16>
    %237 = vector.shape_cast %236 : vector<1x32x8xbf16> to vector<32x8xbf16>
    %cst_149 = arith.constant dense<0.000000e+00> : vector<16x8xf32>
    %238 = tpu.matmul %28, %237, %cst_149 {dimension_numbers = #tpu.dot_dimension_numbers<[1], [0], [0], [1], [0, 0, 1, 1], [], []>} : vector<16x32xbf16>, vector<32x8xbf16>, vector<16x8xf32> -> vector<16x8xf32>
    %cst_150 = arith.constant dense<0.000000e+00> : vector<16x16xf32>
    %239 = tpu.matmul %232, %235, %cst_150 {dimension_numbers = #tpu.dot_dimension_numbers<[1], [1], [0], [0], [0, 0, 1, 0], [], []>} : vector<16x8xf32>, vector<16x8xf32>, vector<16x16xf32> -> vector<16x16xf32>
    %240 = arith.addf %239, %27 : vector<16x16xf32>
    %cst_151 = arith.constant dense<0xFF800000> : vector<16xf32>
    %241 = vector.multi_reduction <maximumf>, %240, %cst_151 [1] : vector<16x16xf32> to vector<16xf32>
    %242 = vector.shape_cast %241 : vector<16xf32> to vector<16x1xf32>
    %243 = vector.broadcast %242 : vector<16x1xf32> to vector<16x16xf32>
    %244 = arith.subf %240, %243 : vector<16x16xf32>
    %245 = math.exp %244 : vector<16x16xf32>
    %cst_152 = arith.constant dense<0.000000e+00> : vector<16xf32>
    %246 = vector.multi_reduction <add>, %245, %cst_152 [1] : vector<16x16xf32> to vector<16xf32>
    %247 = vector.shape_cast %246 : vector<16xf32> to vector<16x1xf32>
    %248 = tpu.reciprocal %247 {approx = true} : vector<16x1xf32> -> vector<16x1xf32>
    %249 = vector.broadcast %248 : vector<16x1xf32> to vector<16x16xf32>
    %250 = arith.mulf %245, %249 : vector<16x16xf32>
    %251 = arith.truncf %250 : vector<16x16xf32> to vector<16x16xbf16>
    %252 = arith.truncf %238 : vector<16x8xf32> to vector<16x8xbf16>
    %cst_153 = arith.constant dense<0.000000e+00> : vector<16x8xf32>
    %253 = tpu.matmul %251, %252, %cst_153 {dimension_numbers = #tpu.dot_dimension_numbers<[1], [0], [0], [1], [0, 0, 1, 1], [], []>} : vector<16x16xbf16>, vector<16x8xbf16>, vector<16x8xf32> -> vector<16x8xf32>
    %254 = arith.truncf %253 : vector<16x8xf32> to vector<16x8xbf16>
    %c5_154 = arith.constant 5 : index
    %c0_155 = arith.constant 0 : index
    %c0_156 = arith.constant 0 : index
    %255 = vector.load %arg15[%c5_154, %c0_155, %c0_156] : memref<8x8x32xbf16, #tpu.memory_space<vmem>>, vector<1x8x32xbf16>
    %256 = vector.shape_cast %255 : vector<1x8x32xbf16> to vector<8x32xbf16>
    %cst_157 = arith.constant dense<0.000000e+00> : vector<16x32xf32>
    %257 = tpu.matmul %254, %256, %cst_157 {dimension_numbers = #tpu.dot_dimension_numbers<[1], [0], [0], [1], [0, 0, 1, 1], [], []>} : vector<16x8xbf16>, vector<8x32xbf16>, vector<16x32xf32> -> vector<16x32xf32>
    %258 = arith.addf %229, %257 : vector<16x32xf32>
    %c6 = arith.constant 6 : index
    %c0_158 = arith.constant 0 : index
    %c0_159 = arith.constant 0 : index
    %259 = vector.load %arg12[%c6, %c0_158, %c0_159] : memref<8x32x8xbf16, #tpu.memory_space<vmem>>, vector<1x32x8xbf16>
    %260 = vector.shape_cast %259 : vector<1x32x8xbf16> to vector<32x8xbf16>
    %cst_160 = arith.constant dense<0.000000e+00> : vector<16x8xf32>
    %261 = tpu.matmul %201, %260, %cst_160 {dimension_numbers = #tpu.dot_dimension_numbers<[1], [0], [0], [1], [0, 0, 1, 1], [], []>} : vector<16x32xbf16>, vector<32x8xbf16>, vector<16x8xf32> -> vector<16x8xf32>
    %c6_161 = arith.constant 6 : index
    %c0_162 = arith.constant 0 : index
    %c0_163 = arith.constant 0 : index
    %262 = vector.load %arg13[%c6_161, %c0_162, %c0_163] : memref<8x32x8xbf16, #tpu.memory_space<vmem>>, vector<1x32x8xbf16>
    %263 = vector.shape_cast %262 : vector<1x32x8xbf16> to vector<32x8xbf16>
    %cst_164 = arith.constant dense<0.000000e+00> : vector<16x8xf32>
    %264 = tpu.matmul %28, %263, %cst_164 {dimension_numbers = #tpu.dot_dimension_numbers<[1], [0], [0], [1], [0, 0, 1, 1], [], []>} : vector<16x32xbf16>, vector<32x8xbf16>, vector<16x8xf32> -> vector<16x8xf32>
    %c6_165 = arith.constant 6 : index
    %c0_166 = arith.constant 0 : index
    %c0_167 = arith.constant 0 : index
    %265 = vector.load %arg14[%c6_165, %c0_166, %c0_167] : memref<8x32x8xbf16, #tpu.memory_space<vmem>>, vector<1x32x8xbf16>
    %266 = vector.shape_cast %265 : vector<1x32x8xbf16> to vector<32x8xbf16>
    %cst_168 = arith.constant dense<0.000000e+00> : vector<16x8xf32>
    %267 = tpu.matmul %28, %266, %cst_168 {dimension_numbers = #tpu.dot_dimension_numbers<[1], [0], [0], [1], [0, 0, 1, 1], [], []>} : vector<16x32xbf16>, vector<32x8xbf16>, vector<16x8xf32> -> vector<16x8xf32>
    %cst_169 = arith.constant dense<0.000000e+00> : vector<16x16xf32>
    %268 = tpu.matmul %261, %264, %cst_169 {dimension_numbers = #tpu.dot_dimension_numbers<[1], [1], [0], [0], [0, 0, 1, 0], [], []>} : vector<16x8xf32>, vector<16x8xf32>, vector<16x16xf32> -> vector<16x16xf32>
    %269 = arith.addf %268, %27 : vector<16x16xf32>
    %cst_170 = arith.constant dense<0xFF800000> : vector<16xf32>
    %270 = vector.multi_reduction <maximumf>, %269, %cst_170 [1] : vector<16x16xf32> to vector<16xf32>
    %271 = vector.shape_cast %270 : vector<16xf32> to vector<16x1xf32>
    %272 = vector.broadcast %271 : vector<16x1xf32> to vector<16x16xf32>
    %273 = arith.subf %269, %272 : vector<16x16xf32>
    %274 = math.exp %273 : vector<16x16xf32>
    %cst_171 = arith.constant dense<0.000000e+00> : vector<16xf32>
    %275 = vector.multi_reduction <add>, %274, %cst_171 [1] : vector<16x16xf32> to vector<16xf32>
    %276 = vector.shape_cast %275 : vector<16xf32> to vector<16x1xf32>
    %277 = tpu.reciprocal %276 {approx = true} : vector<16x1xf32> -> vector<16x1xf32>
    %278 = vector.broadcast %277 : vector<16x1xf32> to vector<16x16xf32>
    %279 = arith.mulf %274, %278 : vector<16x16xf32>
    %280 = arith.truncf %279 : vector<16x16xf32> to vector<16x16xbf16>
    %281 = arith.truncf %267 : vector<16x8xf32> to vector<16x8xbf16>
    %cst_172 = arith.constant dense<0.000000e+00> : vector<16x8xf32>
    %282 = tpu.matmul %280, %281, %cst_172 {dimension_numbers = #tpu.dot_dimension_numbers<[1], [0], [0], [1], [0, 0, 1, 1], [], []>} : vector<16x16xbf16>, vector<16x8xbf16>, vector<16x8xf32> -> vector<16x8xf32>
    %283 = arith.truncf %282 : vector<16x8xf32> to vector<16x8xbf16>
    %c6_173 = arith.constant 6 : index
    %c0_174 = arith.constant 0 : index
    %c0_175 = arith.constant 0 : index
    %284 = vector.load %arg15[%c6_173, %c0_174, %c0_175] : memref<8x8x32xbf16, #tpu.memory_space<vmem>>, vector<1x8x32xbf16>
    %285 = vector.shape_cast %284 : vector<1x8x32xbf16> to vector<8x32xbf16>
    %cst_176 = arith.constant dense<0.000000e+00> : vector<16x32xf32>
    %286 = tpu.matmul %283, %285, %cst_176 {dimension_numbers = #tpu.dot_dimension_numbers<[1], [0], [0], [1], [0, 0, 1, 1], [], []>} : vector<16x8xbf16>, vector<8x32xbf16>, vector<16x32xf32> -> vector<16x32xf32>
    %287 = arith.addf %258, %286 : vector<16x32xf32>
    %c7 = arith.constant 7 : index
    %c0_177 = arith.constant 0 : index
    %c0_178 = arith.constant 0 : index
    %288 = vector.load %arg12[%c7, %c0_177, %c0_178] : memref<8x32x8xbf16, #tpu.memory_space<vmem>>, vector<1x32x8xbf16>
    %289 = vector.shape_cast %288 : vector<1x32x8xbf16> to vector<32x8xbf16>
    %cst_179 = arith.constant dense<0.000000e+00> : vector<16x8xf32>
    %290 = tpu.matmul %201, %289, %cst_179 {dimension_numbers = #tpu.dot_dimension_numbers<[1], [0], [0], [1], [0, 0, 1, 1], [], []>} : vector<16x32xbf16>, vector<32x8xbf16>, vector<16x8xf32> -> vector<16x8xf32>
    %c7_180 = arith.constant 7 : index
    %c0_181 = arith.constant 0 : index
    %c0_182 = arith.constant 0 : index
    %291 = vector.load %arg13[%c7_180, %c0_181, %c0_182] : memref<8x32x8xbf16, #tpu.memory_space<vmem>>, vector<1x32x8xbf16>
    %292 = vector.shape_cast %291 : vector<1x32x8xbf16> to vector<32x8xbf16>
    %cst_183 = arith.constant dense<0.000000e+00> : vector<16x8xf32>
    %293 = tpu.matmul %28, %292, %cst_183 {dimension_numbers = #tpu.dot_dimension_numbers<[1], [0], [0], [1], [0, 0, 1, 1], [], []>} : vector<16x32xbf16>, vector<32x8xbf16>, vector<16x8xf32> -> vector<16x8xf32>
    %c7_184 = arith.constant 7 : index
    %c0_185 = arith.constant 0 : index
    %c0_186 = arith.constant 0 : index
    %294 = vector.load %arg14[%c7_184, %c0_185, %c0_186] : memref<8x32x8xbf16, #tpu.memory_space<vmem>>, vector<1x32x8xbf16>
    %295 = vector.shape_cast %294 : vector<1x32x8xbf16> to vector<32x8xbf16>
    %cst_187 = arith.constant dense<0.000000e+00> : vector<16x8xf32>
    %296 = tpu.matmul %28, %295, %cst_187 {dimension_numbers = #tpu.dot_dimension_numbers<[1], [0], [0], [1], [0, 0, 1, 1], [], []>} : vector<16x32xbf16>, vector<32x8xbf16>, vector<16x8xf32> -> vector<16x8xf32>
    %cst_188 = arith.constant dense<0.000000e+00> : vector<16x16xf32>
    %297 = tpu.matmul %290, %293, %cst_188 {dimension_numbers = #tpu.dot_dimension_numbers<[1], [1], [0], [0], [0, 0, 1, 0], [], []>} : vector<16x8xf32>, vector<16x8xf32>, vector<16x16xf32> -> vector<16x16xf32>
    %298 = arith.addf %297, %27 : vector<16x16xf32>
    %cst_189 = arith.constant dense<0xFF800000> : vector<16xf32>
    %299 = vector.multi_reduction <maximumf>, %298, %cst_189 [1] : vector<16x16xf32> to vector<16xf32>
    %300 = vector.shape_cast %299 : vector<16xf32> to vector<16x1xf32>
    %301 = vector.broadcast %300 : vector<16x1xf32> to vector<16x16xf32>
    %302 = arith.subf %298, %301 : vector<16x16xf32>
    %303 = math.exp %302 : vector<16x16xf32>
    %cst_190 = arith.constant dense<0.000000e+00> : vector<16xf32>
    %304 = vector.multi_reduction <add>, %303, %cst_190 [1] : vector<16x16xf32> to vector<16xf32>
    %305 = vector.shape_cast %304 : vector<16xf32> to vector<16x1xf32>
    %306 = tpu.reciprocal %305 {approx = true} : vector<16x1xf32> -> vector<16x1xf32>
    %307 = vector.broadcast %306 : vector<16x1xf32> to vector<16x16xf32>
    %308 = arith.mulf %303, %307 : vector<16x16xf32>
    %309 = arith.truncf %308 : vector<16x16xf32> to vector<16x16xbf16>
    %310 = arith.truncf %296 : vector<16x8xf32> to vector<16x8xbf16>
    %cst_191 = arith.constant dense<0.000000e+00> : vector<16x8xf32>
    %311 = tpu.matmul %309, %310, %cst_191 {dimension_numbers = #tpu.dot_dimension_numbers<[1], [0], [0], [1], [0, 0, 1, 1], [], []>} : vector<16x16xbf16>, vector<16x8xbf16>, vector<16x8xf32> -> vector<16x8xf32>
    %312 = arith.truncf %311 : vector<16x8xf32> to vector<16x8xbf16>
    %c7_192 = arith.constant 7 : index
    %c0_193 = arith.constant 0 : index
    %c0_194 = arith.constant 0 : index
    %313 = vector.load %arg15[%c7_192, %c0_193, %c0_194] : memref<8x8x32xbf16, #tpu.memory_space<vmem>>, vector<1x8x32xbf16>
    %314 = vector.shape_cast %313 : vector<1x8x32xbf16> to vector<8x32xbf16>
    %cst_195 = arith.constant dense<0.000000e+00> : vector<16x32xf32>
    %315 = tpu.matmul %312, %314, %cst_195 {dimension_numbers = #tpu.dot_dimension_numbers<[1], [0], [0], [1], [0, 0, 1, 1], [], []>} : vector<16x8xbf16>, vector<8x32xbf16>, vector<16x32xf32> -> vector<16x32xf32>
    %316 = arith.addf %287, %315 : vector<16x32xf32>
    %317 = arith.addf %200, %316 : vector<16x32xf32>
    %cst_196 = arith.constant dense<0.000000e+00> : vector<16xf32>
    %318 = vector.multi_reduction <add>, %317, %cst_196 [1] : vector<16x32xf32> to vector<16xf32>
    %319 = vector.shape_cast %318 : vector<16xf32> to vector<16x1xf32>
    %cst_197 = arith.constant 3.200000e+01 : f32
    %320 = vector.broadcast %cst_197 : f32 to vector<16x1xf32>
    %321 = arith.divf %319, %320 : vector<16x1xf32>
    %322 = vector.broadcast %321 : vector<16x1xf32> to vector<16x32xf32>
    %323 = arith.subf %317, %322 : vector<16x32xf32>
    %324 = arith.mulf %323, %323 : vector<16x32xf32>
    %cst_198 = arith.constant dense<0.000000e+00> : vector<16xf32>
    %325 = vector.multi_reduction <add>, %324, %cst_198 [1] : vector<16x32xf32> to vector<16xf32>
    %326 = vector.shape_cast %325 : vector<16xf32> to vector<16x1xf32>
    %cst_199 = arith.constant 3.200000e+01 : f32
    %327 = vector.broadcast %cst_199 : f32 to vector<16x1xf32>
    %328 = arith.divf %326, %327 : vector<16x1xf32>
    %329 = vector.broadcast %321 : vector<16x1xf32> to vector<16x32xf32>
    %330 = arith.subf %317, %329 : vector<16x32xf32>
    %cst_200 = arith.constant 9.99999974E-6 : f32
    %331 = vector.broadcast %cst_200 : f32 to vector<16x1xf32>
    %332 = arith.addf %328, %331 : vector<16x1xf32>
    %333 = math.rsqrt %332 : vector<16x1xf32>
    %334 = vector.broadcast %333 : vector<16x1xf32> to vector<16x32xf32>
    %335 = arith.mulf %330, %334 : vector<16x32xf32>
    %336 = arith.truncf %335 : vector<16x32xf32> to vector<16x32xbf16>
    %c1_201 = arith.constant 1 : index
    %c0_202 = arith.constant 0 : index
    %c0_203 = arith.constant 0 : index
    %337 = vector.load %arg16[%c1_201, %c0_202, %c0_203] : memref<2x32x64xbf16, #tpu.memory_space<vmem>>, vector<1x32x64xbf16>
    %338 = vector.shape_cast %337 : vector<1x32x64xbf16> to vector<32x64xbf16>
    %cst_204 = arith.constant dense<0.000000e+00> : vector<16x64xf32>
    %339 = tpu.matmul %336, %338, %cst_204 {dimension_numbers = #tpu.dot_dimension_numbers<[1], [0], [0], [1], [0, 0, 1, 1], [], []>} : vector<16x32xbf16>, vector<32x64xbf16>, vector<16x64xf32> -> vector<16x64xf32>
    %c1_205 = arith.constant 1 : index
    %c0_206 = arith.constant 0 : index
    %c0_207 = arith.constant 0 : index
    %340 = vector.load %arg17[%c1_205, %c0_206, %c0_207] : memref<2x1x64xf32, #tpu.memory_space<vmem>>, vector<1x1x64xf32>
    %341 = vector.shape_cast %340 : vector<1x1x64xf32> to vector<1x64xf32>
    %342 = vector.broadcast %341 : vector<1x64xf32> to vector<16x64xf32>
    %343 = arith.addf %339, %342 : vector<16x64xf32>
    %cst_208 = arith.constant 0.000000e+00 : f32
    %344 = vector.broadcast %cst_208 : f32 to vector<16x64xf32>
    %345 = arith.maximumf %343, %344 : vector<16x64xf32>
    %346 = arith.truncf %345 : vector<16x64xf32> to vector<16x64xbf16>
    %c1_209 = arith.constant 1 : index
    %c0_210 = arith.constant 0 : index
    %c0_211 = arith.constant 0 : index
    %347 = vector.load %arg18[%c1_209, %c0_210, %c0_211] : memref<2x64x32xbf16, #tpu.memory_space<vmem>>, vector<1x64x32xbf16>
    %348 = vector.shape_cast %347 : vector<1x64x32xbf16> to vector<64x32xbf16>
    %cst_212 = arith.constant dense<0.000000e+00> : vector<16x32xf32>
    %349 = tpu.matmul %346, %348, %cst_212 {dimension_numbers = #tpu.dot_dimension_numbers<[1], [0], [0], [1], [0, 0, 1, 1], [], []>} : vector<16x64xbf16>, vector<64x32xbf16>, vector<16x32xf32> -> vector<16x32xf32>
    %c1_213 = arith.constant 1 : index
    %c0_214 = arith.constant 0 : index
    %c0_215 = arith.constant 0 : index
    %350 = vector.load %arg19[%c1_213, %c0_214, %c0_215] : memref<2x1x32xf32, #tpu.memory_space<vmem>>, vector<1x1x32xf32>
    %351 = vector.shape_cast %350 : vector<1x1x32xf32> to vector<1x32xf32>
    %352 = vector.broadcast %351 : vector<1x32xf32> to vector<16x32xf32>
    %353 = arith.addf %349, %352 : vector<16x32xf32>
    %354 = arith.addf %335, %353 : vector<16x32xf32>
    %cst_216 = arith.constant dense<0.000000e+00> : vector<16xf32>
    %355 = vector.multi_reduction <add>, %354, %cst_216 [1] : vector<16x32xf32> to vector<16xf32>
    %356 = vector.shape_cast %355 : vector<16xf32> to vector<16x1xf32>
    %cst_217 = arith.constant 3.200000e+01 : f32
    %357 = vector.broadcast %cst_217 : f32 to vector<16x1xf32>
    %358 = arith.divf %356, %357 : vector<16x1xf32>
    %359 = vector.broadcast %358 : vector<16x1xf32> to vector<16x32xf32>
    %360 = arith.subf %354, %359 : vector<16x32xf32>
    %361 = arith.mulf %360, %360 : vector<16x32xf32>
    %cst_218 = arith.constant dense<0.000000e+00> : vector<16xf32>
    %362 = vector.multi_reduction <add>, %361, %cst_218 [1] : vector<16x32xf32> to vector<16xf32>
    %363 = vector.shape_cast %362 : vector<16xf32> to vector<16x1xf32>
    %cst_219 = arith.constant 3.200000e+01 : f32
    %364 = vector.broadcast %cst_219 : f32 to vector<16x1xf32>
    %365 = arith.divf %363, %364 : vector<16x1xf32>
    %366 = vector.broadcast %358 : vector<16x1xf32> to vector<16x32xf32>
    %367 = arith.subf %354, %366 : vector<16x32xf32>
    %cst_220 = arith.constant 9.99999974E-6 : f32
    %368 = vector.broadcast %cst_220 : f32 to vector<16x1xf32>
    %369 = arith.addf %365, %368 : vector<16x1xf32>
    %370 = math.rsqrt %369 : vector<16x1xf32>
    %371 = vector.broadcast %370 : vector<16x1xf32> to vector<16x32xf32>
    %372 = arith.mulf %367, %371 : vector<16x32xf32>
    %373 = arith.truncf %372 : vector<16x32xf32> to vector<16x32xbf16>
    %c0_221 = arith.constant 0 : index
    %c0_222 = arith.constant 0 : index
    %374 = vector.load %arg20[%c0_221, %c0_222] : memref<32x128xbf16, #tpu.memory_space<vmem>>, vector<32x128xbf16>
    %cst_223 = arith.constant dense<0.000000e+00> : vector<16x128xf32>
    %375 = tpu.matmul %373, %374, %cst_223 {dimension_numbers = #tpu.dot_dimension_numbers<[1], [0], [0], [1], [0, 0, 1, 1], [], []>} : vector<16x32xbf16>, vector<32x128xbf16>, vector<16x128xf32> -> vector<16x128xf32>
    %c0_224 = arith.constant 0 : index
    %c0_225 = arith.constant 0 : index
    %376 = vector.load %arg21[%c0_224, %c0_225] : memref<1x128xf32, #tpu.memory_space<vmem>>, vector<1x128xf32>
    %377 = vector.broadcast %376 : vector<1x128xf32> to vector<16x128xf32>
    %378 = arith.addf %375, %377 : vector<16x128xf32>
    %cst_226 = arith.constant 5.000000e-01 : f32
    %379 = vector.broadcast %cst_226 : f32 to vector<16x1xf32>
    %380 = arith.cmpf ogt, %9, %379 : vector<16x1xf32>
    %c0_227 = arith.constant 0 : index
    %c0_228 = arith.constant 0 : index
    %381 = vector.load %arg25[%c0_227, %c0_228] : memref<16x128xf32, #tpu.memory_space<vmem>>, vector<16x128xf32>
    %382 = vector.shape_cast %380 : vector<16x1xi1> to vector<16x1xi1>
    %383 = vector.broadcast %382 : vector<16x1xi1> to vector<16x128xi1>
    %384 = arith.select %383, %378, %381 : vector<16x128xi1>, vector<16x128xf32>
    %c0_229 = arith.constant 0 : index
    %c0_230 = arith.constant 0 : index
    %385 = vector.load %arg25[%c0_229, %c0_230] : memref<16x128xf32, #tpu.memory_space<vmem>>, vector<16x128xf32>
    tpu.vector_store %arg25[%c0_229, %c0_230], %384 {strides = array<i32>} : memref<16x128xf32, #tpu.memory_space<vmem>>, vector<16x128xf32>,
    %c0_231 = arith.constant 0 : index
    %c0_232 = arith.constant 0 : index
    %386 = vector.load %arg7[%c0_231, %c0_232] : memref<16x128xf32, #tpu.memory_space<vmem>>, vector<16x128xf32>
    %387 = arith.subf %378, %386 : vector<16x128xf32>
    %388 = vector.broadcast %9 : vector<16x1xf32> to vector<16x128xf32>
    %389 = arith.mulf %387, %388 : vector<16x128xf32>
    %390 = math.absf %389 : vector<16x128xf32>
    %391 = vector.shape_cast %390 : vector<16x128xf32> to vector<1x16x128xf32>
    %cst_233 = arith.constant dense<0.000000e+00> : vector<1xf32>
    %392 = vector.multi_reduction <add>, %391, %cst_233 [1, 2] : vector<1x16x128xf32> to vector<1xf32>
    %393 = vector.shape_cast %392 : vector<1xf32> to vector<1x1x1xf32>
    %394 = vector.extract %393[0, 0, 0] : f32 from vector<1x1x1xf32>
    %395 = vector.shape_cast %9 : vector<16x1xf32> to vector<1x16x1xf32>
    %cst_234 = arith.constant dense<0.000000e+00> : vector<1xf32>
    %396 = vector.multi_reduction <add>, %395, %cst_234 [1, 2] : vector<1x16x1xf32> to vector<1xf32>
    %397 = vector.shape_cast %396 : vector<1xf32> to vector<1x1x1xf32>
    %398 = vector.extract %397[0, 0, 0] : f32 from vector<1x1x1xf32>
    %cst_235 = arith.constant 1.200000e+01 : f32
    %399 = arith.mulf %398, %cst_235 : f32
    %400 = arith.divf %394, %399 : f32
    %401 = arith.mulf %389, %389 : vector<16x128xf32>
    %c0_236 = arith.constant 0 : index
    %c0_237 = arith.constant 0 : index
    %402 = vector.load %arg9[%c0_236, %c0_237] : memref<128x128xf32, #tpu.memory_space<vmem>>, vector<128x128xf32>
    %cst_238 = arith.constant dense<0.000000e+00> : vector<16x128xf32>
    %403 = tpu.matmul %401, %402, %cst_238 {dimension_numbers = #tpu.dot_dimension_numbers<[1], [0], [0], [1], [0, 0, 1, 1], [], []>} : vector<16x128xf32>, vector<128x128xf32>, vector<16x128xf32> -> vector<16x128xf32>
    %404 = math.sqrt %403 : vector<16x128xf32>
    %405 = vector.shape_cast %404 : vector<16x128xf32> to vector<1x16x128xf32>
    %cst_239 = arith.constant dense<0.000000e+00> : vector<1xf32>
    %406 = vector.multi_reduction <add>, %405, %cst_239 [1, 2] : vector<1x16x128xf32> to vector<1xf32>
    %407 = vector.shape_cast %406 : vector<1xf32> to vector<1x1x1xf32>
    %408 = vector.extract %407[0, 0, 0] : f32 from vector<1x1x1xf32>
    %c0_240 = arith.constant 0 : index
    %c0_241 = arith.constant 0 : index
    %409 = vector.load %arg8[%c0_240, %c0_241] : memref<16x128xf32, #tpu.memory_space<vmem>>, vector<16x128xf32>
    %cst_242 = arith.constant 1.000000e+00 : f32
    %410 = vector.broadcast %cst_242 : f32 to vector<16x128xf32>
    %411 = arith.subf %410, %409 : vector<16x128xf32>
    %412 = vector.broadcast %9 : vector<16x1xf32> to vector<16x128xf32>
    %413 = arith.mulf %411, %412 : vector<16x128xf32>
    %414 = vector.shape_cast %413 : vector<16x128xf32> to vector<1x16x128xf32>
    %cst_243 = arith.constant dense<0.000000e+00> : vector<1xf32>
    %415 = vector.multi_reduction <add>, %414, %cst_243 [1, 2] : vector<1x16x128xf32> to vector<1xf32>
    %416 = vector.shape_cast %415 : vector<1xf32> to vector<1x1x1xf32>
    %417 = vector.extract %416[0, 0, 0] : f32 from vector<1x1x1xf32>
    %cst_244 = arith.constant 5.000000e-01 : f32
    %418 = arith.mulf %417, %cst_244 : f32
    %c0_245 = arith.constant 0 : index
    %419 = memref.load %arg22[%c0_245] : memref<1xf32, #tpu.memory_space<smem>>
    %420 = arith.addf %419, %400 : f32
    %c0_246 = arith.constant 0 : index
    %421 = memref.load %arg22[%c0_246] : memref<1xf32, #tpu.memory_space<smem>>
    memref.store %420, %arg22[%c0_246] : memref<1xf32, #tpu.memory_space<smem>>
    %c0_247 = arith.constant 0 : index
    %422 = memref.load %arg23[%c0_247] : memref<1xf32, #tpu.memory_space<smem>>
    %423 = arith.addf %422, %408 : f32
    %c0_248 = arith.constant 0 : index
    %424 = memref.load %arg23[%c0_248] : memref<1xf32, #tpu.memory_space<smem>>
    memref.store %423, %arg23[%c0_248] : memref<1xf32, #tpu.memory_space<smem>>
    %c0_249 = arith.constant 0 : index
    %425 = memref.load %arg24[%c0_249] : memref<1xf32, #tpu.memory_space<smem>>
    %426 = arith.addf %425, %418 : f32
    %c0_250 = arith.constant 0 : index
    %427 = memref.load %arg24[%c0_250] : memref<1xf32, #tpu.memory_space<smem>>
    memref.store %426, %arg24[%c0_250] : memref<1xf32, #tpu.memory_space<smem>>
    return
  }
  func.func @transform_0(%arg0: i32, %arg1: memref<2xi32, #tpu.memory_space<smem>>) -> (i32, i32, i32) {
    %c0_i32 = arith.constant 0 : i32
    %c0_i32_0 = arith.constant 0 : i32
    %c0_i32_1 = arith.constant 0 : i32
    return %arg0, %c0_i32, %c0_i32_0 : i32, i32, i32
  }
  func.func @transform_1(%arg0: i32, %arg1: memref<2xi32, #tpu.memory_space<smem>>) -> (i32, i32, i32) {
    %c0_i32 = arith.constant 0 : i32
    %c0_i32_0 = arith.constant 0 : i32
    %c0_i32_1 = arith.constant 0 : i32
    return %arg0, %c0_i32, %c0_i32_0 : i32, i32, i32
  }
  func.func @transform_2(%arg0: i32, %arg1: memref<2xi32, #tpu.memory_space<smem>>) -> (i32, i32) {
    %c0_i32 = arith.constant 0 : i32
    %c0_i32_0 = arith.constant 0 : i32
    %c0_i32_1 = arith.constant 0 : i32
    return %c0_i32, %c0_i32_0 : i32, i32
  }
  func.func @transform_3(%arg0: i32, %arg1: memref<2xi32, #tpu.memory_space<smem>>) -> (i32, i32) {
    %c0_i32 = arith.constant 0 : i32
    %c0_i32_0 = arith.constant 0 : i32
    %c0_i32_1 = arith.constant 0 : i32
    return %c0_i32, %c0_i32_0 : i32, i32
  }
  func.func @transform_4(%arg0: i32, %arg1: memref<2xi32, #tpu.memory_space<smem>>) -> (i32, i32) {
    %c0_i32 = arith.constant 0 : i32
    %c0_i32_0 = arith.constant 0 : i32
    %c0_i32_1 = arith.constant 0 : i32
    return %c0_i32, %c0_i32_0 : i32, i32
  }
  func.func @transform_5(%arg0: i32, %arg1: memref<2xi32, #tpu.memory_space<smem>>) -> (i32, i32) {
    %c0_i32 = arith.constant 0 : i32
    %c0_i32_0 = arith.constant 0 : i32
    %c0_i32_1 = arith.constant 0 : i32
    return %c0_i32, %c0_i32_0 : i32, i32
  }
  func.func @transform_6(%arg0: i32, %arg1: memref<2xi32, #tpu.memory_space<smem>>) -> (i32, i32) {
    %c0_i32 = arith.constant 0 : i32
    %c0_i32_0 = arith.constant 0 : i32
    %c0_i32_1 = arith.constant 0 : i32
    return %c0_i32, %c0_i32_0 : i32, i32
  }
  func.func @transform_7(%arg0: i32, %arg1: memref<2xi32, #tpu.memory_space<smem>>) -> (i32, i32) {
    %c0_i32 = arith.constant 0 : i32
    %c0_i32_0 = arith.constant 0 : i32
    %c0_i32_1 = arith.constant 0 : i32
    return %c0_i32, %c0_i32_0 : i32, i32
  }
  func.func @transform_8(%arg0: i32, %arg1: memref<2xi32, #tpu.memory_space<smem>>) -> (i32, i32) {
    %c0_i32 = arith.constant 0 : i32
    %c0_i32_0 = arith.constant 0 : i32
    %c0_i32_1 = arith.constant 0 : i32
    return %c0_i32, %c0_i32_0 : i32, i32
  }
  func.func @transform_9(%arg0: i32, %arg1: memref<2xi32, #tpu.memory_space<smem>>) -> (i32, i32) {
    %c0_i32 = arith.constant 0 : i32
    %c0_i32_0 = arith.constant 0 : i32
    %c0_i32_1 = arith.constant 0 : i32
    return %c0_i32, %c0_i32_0 : i32, i32
  }
  func.func @transform_10(%arg0: i32, %arg1: memref<2xi32, #tpu.memory_space<smem>>) -> (i32, i32, i32) {
    %c0_i32 = arith.constant 0 : i32
    %c0_i32_0 = arith.constant 0 : i32
    %c0_i32_1 = arith.constant 0 : i32
    %c0_i32_2 = arith.constant 0 : i32
    return %c0_i32, %c0_i32_0, %c0_i32_1 : i32, i32, i32
  }
  func.func @transform_11(%arg0: i32, %arg1: memref<2xi32, #tpu.memory_space<smem>>) -> (i32, i32, i32) {
    %c0_i32 = arith.constant 0 : i32
    %c0_i32_0 = arith.constant 0 : i32
    %c0_i32_1 = arith.constant 0 : i32
    %c0_i32_2 = arith.constant 0 : i32
    return %c0_i32, %c0_i32_0, %c0_i32_1 : i32, i32, i32
  }
  func.func @transform_12(%arg0: i32, %arg1: memref<2xi32, #tpu.memory_space<smem>>) -> (i32, i32, i32) {
    %c0_i32 = arith.constant 0 : i32
    %c0_i32_0 = arith.constant 0 : i32
    %c0_i32_1 = arith.constant 0 : i32
    %c0_i32_2 = arith.constant 0 : i32
    return %c0_i32, %c0_i32_0, %c0_i32_1 : i32, i32, i32
  }
  func.func @transform_13(%arg0: i32, %arg1: memref<2xi32, #tpu.memory_space<smem>>) -> (i32, i32, i32) {
    %c0_i32 = arith.constant 0 : i32
    %c0_i32_0 = arith.constant 0 : i32
    %c0_i32_1 = arith.constant 0 : i32
    %c0_i32_2 = arith.constant 0 : i32
    return %c0_i32, %c0_i32_0, %c0_i32_1 : i32, i32, i32
  }
  func.func @transform_14(%arg0: i32, %arg1: memref<2xi32, #tpu.memory_space<smem>>) -> (i32, i32, i32) {
    %c0_i32 = arith.constant 0 : i32
    %c0_i32_0 = arith.constant 0 : i32
    %c0_i32_1 = arith.constant 0 : i32
    %c0_i32_2 = arith.constant 0 : i32
    return %c0_i32, %c0_i32_0, %c0_i32_1 : i32, i32, i32
  }
  func.func @transform_15(%arg0: i32, %arg1: memref<2xi32, #tpu.memory_space<smem>>) -> (i32, i32, i32) {
    %c0_i32 = arith.constant 0 : i32
    %c0_i32_0 = arith.constant 0 : i32
    %c0_i32_1 = arith.constant 0 : i32
    %c0_i32_2 = arith.constant 0 : i32
    return %c0_i32, %c0_i32_0, %c0_i32_1 : i32, i32, i32
  }
  func.func @transform_16(%arg0: i32, %arg1: memref<2xi32, #tpu.memory_space<smem>>) -> (i32, i32, i32) {
    %c0_i32 = arith.constant 0 : i32
    %c0_i32_0 = arith.constant 0 : i32
    %c0_i32_1 = arith.constant 0 : i32
    %c0_i32_2 = arith.constant 0 : i32
    return %c0_i32, %c0_i32_0, %c0_i32_1 : i32, i32, i32
  }
  func.func @transform_17(%arg0: i32, %arg1: memref<2xi32, #tpu.memory_space<smem>>) -> (i32, i32, i32) {
    %c0_i32 = arith.constant 0 : i32
    %c0_i32_0 = arith.constant 0 : i32
    %c0_i32_1 = arith.constant 0 : i32
    %c0_i32_2 = arith.constant 0 : i32
    return %c0_i32, %c0_i32_0, %c0_i32_1 : i32, i32, i32
  }
  func.func @transform_18(%arg0: i32, %arg1: memref<2xi32, #tpu.memory_space<smem>>) -> (i32, i32) {
    %c0_i32 = arith.constant 0 : i32
    %c0_i32_0 = arith.constant 0 : i32
    %c0_i32_1 = arith.constant 0 : i32
    return %c0_i32, %c0_i32_0 : i32, i32
  }
  func.func @transform_19(%arg0: i32, %arg1: memref<2xi32, #tpu.memory_space<smem>>) -> (i32, i32) {
    %c0_i32 = arith.constant 0 : i32
    %c0_i32_0 = arith.constant 0 : i32
    %c0_i32_1 = arith.constant 0 : i32
    return %c0_i32, %c0_i32_0 : i32, i32
  }
  func.func @transform_20(%arg0: i32, %arg1: memref<2xi32, #tpu.memory_space<smem>>) -> i32 {
    %c0_i32 = arith.constant 0 : i32
    %c0_i32_0 = arith.constant 0 : i32
    return %c0_i32 : i32
  }
  func.func @transform_21(%arg0: i32, %arg1: memref<2xi32, #tpu.memory_space<smem>>) -> i32 {
    %c0_i32 = arith.constant 0 : i32
    %c0_i32_0 = arith.constant 0 : i32
    return %c0_i32 : i32
  }
  func.func @transform_22(%arg0: i32, %arg1: memref<2xi32, #tpu.memory_space<smem>>) -> i32 {
    %c0_i32 = arith.constant 0 : i32
    %c0_i32_0 = arith.constant 0 : i32
    return %c0_i32 : i32
  }
}

</mosaic_0001>

<llo_original>
// kernel: fwd.1
$region0: #{fwd.1}
  #allocation0 [shape = 'u32[]', space=smem, size = 0x4, offset = 0x4, fixed_abs, tag = 'smem constant byte address 0x4 - core index']
  #allocation1 [shape = 'u32[72,128]{1,0:T(1,128)}', space=vmem, size = 0x9000, scoped, tag = 'internal scratch']
  #allocation2 [shape = 'f32[16,128]{1,0:T(8,128)}', space=vmem, size = 0x2000, scoped, tag = 'scratch operand']
  #allocation3 [shape = 's32[1]{0}', space=sflag, size = 0x4, scoped, tag = 'scoped memory for fwd.1']
  #allocation4 [shape = 'u8[512]{0}', space=smem, size = 0x200, scoped, tag = 'prefetched SMEM operand 0']
  %s0 = inlined_call_operand.vmem [shape: s32[2], index: 0, kind: input, shape index: {}]
  %s1 = inlined_call_operand.vmem [shape: f32[2,1,16], index: 1, kind: input, shape index: {}]
  %s2 = inlined_call_operand.vmem [shape: f32[2,16,1], index: 2, kind: input, shape index: {}]
  %s3 = inlined_call_operand.vmem [shape: f32[16,16], index: 3, kind: input, shape index: {}]
  %s4 = inlined_call_operand.vmem [shape: f32[16,32], index: 4, kind: input, shape index: {}]
  %s5 = inlined_call_operand.vmem [shape: f32[16,128], index: 5, kind: input, shape index: {}]
  %s6 = inlined_call_operand.vmem [shape: f32[16,128], index: 6, kind: input, shape index: {}]
  %s7 = inlined_call_operand.vmem [shape: f32[16,128], index: 7, kind: input, shape index: {}]
  %s8 = inlined_call_operand.vmem [shape: f32[128,128], index: 8, kind: input, shape index: {}]
  %s9 = inlined_call_operand.vmem [shape: bf16[128,32], index: 9, kind: input, shape index: {}]
  %s10 = inlined_call_operand.vmem [shape: f32[1,32], index: 10, kind: input, shape index: {}]
  %s11 = inlined_call_operand.vmem [shape: bf16[8,32,8], index: 11, kind: input, shape index: {}]
  %s12 = inlined_call_operand.vmem [shape: bf16[8,32,8], index: 12, kind: input, shape index: {}]
  %s13 = inlined_call_operand.vmem [shape: bf16[8,32,8], index: 13, kind: input, shape index: {}]
  %s14 = inlined_call_operand.vmem [shape: bf16[8,8,32], index: 14, kind: input, shape index: {}]
  %s15 = inlined_call_operand.vmem [shape: bf16[2,32,64], index: 15, kind: input, shape index: {}]
  %s16 = inlined_call_operand.vmem [shape: f32[2,1,64], index: 16, kind: input, shape index: {}]
  %s17 = inlined_call_operand.vmem [shape: bf16[2,64,32], index: 17, kind: input, shape index: {}]
  %s18 = inlined_call_operand.vmem [shape: f32[2,1,32], index: 18, kind: input, shape index: {}]
  %s19 = inlined_call_operand.vmem [shape: bf16[32,128], index: 19, kind: input, shape index: {}]
  %s20 = inlined_call_operand.vmem [shape: f32[1,128], index: 20, kind: input, shape index: {}]
  %s21 = inlined_call_operand.hbm [shape: f32[1], index: 21, kind: output, shape index: {0}]
  %s22 = inlined_call_operand.hbm [shape: f32[1], index: 22, kind: output, shape index: {1}]
  %s23 = inlined_call_operand.hbm [shape: f32[1], index: 23, kind: output, shape index: {2}]
  %24 = xla_tuple %s21, %s22, %s23
  %s25 = sld [smem:[#allocation0]]
  $region133: #{fwd.1} parent=0
    _
  %s27 = ssub.s32 1, %s25
  %s28 = scalar_select 0, %s27, %s25
  %s30 = sshll.u32 %s0, 4
  %s31 = int_to_ptr.vmem [resolvable:$true] %s30
  %33 = dma.vmem_to_smem %s31, 16, [#allocation4], [#allocation3]
  %35 = dma.done [#allocation3], 16
  %36 = sfence
  $region1: #{fwd.1} parent=0
    #allocation5 [shape = 'u8[512]{0}', space=smem, size = 0x200, scoped, tag = 'output window, operand 0, single buffered']
    #allocation6 [shape = 's32[2]{0}', space=sflag, size = 0x8, scoped, tag = 'scoped memory for fwd.1']
    #allocation7 [shape = 'u8[512]{0}', space=smem, size = 0x200, scoped, tag = 'output window, operand 1, single buffered']
    #allocation8 [shape = 's32[1]{0}', space=sflag, size = 0x4, scoped, tag = 'scoped memory for fwd.1']
    #allocation9 [shape = 'u8[512]{0}', space=smem, size = 0x200, scoped, tag = 'output window, operand 2, single buffered']
    %37 = vsyncpa [#allocation6], 0
    %38 = vsyncpa [#allocation8], 0
    loop: start=0, step=1, limit=4
    $region2: #{fwd.1} parent=1 // loop_pre_header
      _
    $region3: #{fwd.1} parent=1 // loop_header
      %s40 = sphi 0, %s44
      %p41 = scmp.ge.s32.totalorder %s40, 4
      %s50 = sphi 0, %s52
      %s53 = sphi 0, %s50
      %s54 = sphi 0, %s53
      %s70 = sphi 0, %s54
      %s76 = sphi 0, %s78
      %s79 = sphi 0, %s76
      %s80 = sphi 0, %s79
      %s96 = sphi 0, %s80
      %s100 = sphi 0, %s100
      %s102 = sphi 0, %s100
      %s103 = sphi 0, %s102
      %s117 = sphi 0, %s103
      %s121 = sphi 0, %s121
      %s123 = sphi 0, %s121
      %s124 = sphi 0, %s123
      %s138 = sphi 0, %s124
      %s142 = sphi 0, %s142
      %s144 = sphi 0, %s142
      %s145 = sphi 0, %s144
      %s159 = sphi 0, %s145
      %s163 = sphi 0, %s163
      %s165 = sphi 0, %s163
      %s166 = sphi 0, %s165
      %s180 = sphi 0, %s166
      %s184 = sphi 0, %s184
      %s186 = sphi 0, %s184
      %s187 = sphi 0, %s186
      %s201 = sphi 0, %s187
      %s205 = sphi 0, %s205
      %s207 = sphi 0, %s205
      %s208 = sphi 0, %s207
      %s222 = sphi 0, %s208
      %s226 = sphi 0, %s226
      %s228 = sphi 0, %s226
      %s229 = sphi 0, %s228
      %s243 = sphi 0, %s229
      %s247 = sphi 0, %s247
      %s249 = sphi 0, %s247
      %s250 = sphi 0, %s249
      %s264 = sphi 0, %s250
      %s268 = sphi 0, %s268
      %s270 = sphi 0, %s268
      %s271 = sphi 0, %s270
      %s285 = sphi 0, %s271
      %s289 = sphi 0, %s289
      %s291 = sphi 0, %s289
      %s292 = sphi 0, %s291
      %s306 = sphi 0, %s292
      %s310 = sphi 0, %s310
      %s312 = sphi 0, %s310
      %s313 = sphi 0, %s312
      %s327 = sphi 0, %s313
      %s331 = sphi 0, %s331
      %s333 = sphi 0, %s331
      %s334 = sphi 0, %s333
      %s348 = sphi 0, %s334
      %s352 = sphi 0, %s352
      %s354 = sphi 0, %s352
      %s355 = sphi 0, %s354
      %s369 = sphi 0, %s355
      %s373 = sphi 0, %s373
      %s375 = sphi 0, %s373
      %s376 = sphi 0, %s375
      %s390 = sphi 0, %s376
      %s394 = sphi 0, %s394
      %s396 = sphi 0, %s394
      %s397 = sphi 0, %s396
      %s411 = sphi 0, %s397
      %s415 = sphi 0, %s415
      %s417 = sphi 0, %s415
      %s418 = sphi 0, %s417
      %s432 = sphi 0, %s418
      %s436 = sphi 0, %s436
      %s438 = sphi 0, %s436
      %s439 = sphi 0, %s438
      %s453 = sphi 0, %s439
      %s457 = sphi 0, %s457
      %s459 = sphi 0, %s457
      %s460 = sphi 0, %s459
      %s474 = sphi 0, %s460
      %s478 = sphi 0, %s478
      %s480 = sphi 0, %s478
      %s481 = sphi 0, %s480
      %s495 = sphi 0, %s481
      %s499 = sphi 0, %s499
      %s501 = sphi 0, %s499
      %s502 = sphi 0, %s501
      %s516 = sphi 0, %s502
      %s520 = sphi 0, %s520
      %s522 = sphi 0, %s520
      %s523 = sphi 0, %s522
      %s537 = sphi 0, %s523
    $region4: #{fwd.1} parent=1 // loop_header_branch
      %43 = sbr.rel (%p41) target = $region8
    $region5: #{fwd.1} parent=1 // loop_body
      %s45 = ssub.s32 %s40, 1
      %s46 = ssub.s32 %s40, 2
      %s47 = sadd.s32 %s40, 1
      %s48 = ssub.s32 %s40, %s47
      %p49 = scmp.eq.s32.totalorder %s48, 0
      %s51 = sadd.s32 %s50, 1
      %s52 = scalar_select %p49, %s50, %s51
      %p55 = pneg %p49
      %p56 = scmp.eq.s32.totalorder %s40, 1
      %p57 = por %p55, %p56
      %p58 = scmp.ne.s32.totalorder %s50, %s53
      %p59 = scmp.eq.s32.totalorder %s40, 0
      %p60 = por %p58, %p59
      %p61 = scmp.ne.s32.totalorder %s50, %s53
      %p62 = scmp.eq.s32.totalorder %s45, 1
      %p63 = por %p61, %p62
      %p64 = scmp.ne.s32.totalorder %s53, %s54
      %p65 = scmp.eq.s32.totalorder %s45, 0
      %p66 = por %p64, %p65
      %p67 = scmp.ne.s32.totalorder %s53, %s54
      %p68 = scmp.eq.s32.totalorder %s46, 1
      %p69 = por %p67, %p68
      %p71 = scmp.ne.s32.totalorder %s54, %s70
      %p72 = scmp.eq.s32.totalorder %s46, 0
      %p73 = por %p71, %p72
      %s74 = ssub.s32 %s40, %s47
      %p75 = scmp.eq.s32.totalorder %s74, 0
      %s77 = sadd.s32 %s76, 1
      %s78 = scalar_select %p75, %s76, %s77
      %p81 = pneg %p75
      %p82 = scmp.eq.s32.totalorder %s40, 1
      %p83 = por %p81, %p82
      %p84 = scmp.ne.s32.totalorder %s76, %s79
      %p85 = scmp.eq.s32.totalorder %s40, 0
      %p86 = por %p84, %p85
      %p87 = scmp.ne.s32.totalorder %s76, %s79
      %p88 = scmp.eq.s32.totalorder %s45, 1
      %p89 = por %p87, %p88
      %p90 = scmp.ne.s32.totalorder %s79, %s80
      %p91 = scmp.eq.s32.totalorder %s45, 0
      %p92 = por %p90, %p91
      %p93 = scmp.ne.s32.totalorder %s79, %s80
      %p94 = scmp.eq.s32.totalorder %s46, 1
      %p95 = por %p93, %p94
      %p97 = scmp.ne.s32.totalorder %s80, %s96
      %p98 = scmp.eq.s32.totalorder %s46, 0
      %p99 = por %p97, %p98
      %s101 = sadd.s32 %s100, 1
      %p104 = scmp.eq.s32.totalorder %s40, 1
      %p105 = scmp.ne.s32.totalorder %s100, %s102
      %p106 = scmp.eq.s32.totalorder %s40, 0
      %p107 = por %p105, %p106
      %p108 = scmp.ne.s32.totalorder %s100, %s102
      %p109 = scmp.eq.s32.totalorder %s45, 1
      %p110 = por %p108, %p109
      %p111 = scmp.ne.s32.totalorder %s102, %s103
      %p112 = scmp.eq.s32.totalorder %s45, 0
      %p113 = por %p111, %p112
      %p114 = scmp.ne.s32.totalorder %s102, %s103
      %p115 = scmp.eq.s32.totalorder %s46, 1
      %p116 = por %p114, %p115
      %p118 = scmp.ne.s32.totalorder %s103, %s117
      %p119 = scmp.eq.s32.totalorder %s46, 0
      %p120 = por %p118, %p119
      %s122 = sadd.s32 %s121, 1
      %p125 = scmp.eq.s32.totalorder %s40, 1
      %p126 = scmp.ne.s32.totalorder %s121, %s123
      %p127 = scmp.eq.s32.totalorder %s40, 0
      %p128 = por %p126, %p127
      %p129 = scmp.ne.s32.totalorder %s121, %s123
      %p130 = scmp.eq.s32.totalorder %s45, 1
      %p131 = por %p129, %p130
      %p132 = scmp.ne.s32.totalorder %s123, %s124
      %p133 = scmp.eq.s32.totalorder %s45, 0
      %p134 = por %p132, %p133
      %p135 = scmp.ne.s32.totalorder %s123, %s124
      %p136 = scmp.eq.s32.totalorder %s46, 1
      %p137 = por %p135, %p136
      %p139 = scmp.ne.s32.totalorder %s124, %s138
      %p140 = scmp.eq.s32.totalorder %s46, 0
      %p141 = por %p139, %p140
      %s143 = sadd.s32 %s142, 1
      %p146 = scmp.eq.s32.totalorder %s40, 1
      %p147 = scmp.ne.s32.totalorder %s142, %s144
      %p148 = scmp.eq.s32.totalorder %s40, 0
      %p149 = por %p147, %p148
      %p150 = scmp.ne.s32.totalorder %s142, %s144
      %p151 = scmp.eq.s32.totalorder %s45, 1
      %p152 = por %p150, %p151
      %p153 = scmp.ne.s32.totalorder %s144, %s145
      %p154 = scmp.eq.s32.totalorder %s45, 0
      %p155 = por %p153, %p154
      %p156 = scmp.ne.s32.totalorder %s144, %s145
      %p157 = scmp.eq.s32.totalorder %s46, 1
      %p158 = por %p156, %p157
      %p160 = scmp.ne.s32.totalorder %s145, %s159
      %p161 = scmp.eq.s32.totalorder %s46, 0
      %p162 = por %p160, %p161
      %s164 = sadd.s32 %s163, 1
      %p167 = scmp.eq.s32.totalorder %s40, 1
      %p168 = scmp.ne.s32.totalorder %s163, %s165
      %p169 = scmp.eq.s32.totalorder %s40, 0
      %p170 = por %p168, %p169
      %p171 = scmp.ne.s32.totalorder %s163, %s165
      %p172 = scmp.eq.s32.totalorder %s45, 1
      %p173 = por %p171, %p172
      %p174 = scmp.ne.s32.totalorder %s165, %s166
      %p175 = scmp.eq.s32.totalorder %s45, 0
      %p176 = por %p174, %p175
      %p177 = scmp.ne.s32.totalorder %s165, %s166
      %p178 = scmp.eq.s32.totalorder %s46, 1
      %p179 = por %p177, %p178
      %p181 = scmp.ne.s32.totalorder %s166, %s180
      %p182 = scmp.eq.s32.totalorder %s46, 0
      %p183 = por %p181, %p182
      %s185 = sadd.s32 %s184, 1
      %p188 = scmp.eq.s32.totalorder %s40, 1
      %p189 = scmp.ne.s32.totalorder %s184, %s186
      %p190 = scmp.eq.s32.totalorder %s40, 0
      %p191 = por %p189, %p190
      %p192 = scmp.ne.s32.totalorder %s184, %s186
      %p193 = scmp.eq.s32.totalorder %s45, 1
      %p194 = por %p192, %p193
      %p195 = scmp.ne.s32.totalorder %s186, %s187
      %p196 = scmp.eq.s32.totalorder %s45, 0
      %p197 = por %p195, %p196
      %p198 = scmp.ne.s32.totalorder %s186, %s187
      %p199 = scmp.eq.s32.totalorder %s46, 1
      %p200 = por %p198, %p199
      %p202 = scmp.ne.s32.totalorder %s187, %s201
      %p203 = scmp.eq.s32.totalorder %s46, 0
      %p204 = por %p202, %p203
      %s206 = sadd.s32 %s205, 1
      %p209 = scmp.eq.s32.totalorder %s40, 1
      %p210 = scmp.ne.s32.totalorder %s205, %s207
      %p211 = scmp.eq.s32.totalorder %s40, 0
      %p212 = por %p210, %p211
      %p213 = scmp.ne.s32.totalorder %s205, %s207
      %p214 = scmp.eq.s32.totalorder %s45, 1
      %p215 = por %p213, %p214
      %p216 = scmp.ne.s32.totalorder %s207, %s208
      %p217 = scmp.eq.s32.totalorder %s45, 0
      %p218 = por %p216, %p217
      %p219 = scmp.ne.s32.totalorder %s207, %s208
      %p220 = scmp.eq.s32.totalorder %s46, 1
      %p221 = por %p219, %p220
      %p223 = scmp.ne.s32.totalorder %s208, %s222
      %p224 = scmp.eq.s32.totalorder %s46, 0
      %p225 = por %p223, %p224
      %s227 = sadd.s32 %s226, 1
      %p230 = scmp.eq.s32.totalorder %s40, 1
      %p231 = scmp.ne.s32.totalorder %s226, %s228
      %p232 = scmp.eq.s32.totalorder %s40, 0
      %p233 = por %p231, %p232
      %p234 = scmp.ne.s32.totalorder %s226, %s228
      %p235 = scmp.eq.s32.totalorder %s45, 1
      %p236 = por %p234, %p235
      %p237 = scmp.ne.s32.totalorder %s228, %s229
      %p238 = scmp.eq.s32.totalorder %s45, 0
      %p239 = por %p237, %p238
      %p240 = scmp.ne.s32.totalorder %s228, %s229
      %p241 = scmp.eq.s32.totalorder %s46, 1
      %p242 = por %p240, %p241
      %p244 = scmp.ne.s32.totalorder %s229, %s243
      %p245 = scmp.eq.s32.totalorder %s46, 0
      %p246 = por %p244, %p245
      %s248 = sadd.s32 %s247, 1
      %p251 = scmp.eq.s32.totalorder %s40, 1
      %p252 = scmp.ne.s32.totalorder %s247, %s249
      %p253 = scmp.eq.s32.totalorder %s40, 0
      %p254 = por %p252, %p253
      %p255 = scmp.ne.s32.totalorder %s247, %s249
      %p256 = scmp.eq.s32.totalorder %s45, 1
      %p257 = por %p255, %p256
      %p258 = scmp.ne.s32.totalorder %s249, %s250
      %p259 = scmp.eq.s32.totalorder %s45, 0
      %p260 = por %p258, %p259
      %p261 = scmp.ne.s32.totalorder %s249, %s250
      %p262 = scmp.eq.s32.totalorder %s46, 1
      %p263 = por %p261, %p262
      %p265 = scmp.ne.s32.totalorder %s250, %s264
      %p266 = scmp.eq.s32.totalorder %s46, 0
      %p267 = por %p265, %p266
      %s269 = sadd.s32 %s268, 1
      %p272 = scmp.eq.s32.totalorder %s40, 1
      %p273 = scmp.ne.s32.totalorder %s268, %s270
      %p274 = scmp.eq.s32.totalorder %s40, 0
      %p275 = por %p273, %p274
      %p276 = scmp.ne.s32.totalorder %s268, %s270
      %p277 = scmp.eq.s32.totalorder %s45, 1
      %p278 = por %p276, %p277
      %p279 = scmp.ne.s32.totalorder %s270, %s271
      %p280 = scmp.eq.s32.totalorder %s45, 0
      %p281 = por %p279, %p280
      %p282 = scmp.ne.s32.totalorder %s270, %s271
      %p283 = scmp.eq.s32.totalorder %s46, 1
      %p284 = por %p282, %p283
      %p286 = scmp.ne.s32.totalorder %s271, %s285
      %p287 = scmp.eq.s32.totalorder %s46, 0
      %p288 = por %p286, %p287
      %s290 = sadd.s32 %s289, 1
      %p293 = scmp.eq.s32.totalorder %s40, 1
      %p294 = scmp.ne.s32.totalorder %s289, %s291
      %p295 = scmp.eq.s32.totalorder %s40, 0
      %p296 = por %p294, %p295
      %p297 = scmp.ne.s32.totalorder %s289, %s291
      %p298 = scmp.eq.s32.totalorder %s45, 1
      %p299 = por %p297, %p298
      %p300 = scmp.ne.s32.totalorder %s291, %s292
      %p301 = scmp.eq.s32.totalorder %s45, 0
      %p302 = por %p300, %p301
      %p303 = scmp.ne.s32.totalorder %s291, %s292
      %p304 = scmp.eq.s32.totalorder %s46, 1
      %p305 = por %p303, %p304
      %p307 = scmp.ne.s32.totalorder %s292, %s306
      %p308 = scmp.eq.s32.totalorder %s46, 0
      %p309 = por %p307, %p308
      %s311 = sadd.s32 %s310, 1
      %p314 = scmp.eq.s32.totalorder %s40, 1
      %p315 = scmp.ne.s32.totalorder %s310, %s312
      %p316 = scmp.eq.s32.totalorder %s40, 0
      %p317 = por %p315, %p316
      %p318 = scmp.ne.s32.totalorder %s310, %s312
      %p319 = scmp.eq.s32.totalorder %s45, 1
      %p320 = por %p318, %p319
      %p321 = scmp.ne.s32.totalorder %s312, %s313
      %p322 = scmp.eq.s32.totalorder %s45, 0
      %p323 = por %p321, %p322
      %p324 = scmp.ne.s32.totalorder %s312, %s313
      %p325 = scmp.eq.s32.totalorder %s46, 1
      %p326 = por %p324, %p325
      %p328 = scmp.ne.s32.totalorder %s313, %s327
      %p329 = scmp.eq.s32.totalorder %s46, 0
      %p330 = por %p328, %p329
      %s332 = sadd.s32 %s331, 1
      %p335 = scmp.eq.s32.totalorder %s40, 1
      %p336 = scmp.ne.s32.totalorder %s331, %s333
      %p337 = scmp.eq.s32.totalorder %s40, 0
      %p338 = por %p336, %p337
      %p339 = scmp.ne.s32.totalorder %s331, %s333
      %p340 = scmp.eq.s32.totalorder %s45, 1
      %p341 = por %p339, %p340
      %p342 = scmp.ne.s32.totalorder %s333, %s334
      %p343 = scmp.eq.s32.totalorder %s45, 0
      %p344 = por %p342, %p343
      %p345 = scmp.ne.s32.totalorder %s333, %s334
      %p346 = scmp.eq.s32.totalorder %s46, 1
      %p347 = por %p345, %p346
      %p349 = scmp.ne.s32.totalorder %s334, %s348
      %p350 = scmp.eq.s32.totalorder %s46, 0
      %p351 = por %p349, %p350
      %s353 = sadd.s32 %s352, 1
      %p356 = scmp.eq.s32.totalorder %s40, 1
      %p357 = scmp.ne.s32.totalorder %s352, %s354
      %p358 = scmp.eq.s32.totalorder %s40, 0
      %p359 = por %p357, %p358
      %p360 = scmp.ne.s32.totalorder %s352, %s354
      %p361 = scmp.eq.s32.totalorder %s45, 1
      %p362 = por %p360, %p361
      %p363 = scmp.ne.s32.totalorder %s354, %s355
      %p364 = scmp.eq.s32.totalorder %s45, 0
      %p365 = por %p363, %p364
      %p366 = scmp.ne.s32.totalorder %s354, %s355
      %p367 = scmp.eq.s32.totalorder %s46, 1
      %p368 = por %p366, %p367
      %p370 = scmp.ne.s32.totalorder %s355, %s369
      %p371 = scmp.eq.s32.totalorder %s46, 0
      %p372 = por %p370, %p371
      %s374 = sadd.s32 %s373, 1
      %p377 = scmp.eq.s32.totalorder %s40, 1
      %p378 = scmp.ne.s32.totalorder %s373, %s375
      %p379 = scmp.eq.s32.totalorder %s40, 0
      %p380 = por %p378, %p379
      %p381 = scmp.ne.s32.totalorder %s373, %s375
      %p382 = scmp.eq.s32.totalorder %s45, 1
      %p383 = por %p381, %p382
      %p384 = scmp.ne.s32.totalorder %s375, %s376
      %p385 = scmp.eq.s32.totalorder %s45, 0
      %p386 = por %p384, %p385
      %p387 = scmp.ne.s32.totalorder %s375, %s376
      %p388 = scmp.eq.s32.totalorder %s46, 1
      %p389 = por %p387, %p388
      %p391 = scmp.ne.s32.totalorder %s376, %s390
      %p392 = scmp.eq.s32.totalorder %s46, 0
      %p393 = por %p391, %p392
      %s395 = sadd.s32 %s394, 1
      %p398 = scmp.eq.s32.totalorder %s40, 1
      %p399 = scmp.ne.s32.totalorder %s394, %s396
      %p400 = scmp.eq.s32.totalorder %s40, 0
      %p401 = por %p399, %p400
      %p402 = scmp.ne.s32.totalorder %s394, %s396
      %p403 = scmp.eq.s32.totalorder %s45, 1
      %p404 = por %p402, %p403
      %p405 = scmp.ne.s32.totalorder %s396, %s397
      %p406 = scmp.eq.s32.totalorder %s45, 0
      %p407 = por %p405, %p406
      %p408 = scmp.ne.s32.totalorder %s396, %s397
      %p409 = scmp.eq.s32.totalorder %s46, 1
      %p410 = por %p408, %p409
      %p412 = scmp.ne.s32.totalorder %s397, %s411
      %p413 = scmp.eq.s32.totalorder %s46, 0
      %p414 = por %p412, %p413
      %s416 = sadd.s32 %s415, 1
      %p419 = scmp.eq.s32.totalorder %s40, 1
      %p420 = scmp.ne.s32.totalorder %s415, %s417
      %p421 = scmp.eq.s32.totalorder %s40, 0
      %p422 = por %p420, %p421
      %p423 = scmp.ne.s32.totalorder %s415, %s417
      %p424 = scmp.eq.s32.totalorder %s45, 1
      %p425 = por %p423, %p424
      %p426 = scmp.ne.s32.totalorder %s417, %s418
      %p427 = scmp.eq.s32.totalorder %s45, 0
      %p428 = por %p426, %p427
      %p429 = scmp.ne.s32.totalorder %s417, %s418
      %p430 = scmp.eq.s32.totalorder %s46, 1
      %p431 = por %p429, %p430
      %p433 = scmp.ne.s32.totalorder %s418, %s432
      %p434 = scmp.eq.s32.totalorder %s46, 0
      %p435 = por %p433, %p434
      %s437 = sadd.s32 %s436, 1
      %p440 = scmp.eq.s32.totalorder %s40, 1
      %p441 = scmp.ne.s32.totalorder %s436, %s438
      %p442 = scmp.eq.s32.totalorder %s40, 0
      %p443 = por %p441, %p442
      %p444 = scmp.ne.s32.totalorder %s436, %s438
      %p445 = scmp.eq.s32.totalorder %s45, 1
      %p446 = por %p444, %p445
      %p447 = scmp.ne.s32.totalorder %s438, %s439
      %p448 = scmp.eq.s32.totalorder %s45, 0
      %p449 = por %p447, %p448
      %p450 = scmp.ne.s32.totalorder %s438, %s439
      %p451 = scmp.eq.s32.totalorder %s46, 1
      %p452 = por %p450, %p451
      %p454 = scmp.ne.s32.totalorder %s439, %s453
      %p455 = scmp.eq.s32.totalorder %s46, 0
      %p456 = por %p454, %p455
      %s458 = sadd.s32 %s457, 1
      %p461 = scmp.eq.s32.totalorder %s40, 1
      %p462 = scmp.ne.s32.totalorder %s457, %s459
      %p463 = scmp.eq.s32.totalorder %s40, 0
      %p464 = por %p462, %p463
      %p465 = scmp.ne.s32.totalorder %s457, %s459
      %p466 = scmp.eq.s32.totalorder %s45, 1
      %p467 = por %p465, %p466
      %p468 = scmp.ne.s32.totalorder %s459, %s460
      %p469 = scmp.eq.s32.totalorder %s45, 0
      %p470 = por %p468, %p469
      %p471 = scmp.ne.s32.totalorder %s459, %s460
      %p472 = scmp.eq.s32.totalorder %s46, 1
      %p473 = por %p471, %p472
      %p475 = scmp.ne.s32.totalorder %s460, %s474
      %p476 = scmp.eq.s32.totalorder %s46, 0
      %p477 = por %p475, %p476
      %s479 = sadd.s32 %s478, 1
      %p482 = scmp.eq.s32.totalorder %s40, 1
      %p483 = scmp.ne.s32.totalorder %s478, %s480
      %p484 = scmp.eq.s32.totalorder %s40, 0
      %p485 = por %p483, %p484
      %p486 = scmp.ne.s32.totalorder %s478, %s480
      %p487 = scmp.eq.s32.totalorder %s45, 1
      %p488 = por %p486, %p487
      %p489 = scmp.ne.s32.totalorder %s480, %s481
      %p490 = scmp.eq.s32.totalorder %s45, 0
      %p491 = por %p489, %p490
      %p492 = scmp.ne.s32.totalorder %s480, %s481
      %p493 = scmp.eq.s32.totalorder %s46, 1
      %p494 = por %p492, %p493
      %p496 = scmp.ne.s32.totalorder %s481, %s495
      %p497 = scmp.eq.s32.totalorder %s46, 0
      %p498 = por %p496, %p497
      %s500 = sadd.s32 %s499, 1
      %p503 = scmp.eq.s32.totalorder %s40, 1
      %p504 = scmp.ne.s32.totalorder %s499, %s501
      %p505 = scmp.eq.s32.totalorder %s40, 0
      %p506 = por %p504, %p505
      %p507 = scmp.ne.s32.totalorder %s499, %s501
      %p508 = scmp.eq.s32.totalorder %s45, 1
      %p509 = por %p507, %p508
      %p510 = scmp.ne.s32.totalorder %s501, %s502
      %p511 = scmp.eq.s32.totalorder %s45, 0
      %p512 = por %p510, %p511
      %p513 = scmp.ne.s32.totalorder %s501, %s502
      %p514 = scmp.eq.s32.totalorder %s46, 1
      %p515 = por %p513, %p514
      %p517 = scmp.ne.s32.totalorder %s502, %s516
      %p518 = scmp.eq.s32.totalorder %s46, 0
      %p519 = por %p517, %p518
      %s521 = sadd.s32 %s520, 1
      %p524 = scmp.eq.s32.totalorder %s40, 1
      %p525 = scmp.ne.s32.totalorder %s520, %s522
      %p526 = scmp.eq.s32.totalorder %s40, 0
      %p527 = por %p525, %p526
      %p528 = scmp.ne.s32.totalorder %s520, %s522
      %p529 = scmp.eq.s32.totalorder %s45, 1
      %p530 = por %p528, %p529
      %p531 = scmp.ne.s32.totalorder %s522, %s523
      %p532 = scmp.eq.s32.totalorder %s45, 0
      %p533 = por %p531, %p532
      %p534 = scmp.ne.s32.totalorder %s522, %s523
      %p535 = scmp.eq.s32.totalorder %s46, 1
      %p536 = por %p534, %p535
      %p538 = scmp.ne.s32.totalorder %s523, %s537
      %p539 = scmp.eq.s32.totalorder %s46, 0
      %p540 = por %p538, %p539
      %p541 = scmp.le.s32.totalorder 1, %s40
      %p542 = scmp.lt.s32.totalorder %s40, 3
      %p543 = pnand %p541, %p542
      %p544 = pneg %p543
      // Predicated region
      $region9: #{fwd.1} parent=5 // pred_check
        _
      $region10: #{fwd.1} parent=5 // pred_check_branch
        %546 = sbr.rel (%p543) target = $region12
      $region11: #{fwd.1} parent=5 // pred_region
        %s547 = ssub.s32 %s40, 1
        // Predicated region
        $region13: #{fwd.1} parent=11 // pred_check
          %p548 = pneg %p113
        $region14: #{fwd.1} parent=11 // pred_check_branch
          %550 = sbr.rel (%p548) target = $region16
        $region15: #{fwd.1} parent=11 // pred_region
          _
        $region16: #{fwd.1} parent=11 // pred_fallthru
          _
        // Predicated region
        $region17: #{fwd.1} parent=11 // pred_check
          %p551 = pneg %p134
        $region18: #{fwd.1} parent=11 // pred_check_branch
          %553 = sbr.rel (%p551) target = $region20
        $region19: #{fwd.1} parent=11 // pred_region
          _
        $region20: #{fwd.1} parent=11 // pred_fallthru
          _
        // Predicated region
        $region21: #{fwd.1} parent=11 // pred_check
          %p554 = pneg %p155
        $region22: #{fwd.1} parent=11 // pred_check_branch
          %556 = sbr.rel (%p554) target = $region24
        $region23: #{fwd.1} parent=11 // pred_region
          _
        $region24: #{fwd.1} parent=11 // pred_fallthru
          _
        // Predicated region
        $region25: #{fwd.1} parent=11 // pred_check
          %p557 = pneg %p176
        $region26: #{fwd.1} parent=11 // pred_check_branch
          %559 = sbr.rel (%p557) target = $region28
        $region27: #{fwd.1} parent=11 // pred_region
          _
        $region28: #{fwd.1} parent=11 // pred_fallthru
          _
        // Predicated region
        $region29: #{fwd.1} parent=11 // pred_check
          %p560 = pneg %p197
        $region30: #{fwd.1} parent=11 // pred_check_branch
          %562 = sbr.rel (%p560) target = $region32
        $region31: #{fwd.1} parent=11 // pred_region
          _
        $region32: #{fwd.1} parent=11 // pred_fallthru
          _
        // Predicated region
        $region33: #{fwd.1} parent=11 // pred_check
          %p563 = pneg %p218
        $region34: #{fwd.1} parent=11 // pred_check_branch
          %565 = sbr.rel (%p563) target = $region36
        $region35: #{fwd.1} parent=11 // pred_region
          _
        $region36: #{fwd.1} parent=11 // pred_fallthru
          _
        // Predicated region
        $region37: #{fwd.1} parent=11 // pred_check
          %p566 = pneg %p239
        $region38: #{fwd.1} parent=11 // pred_check_branch
          %568 = sbr.rel (%p566) target = $region40
        $region39: #{fwd.1} parent=11 // pred_region
          _
        $region40: #{fwd.1} parent=11 // pred_fallthru
          _
        // Predicated region
        $region41: #{fwd.1} parent=11 // pred_check
          %p569 = pneg %p260
        $region42: #{fwd.1} parent=11 // pred_check_branch
          %571 = sbr.rel (%p569) target = $region44
        $region43: #{fwd.1} parent=11 // pred_region
          _
        $region44: #{fwd.1} parent=11 // pred_fallthru
          _
        // Predicated region
        $region45: #{fwd.1} parent=11 // pred_check
          %p572 = pneg %p281
        $region46: #{fwd.1} parent=11 // pred_check_branch
          %574 = sbr.rel (%p572) target = $region48
        $region47: #{fwd.1} parent=11 // pred_region
          _
        $region48: #{fwd.1} parent=11 // pred_fallthru
          _
        // Predicated region
        $region49: #{fwd.1} parent=11 // pred_check
          %p575 = pneg %p302
        $region50: #{fwd.1} parent=11 // pred_check_branch
          %577 = sbr.rel (%p575) target = $region52
        $region51: #{fwd.1} parent=11 // pred_region
          _
        $region52: #{fwd.1} parent=11 // pred_fallthru
          _
        // Predicated region
        $region53: #{fwd.1} parent=11 // pred_check
          %p578 = pneg %p323
        $region54: #{fwd.1} parent=11 // pred_check_branch
          %580 = sbr.rel (%p578) target = $region56
        $region55: #{fwd.1} parent=11 // pred_region
          _
        $region56: #{fwd.1} parent=11 // pred_fallthru
          _
        // Predicated region
        $region57: #{fwd.1} parent=11 // pred_check
          %p581 = pneg %p344
        $region58: #{fwd.1} parent=11 // pred_check_branch
          %583 = sbr.rel (%p581) target = $region60
        $region59: #{fwd.1} parent=11 // pred_region
          _
        $region60: #{fwd.1} parent=11 // pred_fallthru
          _
        // Predicated region
        $region61: #{fwd.1} parent=11 // pred_check
          %p584 = pneg %p365
        $region62: #{fwd.1} parent=11 // pred_check_branch
          %586 = sbr.rel (%p584) target = $region64
        $region63: #{fwd.1} parent=11 // pred_region
          _
        $region64: #{fwd.1} parent=11 // pred_fallthru
          _
        // Predicated region
        $region65: #{fwd.1} parent=11 // pred_check
          %p587 = pneg %p386
        $region66: #{fwd.1} parent=11 // pred_check_branch
          %589 = sbr.rel (%p587) target = $region68
        $region67: #{fwd.1} parent=11 // pred_region
          _
        $region68: #{fwd.1} parent=11 // pred_fallthru
          _
        // Predicated region
        $region69: #{fwd.1} parent=11 // pred_check
          %p590 = pneg %p407
        $region70: #{fwd.1} parent=11 // pred_check_branch
          %592 = sbr.rel (%p590) target = $region72
        $region71: #{fwd.1} parent=11 // pred_region
          _
        $region72: #{fwd.1} parent=11 // pred_fallthru
          _
        // Predicated region
        $region73: #{fwd.1} parent=11 // pred_check
          %p593 = pneg %p428
        $region74: #{fwd.1} parent=11 // pred_check_branch
          %595 = sbr.rel (%p593) target = $region76
        $region75: #{fwd.1} parent=11 // pred_region
          _
        $region76: #{fwd.1} parent=11 // pred_fallthru
          _
        // Predicated region
        $region77: #{fwd.1} parent=11 // pred_check
          %p596 = pneg %p449
        $region78: #{fwd.1} parent=11 // pred_check_branch
          %598 = sbr.rel (%p596) target = $region80
        $region79: #{fwd.1} parent=11 // pred_region
          _
        $region80: #{fwd.1} parent=11 // pred_fallthru
          _
        // Predicated region
        $region81: #{fwd.1} parent=11 // pred_check
          %p599 = pneg %p470
        $region82: #{fwd.1} parent=11 // pred_check_branch
          %601 = sbr.rel (%p599) target = $region84
        $region83: #{fwd.1} parent=11 // pred_region
          _
        $region84: #{fwd.1} parent=11 // pred_fallthru
          _
      $region12: #{fwd.1} parent=5 // pred_fallthru
        _
      %p602 = scmp.lt.s32.totalorder %s40, 2
      // Predicated region
      $region85: #{fwd.1} parent=5 // pred_check
        %p603 = pneg %p602
      $region86: #{fwd.1} parent=5 // pred_check_branch
        %605 = sbr.rel (%p603) target = $region88
      $region87: #{fwd.1} parent=5 // pred_region
        // Predicated region
        $region89: #{fwd.1} parent=87 // pred_check
          %p606 = pneg %p60
        $region90: #{fwd.1} parent=87 // pred_check_branch
          %608 = sbr.rel (%p606) target = $region92
        $region91: #{fwd.1} parent=87 // pred_region
          %p609 = scmp.lt.s32.totalorder %s40, 1
          %s610 = scalar_select %p609, %s40, 1
          %s611 = scalar_lea.vmem %s1, %s610
        $region92: #{fwd.1} parent=87 // pred_fallthru
          _
        // Predicated region
        $region93: #{fwd.1} parent=87 // pred_check
          %p612 = pneg %p86
        $region94: #{fwd.1} parent=87 // pred_check_branch
          %614 = sbr.rel (%p612) target = $region96
        $region95: #{fwd.1} parent=87 // pred_region
          %p615 = scmp.lt.s32.totalorder %s40, 1
          %s616 = scalar_select %p615, %s40, 1
          %s617 = smul.addr %s616, 2
          %s618 = smul.addr %s617, 8
          %s619 = scalar_lea.vmem %s2, %s618
        $region96: #{fwd.1} parent=87 // pred_fallthru
          _
      $region88: #{fwd.1} parent=5 // pred_fallthru
        _
      %p620 = scmp.le.s32.totalorder 1, %s40
      %p621 = scmp.lt.s32.totalorder %s40, 3
      %p622 = pnand %p620, %p621
      %p623 = pneg %p622
      // Predicated region
      $region97: #{fwd.1} parent=5 // pred_check
        _
      $region98: #{fwd.1} parent=5 // pred_check_branch
        %625 = sbr.rel (%p622) target = $region100
      $region99: #{fwd.1} parent=5 // pred_region
        %s626 = ssub.s32 %s40, 1
        %p627 = scmp.lt.s32.totalorder %s45, 1
        %s628 = scalar_select %p627, %s45, 1
        %s629 = scalar_lea.vmem %s1, %s628
        %p630 = pneg %p66
        %p631 = pneg %p63
        %p632 = scmp.lt.s32.totalorder %s45, 1
        %s633 = scalar_select %p632, %s45, 1
        %s634 = smul.addr %s633, 2
        %s635 = smul.addr %s634, 8
        %s636 = scalar_lea.vmem %s2, %s635
        %p637 = pneg %p92
        %p638 = pneg %p89
        %p639 = pneg %p113
        %p640 = pneg %p110
        %p641 = pneg %p134
        %p642 = pneg %p131
        %p643 = pneg %p155
        %p644 = pneg %p152
        %p645 = pneg %p176
        %p646 = pneg %p173
        %p647 = pneg %p197
        %p648 = pneg %p194
        %p649 = pneg %p218
        %p650 = pneg %p215
        %p651 = pneg %p239
        %p652 = pneg %p236
        %p653 = pneg %p260
        %p654 = pneg %p257
        %p655 = pneg %p281
        %p656 = pneg %p278
        %p657 = pneg %p302
        %p658 = pneg %p299
        %p659 = pneg %p323
        %p660 = pneg %p320
        %p661 = pneg %p344
        %p662 = pneg %p341
        %p663 = pneg %p365
        %p664 = pneg %p362
        %p665 = pneg %p386
        %p666 = pneg %p383
        %p667 = pneg %p407
        %p668 = pneg %p404
        %p669 = pneg %p428
        %p670 = pneg %p425
        %p671 = pneg %p449
        %p672 = pneg %p446
        %p673 = pneg %p470
        %p674 = pneg %p467
        %p675 = pneg %p491
        %p676 = pneg %p488
        %p677 = pneg %p512
        %p678 = pneg %p509
        %p679 = pneg %p533
        %p680 = pneg %p530
        %p681 = scmp.lt.s32.totalorder %s45, 1
        %s682 = scalar_select %p681, %s45, 1
        %s683 = scalar_lea.vmem %s1, %s682
        %p684 = scmp.lt.s32.totalorder %s45, 1
        %s685 = scalar_select %p684, %s45, 1
        %s686 = smul.addr %s685, 2
        %s687 = smul.addr %s686, 8
        %s688 = scalar_lea.vmem %s2, %s687
        %p690 = scmp.eq.s32.totalorder %s45, 0
        // Predicated region
        $region101: #{fwd.1} parent=99 // pred_check
          %p691 = pneg %p690
        $region102: #{fwd.1} parent=99 // pred_check_branch
          %693 = sbr.rel (%p691) target = $region104
        $region103: #{fwd.1} parent=99 // pred_region
          %v694 = vld [vmem:[%s5] sm:$0xff]
          %v695 = vld [vmem:[%s5 + $0x8] sm:$0xff]
          %696 = vst [vmem:[#allocation2] sm:$0xff] %v694
          %697 = vst [vmem:[#allocation2 + $0x8] sm:$0xff] %v695
          %s698 = scalar_lea.smem [#allocation5], 0
          %699 = sst [smem:[%s698]] 0.0
          %s700 = scalar_lea.smem [#allocation7], 0
          %701 = sst [smem:[%s700]] 0.0
          %s702 = scalar_lea.smem [#allocation9], 0
          %703 = sst [smem:[%s702]] 0.0
        $region104: #{fwd.1} parent=99 // pred_fallthru
          _
        %s704 = sld [smem:[#allocation4 + %s45]]
        %s705 = scvt.s32.f32 %s704
        %v706 = vld [vmem:[%s683] sm:$0x1]
        %v707 = vld [vmem:[%s688] sm:$0xff]
        %v708 = vld [vmem:[%s688 + $0x8] sm:$0xff]
        %v709 = vld [vmem:[%s10] sm:$0x1]
        %v710 = vstv %s705
        %v711 = vmul.f32 %v710, %v709
        %v712 = vld [vmem:[%s4] sm:$0xff]
        %v713 = vld [vmem:[%s4 + $0x8] sm:$0xff]
        %v715 = vperm.slane %v711, 0
        %v717 = vadd.f32 %v712, %v715
        %v718 = vadd.f32 %v713, %v715
        %v719 = vld [vmem:[#allocation2] sm:$0xff]
        %v720 = vld [vmem:[#allocation2 + $0x8] sm:$0xff]
        %v721 = vpack.c.bf16 %v720, %v719
        %v722 = vld [vmem:[%s9] sm:$0xf]
        %v723 = vld [vmem:[%s9 + $0x4] sm:$0xf]
        %v724 = vld [vmem:[%s9 + $0x8] sm:$0xf]
        %v725 = vld [vmem:[%s9 + $0xc] sm:$0xf]
        %v726 = vld [vmem:[%s9 + $0x10] sm:$0xf]
        %v727 = vld [vmem:[%s9 + $0x14] sm:$0xf]
        %v728 = vld [vmem:[%s9 + $0x18] sm:$0xf]
        %v729 = vld [vmem:[%s9 + $0x1c] sm:$0xf]
        %v730 = vld [vmem:[%s9 + $0x20] sm:$0xf]
        %v731 = vld [vmem:[%s9 + $0x24] sm:$0xf]
        %v732 = vld [vmem:[%s9 + $0x28] sm:$0xf]
        %v733 = vld [vmem:[%s9 + $0x2c] sm:$0xf]
        %v734 = vld [vmem:[%s9 + $0x30] sm:$0xf]
        %v735 = vld [vmem:[%s9 + $0x34] sm:$0xf]
        %v736 = vld [vmem:[%s9 + $0x38] sm:$0xf]
        %v737 = vld [vmem:[%s9 + $0x3c] sm:$0xf]
        %v754 = vunpack.c.l.b16 %v722
        %v755 = vunpack.c.l.b16 %v723
        %v756 = vunpack.c.l.b16 %v724
        %v757 = vunpack.c.l.b16 %v725
        %v758 = vunpack.c.l.b16 %v726
        %v759 = vunpack.c.l.b16 %v727
        %v760 = vunpack.c.l.b16 %v728
        %v761 = vunpack.c.l.b16 %v729
        %v762 = vunpack.c.l.b16 %v730
        %v763 = vunpack.c.l.b16 %v731
        %v764 = vunpack.c.l.b16 %v732
        %v765 = vunpack.c.l.b16 %v733
        %v766 = vunpack.c.l.b16 %v734
        %v767 = vunpack.c.l.b16 %v735
        %v768 = vunpack.c.l.b16 %v736
        %v769 = vunpack.c.l.b16 %v737
        %v770 = vpack.c.b16 %v755, %v754
        %v771 = vpack.c.b16 %v757, %v756
        %v772 = vpack.c.b16 %v759, %v758
        %v773 = vpack.c.b16 %v761, %v760
        %v774 = vpack.c.b16 %v763, %v762
        %v775 = vpack.c.b16 %v765, %v764
        %v776 = vpack.c.b16 %v767, %v766
        %v777 = vpack.c.b16 %v769, %v768
        %786 = vmatpush.bf16.msra.mxu0 %v777
        %787 = vmatpush.bf16.msra.mxu0 %v776
        %788 = vmatpush.bf16.msra.mxu0 %v775
        %789 = vmatpush.bf16.msra.mxu0 %v774
        %790 = vmatpush.bf16.msra.mxu0 %v773
        %791 = vmatpush.bf16.msra.mxu0 %v772
        %792 = vmatpush.bf16.msra.mxu0 %v771
        %793 = vmatpush.bf16.msra.mxu0 %v770
        %794 = vmatmul.bf16.gmra.mxu0 %v721
        %v795 = vpop.f32.mrf.mxu0
        %v796 = vadd.f32 0.0, %v795
        %v797 = vpop.f32.mrf.mxu0
        %v798 = vadd.f32 0.0, %v797
        %799 = vdwg.mxu0
        %v800 = vadd.f32 %v717, %v796
        %v801 = vadd.f32 %v718, %v798
        %v802 = vld [vmem:[%s3] sm:$0xff]
        %v803 = vld [vmem:[%s3 + $0x8] sm:$0xff]
        %v805 = vperm.slane %v706, 0
        %v807 = vmul.f32 %v802, %v805
        %v808 = vmul.f32 %v803, %v805
        %v809 = vsub.f32 %v807, 1.0
        %v810 = vsub.f32 %v808, 1.0
        %v811 = vmul.f32 %v809, 1e+30
        %v812 = vmul.f32 %v810, 1e+30
        %v813 = vpack.c.bf16 %v801, %v800
        %v814 = vpack.c.bf16 %v718, %v717
        %v815 = vld [vmem:[%s11] sm:$0xf]
        %v816 = vld [vmem:[%s11 + $0x4] sm:$0xf]
        %v817 = vld [vmem:[%s11 + $0x8] sm:$0xf]
        %v818 = vld [vmem:[%s11 + $0xc] sm:$0xf]
        %v823 = vunpack.c.l.b16 %v815
        %v824 = vunpack.c.l.b16 %v816
        %v825 = vunpack.c.l.b16 %v817
        %v826 = vunpack.c.l.b16 %v818
        %v827 = vpack.c.b16 %v824, %v823
        %v828 = vpack.c.b16 %v826, %v825
        %vm831 = vcmask 261120
        %v833 = vsel %vm831, %v814, 0
        %835 = vmatpush.bf16.msra.mxu0 0
        %836 = vmatpush.bf16.msra.mxu0 0
        %837 = vmatpush.bf16.msra.mxu0 0
        %838 = vmatpush.bf16.msra.mxu0 0
        %839 = vmatpush.bf16.msra.mxu0 0
        %840 = vmatpush.bf16.msra.mxu0 0
        %841 = vmatpush.bf16.msra.mxu0 %v828
        %842 = vmatpush.bf16.msra.mxu0 %v827
        %843 = vmatmul.bf16.gmra.mxu0 %v833
        %v844 = vpop.f32.mrf.mxu0
        %v845 = vadd.f32 0.0, %v844
        %v846 = vpop.f32.mrf.mxu0
        %v847 = vadd.f32 0.0, %v846
        %848 = vdwg.mxu0
        %v849 = vld [vmem:[%s12] sm:$0xf]
        %v850 = vld [vmem:[%s12 + $0x4] sm:$0xf]
        %v851 = vld [vmem:[%s12 + $0x8] sm:$0xf]
        %v852 = vld [vmem:[%s12 + $0xc] sm:$0xf]
        %v857 = vunpack.c.l.b16 %v849
        %v858 = vunpack.c.l.b16 %v850
        %v859 = vunpack.c.l.b16 %v851
        %v860 = vunpack.c.l.b16 %v852
        %v861 = vpack.c.b16 %v858, %v857
        %v862 = vpack.c.b16 %v860, %v859
        %v866 = vsel %vm831, %v813, 0
        %868 = vmatpush.bf16.msra.mxu0 0
        %869 = vmatpush.bf16.msra.mxu0 0
        %870 = vmatpush.bf16.msra.mxu0 0
        %871 = vmatpush.bf16.msra.mxu0 0
        %872 = vmatpush.bf16.msra.mxu0 0
        %873 = vmatpush.bf16.msra.mxu0 0
        %874 = vmatpush.bf16.msra.mxu0 %v862
        %875 = vmatpush.bf16.msra.mxu0 %v861
        %876 = vmatmul.bf16.gmra.mxu0 %v866
        %v877 = vpop.f32.mrf.mxu0
        %v878 = vadd.f32 0.0, %v877
        %v879 = vpop.f32.mrf.mxu0
        %v880 = vadd.f32 0.0, %v879
        %881 = vdwg.mxu0
        %v882 = vld [vmem:[%s13] sm:$0xf]
        %v883 = vld [vmem:[%s13 + $0x4] sm:$0xf]
        %v884 = vld [vmem:[%s13 + $0x8] sm:$0xf]
        %v885 = vld [vmem:[%s13 + $0xc] sm:$0xf]
        %v890 = vunpack.c.l.b16 %v882
        %v891 = vunpack.c.l.b16 %v883
        %v892 = vunpack.c.l.b16 %v884
        %v893 = vunpack.c.l.b16 %v885
        %v894 = vpack.c.b16 %v891, %v890
        %v895 = vpack.c.b16 %v893, %v892
        %898 = vmatpush.bf16.msra.mxu0 0
        %899 = vmatpush.bf16.msra.mxu0 0
        %900 = vmatpush.bf16.msra.mxu0 0
        %901 = vmatpush.bf16.msra.mxu0 0
        %902 = vmatpush.bf16.msra.mxu0 0
        %903 = vmatpush.bf16.msra.mxu0 0
        %904 = vmatpush.bf16.msra.mxu0 %v895
        %905 = vmatpush.bf16.msra.mxu0 %v894
        %906 = vmatmul.bf16.gmra.mxu0 %v866
        %v907 = vpop.f32.mrf.mxu0
        %v908 = vadd.f32 0.0, %v907
        %v909 = vpop.f32.mrf.mxu0
        %v910 = vadd.f32 0.0, %v909
        %911 = vdwg.mxu0
        %vm912 = vcmask 64512
        %v914 = vsel %vm912, %v845, 0
        %v917 = vsel %vm912, %v847, 0
        %v920 = vsel %vm912, %v878, 0
        %v923 = vsel %vm912, %v880, 0
        %925 = vmatpush.xpose.msra.mxu0 0.0
        %926 = vmatpush.xpose.msra.mxu0 0.0
        %927 = vmatpush.xpose.msra.mxu0 0.0
        %928 = vmatpush.xpose.msra.mxu0 0.0
        %929 = vmatpush.xpose.msra.mxu0 0.0
        %930 = vmatpush.xpose.msra.mxu0 0.0
        %931 = vmatpush.xpose.msra.mxu0 0.0
        %932 = vmatpush.xpose.msra.mxu0 0.0
        %933 = vmatpush.xpose.msra.mxu0 0.0
        %934 = vmatpush.xpose.msra.mxu0 0.0
        %935 = vmatpush.xpose.msra.mxu0 0.0
        %936 = vmatpush.xpose.msra.mxu0 0.0
        %937 = vmatpush.xpose.msra.mxu0 0.0
        %938 = vmatpush.xpose.msra.mxu0 0.0
        %939 = vmatpush.xpose.msra.mxu0 %v923
        %940 = vmatpush.xpose.msra.mxu0 %v920
        %941 = vmatmul.f32.gmra.mxu0 %v914
        %v942 = vpop.f32.mrf.mxu0
        %v943 = vadd.f32 %v811, %v942
        %944 = vmatmul.f32.gmra.mxu0 %v917
        %v945 = vpop.f32.mrf.mxu0
        %v946 = vadd.f32 %v812, %v945
        %947 = vdwg.mxu0
        %vm948 = vcmask 130048
        %v949 = vsel %vm948, %v943, -inf
        %950 = vmax.xlane.f32.xlu0 %v949
        %v951 = vpop.xlane.xlu0 %950
        %v952 = vsel %vm948, %v946, -inf
        %953 = vmax.xlane.f32.xlu0 %v952
        %v954 = vpop.xlane.xlu0 %953
        %v955 = vsub.f32 %v943, %v951
        %v956 = vsub.f32 %v946, %v954
        %v957 = vmul.f32 %v955, 1.442695
        %v958 = vpow.pop %v957
        %v959 = vmul.f32 %v956, 1.442695
        %v960 = vpow.pop %v959
        %v961 = vsel %vm948, %v958, 0.0
        %962 = vadd.xlane.f32.xlu0 %v961
        %v963 = vpop.xlane.xlu0 %962
        %v964 = vsel %vm948, %v960, 0.0
        %965 = vadd.xlane.f32.xlu0 %v964
        %v966 = vpop.xlane.xlu0 %965
        %v967 = vrcp.pop %v963
        %v968 = vrcp.pop %v966
        %v969 = vmul.f32 %v958, %v967
        %v970 = vmul.f32 %v960, %v968
        %v971 = vpack.c.bf16 %v970, %v969
        %v972 = vpack.c.bf16 %v910, %v908
        %v974 = vsel %vm948, %v971, 0
        %976 = vmatpush.bf16.msra.mxu0 0
        %977 = vmatpush.bf16.msra.mxu0 0
        %978 = vmatpush.bf16.msra.mxu0 0
        %979 = vmatpush.bf16.msra.mxu0 0
        %980 = vmatpush.bf16.msra.mxu0 0
        %981 = vmatpush.bf16.msra.mxu0 0
        %982 = vmatpush.bf16.msra.mxu0 0
        %983 = vmatpush.bf16.msra.mxu0 %v972
        %984 = vmatmul.bf16.gmra.mxu0 %v974
        %v985 = vpop.f32.mrf.mxu0
        %v986 = vadd.f32 0.0, %v985
        %v987 = vpop.f32.mrf.mxu0
        %v988 = vadd.f32 0.0, %v987
        %989 = vdwg.mxu0
        %v990 = vpack.c.bf16 %v988, %v986
        %v991 = vld [vmem:[%s14] sm:$0xf]
        %s992 = scalar_lea.vmem %s11, 16
        %v993 = vld [vmem:[%s992] sm:$0xf]
        %v994 = vld [vmem:[%s992 + $0x4] sm:$0xf]
        %v995 = vld [vmem:[%s992 + $0x8] sm:$0xf]
        %v996 = vld [vmem:[%s992 + $0xc] sm:$0xf]
        %v1001 = vunpack.c.l.b16 %v993
        %v1002 = vunpack.c.l.b16 %v994
        %v1003 = vunpack.c.l.b16 %v995
        %v1004 = vunpack.c.l.b16 %v996
        %v1005 = vpack.c.b16 %v1002, %v1001
        %v1006 = vpack.c.b16 %v1004, %v1003
        %1009 = vmatpush.bf16.msra.mxu0 0
        %1010 = vmatpush.bf16.msra.mxu0 0
        %1011 = vmatpush.bf16.msra.mxu0 0
        %1012 = vmatpush.bf16.msra.mxu0 0
        %1013 = vmatpush.bf16.msra.mxu0 0
        %1014 = vmatpush.bf16.msra.mxu0 0
        %1015 = vmatpush.bf16.msra.mxu0 %v1006
        %1016 = vmatpush.bf16.msra.mxu0 %v1005
        %1017 = vmatmul.bf16.gmra.mxu0 %v833
        %v1018 = vpop.f32.mrf.mxu0
        %v1019 = vadd.f32 0.0, %v1018
        %v1020 = vpop.f32.mrf.mxu0
        %v1021 = vadd.f32 0.0, %v1020
        %1022 = vdwg.mxu0
        %s1023 = scalar_lea.vmem %s12, 16
        %v1024 = vld [vmem:[%s1023] sm:$0xf]
        %v1025 = vld [vmem:[%s1023 + $0x4] sm:$0xf]
        %v1026 = vld [vmem:[%s1023 + $0x8] sm:$0xf]
        %v1027 = vld [vmem:[%s1023 + $0xc] sm:$0xf]
        %v1032 = vunpack.c.l.b16 %v1024
        %v1033 = vunpack.c.l.b16 %v1025
        %v1034 = vunpack.c.l.b16 %v1026
        %v1035 = vunpack.c.l.b16 %v1027
        %v1036 = vpack.c.b16 %v1033, %v1032
        %v1037 = vpack.c.b16 %v1035, %v1034
        %1040 = vmatpush.bf16.msra.mxu0 0
        %1041 = vmatpush.bf16.msra.mxu0 0
        %1042 = vmatpush.bf16.msra.mxu0 0
        %1043 = vmatpush.bf16.msra.mxu0 0
        %1044 = vmatpush.bf16.msra.mxu0 0
        %1045 = vmatpush.bf16.msra.mxu0 0
        %1046 = vmatpush.bf16.msra.mxu0 %v1037
        %1047 = vmatpush.bf16.msra.mxu0 %v1036
        %1048 = vmatmul.bf16.gmra.mxu0 %v866
        %v1049 = vpop.f32.mrf.mxu0
        %v1050 = vadd.f32 0.0, %v1049
        %v1051 = vpop.f32.mrf.mxu0
        %v1052 = vadd.f32 0.0, %v1051
        %1053 = vdwg.mxu0
        %s1054 = scalar_lea.vmem %s13, 16
        %v1055 = vld [vmem:[%s1054] sm:$0xf]
        %v1056 = vld [vmem:[%s1054 + $0x4] sm:$0xf]
        %v1057 = vld [vmem:[%s1054 + $0x8] sm:$0xf]
        %v1058 = vld [vmem:[%s1054 + $0xc] sm:$0xf]
        %v1063 = vunpack.c.l.b16 %v1055
        %v1064 = vunpack.c.l.b16 %v1056
        %v1065 = vunpack.c.l.b16 %v1057
        %v1066 = vunpack.c.l.b16 %v1058
        %v1067 = vpack.c.b16 %v1064, %v1063
        %v1068 = vpack.c.b16 %v1066, %v1065
        %1071 = vmatpush.bf16.msra.mxu0 0
        %1072 = vmatpush.bf16.msra.mxu0 0
        %1073 = vmatpush.bf16.msra.mxu0 0
        %1074 = vmatpush.bf16.msra.mxu0 0
        %1075 = vmatpush.bf16.msra.mxu0 0
        %1076 = vmatpush.bf16.msra.mxu0 0
        %1077 = vmatpush.bf16.msra.mxu0 %v1068
        %1078 = vmatpush.bf16.msra.mxu0 %v1067
        %1079 = vmatmul.bf16.gmra.mxu0 %v866
        %v1080 = vpop.f32.mrf.mxu0
        %v1081 = vadd.f32 0.0, %v1080
        %v1082 = vpop.f32.mrf.mxu0
        %v1083 = vadd.f32 0.0, %v1082
        %1084 = vdwg.mxu0
        %v1086 = vsel %vm912, %v1019, 0
        %v1089 = vsel %vm912, %v1021, 0
        %v1092 = vsel %vm912, %v1050, 0
        %v1095 = vsel %vm912, %v1052, 0
        %1097 = vmatpush.xpose.msra.mxu0 0.0
        %1098 = vmatpush.xpose.msra.mxu0 0.0
        %1099 = vmatpush.xpose.msra.mxu0 0.0
        %1100 = vmatpush.xpose.msra.mxu0 0.0
        %1101 = vmatpush.xpose.msra.mxu0 0.0
        %1102 = vmatpush.xpose.msra.mxu0 0.0
        %1103 = vmatpush.xpose.msra.mxu0 0.0
        %1104 = vmatpush.xpose.msra.mxu0 0.0
        %1105 = vmatpush.xpose.msra.mxu0 0.0
        %1106 = vmatpush.xpose.msra.mxu0 0.0
        %1107 = vmatpush.xpose.msra.mxu0 0.0
        %1108 = vmatpush.xpose.msra.mxu0 0.0
        %1109 = vmatpush.xpose.msra.mxu0 0.0
        %1110 = vmatpush.xpose.msra.mxu0 0.0
        %1111 = vmatpush.xpose.msra.mxu0 %v1095
        %1112 = vmatpush.xpose.msra.mxu0 %v1092
        %1113 = vmatmul.f32.gmra.mxu0 %v1086
        %v1114 = vpop.f32.mrf.mxu0
        %v1115 = vadd.f32 %v811, %v1114
        %1116 = vmatmul.f32.gmra.mxu0 %v1089
        %v1117 = vpop.f32.mrf.mxu0
        %v1118 = vadd.f32 %v812, %v1117
        %1119 = vdwg.mxu0
        %v1120 = vsel %vm948, %v1115, -inf
        %1121 = vmax.xlane.f32.xlu0 %v1120
        %v1122 = vpop.xlane.xlu0 %1121
        %v1123 = vsel %vm948, %v1118, -inf
        %1124 = vmax.xlane.f32.xlu0 %v1123
        %v1125 = vpop.xlane.xlu0 %1124
        %v1126 = vsub.f32 %v1115, %v1122
        %v1127 = vsub.f32 %v1118, %v1125
        %v1128 = vmul.f32 %v1126, 1.442695
        %v1129 = vpow.pop %v1128
        %v1130 = vmul.f32 %v1127, 1.442695
        %v1131 = vpow.pop %v1130
        %v1132 = vsel %vm948, %v1129, 0.0
        %1133 = vadd.xlane.f32.xlu0 %v1132
        %v1134 = vpop.xlane.xlu0 %1133
        %v1135 = vsel %vm948, %v1131, 0.0
        %1136 = vadd.xlane.f32.xlu0 %v1135
        %v1137 = vpop.xlane.xlu0 %1136
        %v1138 = vrcp.pop %v1134
        %v1139 = vrcp.pop %v1137
        %v1140 = vmul.f32 %v1129, %v1138
        %v1141 = vmul.f32 %v1131, %v1139
        %v1142 = vpack.c.bf16 %v1141, %v1140
        %v1143 = vpack.c.bf16 %v1083, %v1081
        %v1145 = vsel %vm948, %v1142, 0
        %1147 = vmatpush.bf16.msra.mxu0 0
        %1148 = vmatpush.bf16.msra.mxu0 0
        %1149 = vmatpush.bf16.msra.mxu0 0
        %1150 = vmatpush.bf16.msra.mxu0 0
        %1151 = vmatpush.bf16.msra.mxu0 0
        %1152 = vmatpush.bf16.msra.mxu0 0
        %1153 = vmatpush.bf16.msra.mxu0 0
        %1154 = vmatpush.bf16.msra.mxu0 %v1143
        %1155 = vmatmul.bf16.gmra.mxu0 %v1145
        %v1156 = vpop.f32.mrf.mxu0
        %v1157 = vadd.f32 0.0, %v1156
        %v1158 = vpop.f32.mrf.mxu0
        %v1159 = vadd.f32 0.0, %v1158
        %1160 = vdwg.mxu0
        %v1161 = vpack.c.bf16 %v1159, %v1157
        %s1162 = scalar_lea.vmem %s14, 4
        %v1163 = vld [vmem:[%s1162] sm:$0xf]
        %v1165 = vsel %vm912, %v1161, 0
        %vm1167 = vcmask 1043456
        %v1169 = vsel %vm1167, %v1163, 0
        %1171 = vmatpush.bf16.msra.mxu0 0
        %1172 = vmatpush.bf16.msra.mxu0 0
        %1173 = vmatpush.bf16.msra.mxu0 0
        %1174 = vmatpush.bf16.msra.mxu0 0
        %1175 = vmatpush.bf16.msra.mxu0 0
        %1176 = vmatpush.bf16.msra.mxu0 0
        %1177 = vmatpush.bf16.msra.mxu0 0
        %1178 = vmatpush.bf16.msra.mxu0 %v1169
        %1179 = vmatmul.bf16.gmra.mxu0 %v1165
        %v1180 = vpop.f32.mrf.mxu0
        %v1181 = vadd.f32 0.0, %v1180
        %v1182 = vpop.f32.mrf.mxu0
        %v1183 = vadd.f32 0.0, %v1182
        %1184 = vdwg.mxu0
        %v1186 = vsel %vm912, %v990, 0
        %v1189 = vsel %vm1167, %v991, 0
        %1191 = vmatpush.bf16.msra.mxu0 0
        %1192 = vmatpush.bf16.msra.mxu0 0
        %1193 = vmatpush.bf16.msra.mxu0 0
        %1194 = vmatpush.bf16.msra.mxu0 0
        %1195 = vmatpush.bf16.msra.mxu0 0
        %1196 = vmatpush.bf16.msra.mxu0 0
        %1197 = vmatpush.bf16.msra.mxu0 0
        %1198 = vmatpush.bf16.msra.mxu0 %v1189
        %1199 = vmatmul.bf16.gmra.mxu0 %v1186
        %v1200 = vpop.f32.mrf.mxu0
        %v1201 = vadd.f32 %v1181, %v1200
        %v1202 = vpop.f32.mrf.mxu0
        %v1203 = vadd.f32 %v1183, %v1202
        %1204 = vdwg.mxu0
        %s1205 = scalar_lea.vmem %s11, 32
        %v1206 = vld [vmem:[%s1205] sm:$0xf]
        %v1207 = vld [vmem:[%s1205 + $0x4] sm:$0xf]
        %v1208 = vld [vmem:[%s1205 + $0x8] sm:$0xf]
        %v1209 = vld [vmem:[%s1205 + $0xc] sm:$0xf]
        %v1214 = vunpack.c.l.b16 %v1206
        %v1215 = vunpack.c.l.b16 %v1207
        %v1216 = vunpack.c.l.b16 %v1208
        %v1217 = vunpack.c.l.b16 %v1209
        %v1218 = vpack.c.b16 %v1215, %v1214
        %v1219 = vpack.c.b16 %v1217, %v1216
        %1222 = vmatpush.bf16.msra.mxu0 0
        %1223 = vmatpush.bf16.msra.mxu0 0
        %1224 = vmatpush.bf16.msra.mxu0 0
        %1225 = vmatpush.bf16.msra.mxu0 0
        %1226 = vmatpush.bf16.msra.mxu0 0
        %1227 = vmatpush.bf16.msra.mxu0 0
        %1228 = vmatpush.bf16.msra.mxu0 %v1219
        %1229 = vmatpush.bf16.msra.mxu0 %v1218
        %1230 = vmatmul.bf16.gmra.mxu0 %v833
        %v1231 = vpop.f32.mrf.mxu0
        %v1232 = vadd.f32 0.0, %v1231
        %v1233 = vpop.f32.mrf.mxu0
        %v1234 = vadd.f32 0.0, %v1233
        %1235 = vdwg.mxu0
        %s1236 = scalar_lea.vmem %s12, 32
        %v1237 = vld [vmem:[%s1236] sm:$0xf]
        %v1238 = vld [vmem:[%s1236 + $0x4] sm:$0xf]
        %v1239 = vld [vmem:[%s1236 + $0x8] sm:$0xf]
        %v1240 = vld [vmem:[%s1236 + $0xc] sm:$0xf]
        %v1245 = vunpack.c.l.b16 %v1237
        %v1246 = vunpack.c.l.b16 %v1238
        %v1247 = vunpack.c.l.b16 %v1239
        %v1248 = vunpack.c.l.b16 %v1240
        %v1249 = vpack.c.b16 %v1246, %v1245
        %v1250 = vpack.c.b16 %v1248, %v1247
        %1253 = vmatpush.bf16.msra.mxu0 0
        %1254 = vmatpush.bf16.msra.mxu0 0
        %1255 = vmatpush.bf16.msra.mxu0 0
        %1256 = vmatpush.bf16.msra.mxu0 0
        %1257 = vmatpush.bf16.msra.mxu0 0
        %1258 = vmatpush.bf16.msra.mxu0 0
        %1259 = vmatpush.bf16.msra.mxu0 %v1250
        %1260 = vmatpush.bf16.msra.mxu0 %v1249
        %1261 = vmatmul.bf16.gmra.mxu0 %v866
        %v1262 = vpop.f32.mrf.mxu0
        %v1263 = vadd.f32 0.0, %v1262
        %v1264 = vpop.f32.mrf.mxu0
        %v1265 = vadd.f32 0.0, %v1264
        %1266 = vdwg.mxu0
        %s1267 = scalar_lea.vmem %s13, 32
        %v1268 = vld [vmem:[%s1267] sm:$0xf]
        %v1269 = vld [vmem:[%s1267 + $0x4] sm:$0xf]
        %v1270 = vld [vmem:[%s1267 + $0x8] sm:$0xf]
        %v1271 = vld [vmem:[%s1267 + $0xc] sm:$0xf]
        %v1276 = vunpack.c.l.b16 %v1268
        %v1277 = vunpack.c.l.b16 %v1269
        %v1278 = vunpack.c.l.b16 %v1270
        %v1279 = vunpack.c.l.b16 %v1271
        %v1280 = vpack.c.b16 %v1277, %v1276
        %v1281 = vpack.c.b16 %v1279, %v1278
        %1284 = vmatpush.bf16.msra.mxu0 0
        %1285 = vmatpush.bf16.msra.mxu0 0
        %1286 = vmatpush.bf16.msra.mxu0 0
        %1287 = vmatpush.bf16.msra.mxu0 0
        %1288 = vmatpush.bf16.msra.mxu0 0
        %1289 = vmatpush.bf16.msra.mxu0 0
        %1290 = vmatpush.bf16.msra.mxu0 %v1281
        %1291 = vmatpush.bf16.msra.mxu0 %v1280
        %1292 = vmatmul.bf16.gmra.mxu0 %v866
        %v1293 = vpop.f32.mrf.mxu0
        %v1294 = vadd.f32 0.0, %v1293
        %v1295 = vpop.f32.mrf.mxu0
        %v1296 = vadd.f32 0.0, %v1295
        %1297 = vdwg.mxu0
        %v1299 = vsel %vm912, %v1232, 0
        %v1302 = vsel %vm912, %v1234, 0
        %v1305 = vsel %vm912, %v1263, 0
        %v1308 = vsel %vm912, %v1265, 0
        %1310 = vmatpush.xpose.msra.mxu0 0.0
        %1311 = vmatpush.xpose.msra.mxu0 0.0
        %1312 = vmatpush.xpose.msra.mxu0 0.0
        %1313 = vmatpush.xpose.msra.mxu0 0.0
        %1314 = vmatpush.xpose.msra.mxu0 0.0
        %1315 = vmatpush.xpose.msra.mxu0 0.0
        %1316 = vmatpush.xpose.msra.mxu0 0.0
        %1317 = vmatpush.xpose.msra.mxu0 0.0
        %1318 = vmatpush.xpose.msra.mxu0 0.0
        %1319 = vmatpush.xpose.msra.mxu0 0.0
        %1320 = vmatpush.xpose.msra.mxu0 0.0
        %1321 = vmatpush.xpose.msra.mxu0 0.0
        %1322 = vmatpush.xpose.msra.mxu0 0.0
        %1323 = vmatpush.xpose.msra.mxu0 0.0
        %1324 = vmatpush.xpose.msra.mxu0 %v1308
        %1325 = vmatpush.xpose.msra.mxu0 %v1305
        %1326 = vmatmul.f32.gmra.mxu0 %v1299
        %v1327 = vpop.f32.mrf.mxu0
        %v1328 = vadd.f32 %v811, %v1327
        %1329 = vmatmul.f32.gmra.mxu0 %v1302
        %v1330 = vpop.f32.mrf.mxu0
        %v1331 = vadd.f32 %v812, %v1330
        %1332 = vdwg.mxu0
        %v1333 = vsel %vm948, %v1328, -inf
        %1334 = vmax.xlane.f32.xlu0 %v1333
        %v1335 = vpop.xlane.xlu0 %1334
        %v1336 = vsel %vm948, %v1331, -inf
        %1337 = vmax.xlane.f32.xlu0 %v1336
        %v1338 = vpop.xlane.xlu0 %1337
        %v1339 = vsub.f32 %v1328, %v1335
        %v1340 = vsub.f32 %v1331, %v1338
        %v1341 = vmul.f32 %v1339, 1.442695
        %v1342 = vpow.pop %v1341
        %v1343 = vmul.f32 %v1340, 1.442695
        %v1344 = vpow.pop %v1343
        %v1345 = vsel %vm948, %v1342, 0.0
        %1346 = vadd.xlane.f32.xlu0 %v1345
        %v1347 = vpop.xlane.xlu0 %1346
        %v1348 = vsel %vm948, %v1344, 0.0
        %1349 = vadd.xlane.f32.xlu0 %v1348
        %v1350 = vpop.xlane.xlu0 %1349
        %v1351 = vrcp.pop %v1347
        %v1352 = vrcp.pop %v1350
        %v1353 = vmul.f32 %v1342, %v1351
        %v1354 = vmul.f32 %v1344, %v1352
        %v1355 = vpack.c.bf16 %v1354, %v1353
        %v1356 = vpack.c.bf16 %v1296, %v1294
        %v1358 = vsel %vm948, %v1355, 0
        %1360 = vmatpush.bf16.msra.mxu0 0
        %1361 = vmatpush.bf16.msra.mxu0 0
        %1362 = vmatpush.bf16.msra.mxu0 0
        %1363 = vmatpush.bf16.msra.mxu0 0
        %1364 = vmatpush.bf16.msra.mxu0 0
        %1365 = vmatpush.bf16.msra.mxu0 0
        %1366 = vmatpush.bf16.msra.mxu0 0
        %1367 = vmatpush.bf16.msra.mxu0 %v1356
        %1368 = vmatmul.bf16.gmra.mxu0 %v1358
        %v1369 = vpop.f32.mrf.mxu0
        %v1370 = vadd.f32 0.0, %v1369
        %v1371 = vpop.f32.mrf.mxu0
        %v1372 = vadd.f32 0.0, %v1371
        %1373 = vdwg.mxu0
        %v1374 = vpack.c.bf16 %v1372, %v1370
        %s1375 = scalar_lea.vmem %s14, 8
        %v1376 = vld [vmem:[%s1375] sm:$0xf]
        %v1378 = vsel %vm912, %v1374, 0
        %v1381 = vsel %vm1167, %v1376, 0
        %1383 = vmatpush.bf16.msra.mxu0 0
        %1384 = vmatpush.bf16.msra.mxu0 0
        %1385 = vmatpush.bf16.msra.mxu0 0
        %1386 = vmatpush.bf16.msra.mxu0 0
        %1387 = vmatpush.bf16.msra.mxu0 0
        %1388 = vmatpush.bf16.msra.mxu0 0
        %1389 = vmatpush.bf16.msra.mxu0 0
        %1390 = vmatpush.bf16.msra.mxu0 %v1381
        %1391 = vmatmul.bf16.gmra.mxu0 %v1378
        %v1392 = vpop.f32.mrf.mxu0
        %v1393 = vadd.f32 0.0, %v1392
        %v1394 = vpop.f32.mrf.mxu0
        %v1395 = vadd.f32 0.0, %v1394
        %1396 = vdwg.mxu0
        %v1397 = vadd.f32 %v1201, %v1393
        %v1398 = vadd.f32 %v1203, %v1395
        %s1399 = scalar_lea.vmem %s11, 48
        %v1400 = vld [vmem:[%s1399] sm:$0xf]
        %v1401 = vld [vmem:[%s1399 + $0x4] sm:$0xf]
        %v1402 = vld [vmem:[%s1399 + $0x8] sm:$0xf]
        %v1403 = vld [vmem:[%s1399 + $0xc] sm:$0xf]
        %v1408 = vunpack.c.l.b16 %v1400
        %v1409 = vunpack.c.l.b16 %v1401
        %v1410 = vunpack.c.l.b16 %v1402
        %v1411 = vunpack.c.l.b16 %v1403
        %v1412 = vpack.c.b16 %v1409, %v1408
        %v1413 = vpack.c.b16 %v1411, %v1410
        %1416 = vmatpush.bf16.msra.mxu0 0
        %1417 = vmatpush.bf16.msra.mxu0 0
        %1418 = vmatpush.bf16.msra.mxu0 0
        %1419 = vmatpush.bf16.msra.mxu0 0
        %1420 = vmatpush.bf16.msra.mxu0 0
        %1421 = vmatpush.bf16.msra.mxu0 0
        %1422 = vmatpush.bf16.msra.mxu0 %v1413
        %1423 = vmatpush.bf16.msra.mxu0 %v1412
        %1424 = vmatmul.bf16.gmra.mxu0 %v833
        %v1425 = vpop.f32.mrf.mxu0
        %v1426 = vadd.f32 0.0, %v1425
        %v1427 = vpop.f32.mrf.mxu0
        %v1428 = vadd.f32 0.0, %v1427
        %1429 = vdwg.mxu0
        %s1430 = scalar_lea.vmem %s12, 48
        %v1431 = vld [vmem:[%s1430] sm:$0xf]
        %v1432 = vld [vmem:[%s1430 + $0x4] sm:$0xf]
        %v1433 = vld [vmem:[%s1430 + $0x8] sm:$0xf]
        %v1434 = vld [vmem:[%s1430 + $0xc] sm:$0xf]
        %v1439 = vunpack.c.l.b16 %v1431
        %v1440 = vunpack.c.l.b16 %v1432
        %v1441 = vunpack.c.l.b16 %v1433
        %v1442 = vunpack.c.l.b16 %v1434
        %v1443 = vpack.c.b16 %v1440, %v1439
        %v1444 = vpack.c.b16 %v1442, %v1441
        %1447 = vmatpush.bf16.msra.mxu0 0
        %1448 = vmatpush.bf16.msra.mxu0 0
        %1449 = vmatpush.bf16.msra.mxu0 0
        %1450 = vmatpush.bf16.msra.mxu0 0
        %1451 = vmatpush.bf16.msra.mxu0 0
        %1452 = vmatpush.bf16.msra.mxu0 0
        %1453 = vmatpush.bf16.msra.mxu0 %v1444
        %1454 = vmatpush.bf16.msra.mxu0 %v1443
        %1455 = vmatmul.bf16.gmra.mxu0 %v866
        %v1456 = vpop.f32.mrf.mxu0
        %v1457 = vadd.f32 0.0, %v1456
        %v1458 = vpop.f32.mrf.mxu0
        %v1459 = vadd.f32 0.0, %v1458
        %1460 = vdwg.mxu0
        %s1461 = scalar_lea.vmem %s13, 48
        %v1462 = vld [vmem:[%s1461] sm:$0xf]
        %v1463 = vld [vmem:[%s1461 + $0x4] sm:$0xf]
        %v1464 = vld [vmem:[%s1461 + $0x8] sm:$0xf]
        %v1465 = vld [vmem:[%s1461 + $0xc] sm:$0xf]
        %v1470 = vunpack.c.l.b16 %v1462
        %v1471 = vunpack.c.l.b16 %v1463
        %v1472 = vunpack.c.l.b16 %v1464
        %v1473 = vunpack.c.l.b16 %v1465
        %v1474 = vpack.c.b16 %v1471, %v1470
        %v1475 = vpack.c.b16 %v1473, %v1472
        %1478 = vmatpush.bf16.msra.mxu0 0
        %1479 = vmatpush.bf16.msra.mxu0 0
        %1480 = vmatpush.bf16.msra.mxu0 0
        %1481 = vmatpush.bf16.msra.mxu0 0
        %1482 = vmatpush.bf16.msra.mxu0 0
        %1483 = vmatpush.bf16.msra.mxu0 0
        %1484 = vmatpush.bf16.msra.mxu0 %v1475
        %1485 = vmatpush.bf16.msra.mxu0 %v1474
        %1486 = vmatmul.bf16.gmra.mxu0 %v866
        %v1487 = vpop.f32.mrf.mxu0
        %v1488 = vadd.f32 0.0, %v1487
        %v1489 = vpop.f32.mrf.mxu0
        %v1490 = vadd.f32 0.0, %v1489
        %1491 = vdwg.mxu0
        %v1493 = vsel %vm912, %v1426, 0
        %v1496 = vsel %vm912, %v1428, 0
        %v1499 = vsel %vm912, %v1457, 0
        %v1502 = vsel %vm912, %v1459, 0
        %1504 = vmatpush.xpose.msra.mxu0 0.0
        %1505 = vmatpush.xpose.msra.mxu0 0.0
        %1506 = vmatpush.xpose.msra.mxu0 0.0
        %1507 = vmatpush.xpose.msra.mxu0 0.0
        %1508 = vmatpush.xpose.msra.mxu0 0.0
        %1509 = vmatpush.xpose.msra.mxu0 0.0
        %1510 = vmatpush.xpose.msra.mxu0 0.0
        %1511 = vmatpush.xpose.msra.mxu0 0.0
        %1512 = vmatpush.xpose.msra.mxu0 0.0
        %1513 = vmatpush.xpose.msra.mxu0 0.0
        %1514 = vmatpush.xpose.msra.mxu0 0.0
        %1515 = vmatpush.xpose.msra.mxu0 0.0
        %1516 = vmatpush.xpose.msra.mxu0 0.0
        %1517 = vmatpush.xpose.msra.mxu0 0.0
        %1518 = vmatpush.xpose.msra.mxu0 %v1502
        %1519 = vmatpush.xpose.msra.mxu0 %v1499
        %1520 = vmatmul.f32.gmra.mxu0 %v1493
        %v1521 = vpop.f32.mrf.mxu0
        %v1522 = vadd.f32 %v811, %v1521
        %1523 = vmatmul.f32.gmra.mxu0 %v1496
        %v1524 = vpop.f32.mrf.mxu0
        %v1525 = vadd.f32 %v812, %v1524
        %1526 = vdwg.mxu0
        %v1527 = vsel %vm948, %v1522, -inf
        %1528 = vmax.xlane.f32.xlu0 %v1527
        %v1529 = vpop.xlane.xlu0 %1528
        %v1530 = vsel %vm948, %v1525, -inf
        %1531 = vmax.xlane.f32.xlu0 %v1530
        %v1532 = vpop.xlane.xlu0 %1531
        %v1533 = vsub.f32 %v1522, %v1529
        %v1534 = vsub.f32 %v1525, %v1532
        %v1535 = vmul.f32 %v1533, 1.442695
        %v1536 = vpow.pop %v1535
        %v1537 = vmul.f32 %v1534, 1.442695
        %v1538 = vpow.pop %v1537
        %v1539 = vsel %vm948, %v1536, 0.0
        %1540 = vadd.xlane.f32.xlu0 %v1539
        %v1541 = vpop.xlane.xlu0 %1540
        %v1542 = vsel %vm948, %v1538, 0.0
        %1543 = vadd.xlane.f32.xlu0 %v1542
        %v1544 = vpop.xlane.xlu0 %1543
        %v1545 = vrcp.pop %v1541
        %v1546 = vrcp.pop %v1544
        %v1547 = vmul.f32 %v1536, %v1545
        %v1548 = vmul.f32 %v1538, %v1546
        %v1549 = vpack.c.bf16 %v1548, %v1547
        %v1550 = vpack.c.bf16 %v1490, %v1488
        %v1552 = vsel %vm948, %v1549, 0
        %1554 = vmatpush.bf16.msra.mxu0 0
        %1555 = vmatpush.bf16.msra.mxu0 0
        %1556 = vmatpush.bf16.msra.mxu0 0
        %1557 = vmatpush.bf16.msra.mxu0 0
        %1558 = vmatpush.bf16.msra.mxu0 0
        %1559 = vmatpush.bf16.msra.mxu0 0
        %1560 = vmatpush.bf16.msra.mxu0 0
        %1561 = vmatpush.bf16.msra.mxu0 %v1550
        %1562 = vmatmul.bf16.gmra.mxu0 %v1552
        %v1563 = vpop.f32.mrf.mxu0
        %v1564 = vadd.f32 0.0, %v1563
        %v1565 = vpop.f32.mrf.mxu0
        %v1566 = vadd.f32 0.0, %v1565
        %1567 = vdwg.mxu0
        %v1568 = vpack.c.bf16 %v1566, %v1564
        %s1569 = scalar_lea.vmem %s14, 12
        %v1570 = vld [vmem:[%s1569] sm:$0xf]
        %v1572 = vsel %vm912, %v1568, 0
        %v1575 = vsel %vm1167, %v1570, 0
        %1577 = vmatpush.bf16.msra.mxu0 0
        %1578 = vmatpush.bf16.msra.mxu0 0
        %1579 = vmatpush.bf16.msra.mxu0 0
        %1580 = vmatpush.bf16.msra.mxu0 0
        %1581 = vmatpush.bf16.msra.mxu0 0
        %1582 = vmatpush.bf16.msra.mxu0 0
        %1583 = vmatpush.bf16.msra.mxu0 0
        %1584 = vmatpush.bf16.msra.mxu0 %v1575
        %1585 = vmatmul.bf16.gmra.mxu0 %v1572
        %v1586 = vpop.f32.mrf.mxu0
        %v1587 = vadd.f32 0.0, %v1586
        %v1588 = vpop.f32.mrf.mxu0
        %v1589 = vadd.f32 0.0, %v1588
        %1590 = vdwg.mxu0
        %v1591 = vadd.f32 %v1397, %v1587
        %v1592 = vadd.f32 %v1398, %v1589
        %v1593 = vadd.f32 %v717, %v1591
        %v1594 = vadd.f32 %v718, %v1592
        %v1595 = vsel %vm831, %v1593, 0.0
        %1596 = vadd.xlane.f32.xlu0 %v1595
        %v1597 = vpop.xlane.xlu0 %1596
        %v1598 = vsel %vm831, %v1594, 0.0
        %1599 = vadd.xlane.f32.xlu0 %v1598
        %v1600 = vpop.xlane.xlu0 %1599
        %v1601 = vrcp.pop 32.0
        %v1602 = vmul.f32 32.0, %v1601
        %v1603 = vsub.f32 1.0, %v1602
        %v1604 = vmul.f32 %v1601, %v1603
        %v1605 = vadd.f32 %v1601, %v1604
        %vm1606 = vweird.f32 %v1601
        %v1607 = vsel %vm1606, %v1601, %v1605
        %v1608 = vmul.f32 %v1597, %v1607
        %v1609 = vmul.f32 %v1600, %v1607
        %v1610 = vsub.f32 %v1593, %v1608
        %v1611 = vsub.f32 %v1594, %v1609
        %v1612 = vmul.f32 %v1610, %v1610
        %v1613 = vmul.f32 %v1611, %v1611
        %v1614 = vsel %vm831, %v1612, 0.0
        %1615 = vadd.xlane.f32.xlu0 %v1614
        %v1616 = vpop.xlane.xlu0 %1615
        %v1617 = vsel %vm831, %v1613, 0.0
        %1618 = vadd.xlane.f32.xlu0 %v1617
        %v1619 = vpop.xlane.xlu0 %1618
        %v1620 = vmul.f32 %v1616, %v1607
        %v1621 = vmul.f32 %v1619, %v1607
        %v1622 = vadd.f32 %v1620, 1e-05
        %v1623 = vadd.f32 %v1621, 1e-05
        %v1624 = vrsqrt.pop %v1622
        %v1625 = vmul.f32 %v1624, %v1622
        %v1626 = vmul.f32 %v1625, %v1624
        %v1627 = vmul.f32 0.5, %v1626
        %v1628 = vsub.f32 1.5, %v1627
        %v1629 = vmul.f32 %v1624, %v1628
        %vm1630 = vweird.f32 %v1622
        %vm1631 = vweird.f32 %v1624
        %vm1632 = vmor %vm1630, %vm1631
        %v1633 = vsel %vm1632, %v1624, %v1629
        %v1634 = vrsqrt.pop %v1623
        %v1635 = vmul.f32 %v1634, %v1623
        %v1636 = vmul.f32 %v1635, %v1634
        %v1637 = vmul.f32 0.5, %v1636
        %v1638 = vsub.f32 1.5, %v1637
        %v1639 = vmul.f32 %v1634, %v1638
        %vm1640 = vweird.f32 %v1623
        %vm1641 = vweird.f32 %v1634
        %vm1642 = vmor %vm1640, %vm1641
        %v1643 = vsel %vm1642, %v1634, %v1639
        %v1644 = vmul.f32 %v1610, %v1633
        %v1645 = vmul.f32 %v1611, %v1643
        %v1646 = vpack.c.bf16 %v1645, %v1644
        %v1647 = vld [vmem:[%s15] sm:$0xf]
        %v1648 = vld [vmem:[%s15 + $0x4] sm:$0xf]
        %v1649 = vld [vmem:[%s15 + $0x8] sm:$0xf]
        %v1650 = vld [vmem:[%s15 + $0xc] sm:$0xf]
        %v1651 = vld [vmem:[%s16] sm:$0x1]
        %v1653 = vperm.slane %v1651, 0
        %v1659 = vunpack.c.l.b16 %v1647
        %v1660 = vunpack.c.l.b16 %v1648
        %v1661 = vunpack.c.l.b16 %v1649
        %v1662 = vunpack.c.l.b16 %v1650
        %v1663 = vpack.c.b16 %v1660, %v1659
        %v1664 = vpack.c.b16 %v1662, %v1661
        %v1668 = vsel %vm831, %v1646, 0
        %1670 = vmatpush.bf16.msra.mxu0 0
        %1671 = vmatpush.bf16.msra.mxu0 0
        %1672 = vmatpush.bf16.msra.mxu0 0
        %1673 = vmatpush.bf16.msra.mxu0 0
        %1674 = vmatpush.bf16.msra.mxu0 0
        %1675 = vmatpush.bf16.msra.mxu0 0
        %1676 = vmatpush.bf16.msra.mxu0 %v1664
        %1677 = vmatpush.bf16.msra.mxu0 %v1663
        %1678 = vmatmul.bf16.gmra.mxu0 %v1668
        %v1679 = vpop.f32.mrf.mxu0
        %v1680 = vadd.f32 %v1653, %v1679
        %v1681 = vpop.f32.mrf.mxu0
        %v1682 = vadd.f32 %v1653, %v1681
        %1683 = vdwg.mxu0
        %v1684 = vmax.f32 %v1680, 0.0
        %v1685 = vmax.f32 %v1682, 0.0
        %v1686 = vpack.c.bf16 %v1685, %v1684
        %v1687 = vld [vmem:[%s17] sm:$0xf]
        %v1688 = vld [vmem:[%s17 + $0x4] sm:$0xf]
        %v1689 = vld [vmem:[%s17 + $0x8] sm:$0xf]
        %v1690 = vld [vmem:[%s17 + $0xc] sm:$0xf]
        %v1691 = vld [vmem:[%s17 + $0x10] sm:$0xf]
        %v1692 = vld [vmem:[%s17 + $0x14] sm:$0xf]
        %v1693 = vld [vmem:[%s17 + $0x18] sm:$0xf]
        %v1694 = vld [vmem:[%s17 + $0x1c] sm:$0xf]
        %v1695 = vld [vmem:[%s18] sm:$0x1]
        %v1697 = vperm.slane %v1695, 0
        %v1707 = vunpack.c.l.b16 %v1687
        %v1708 = vunpack.c.l.b16 %v1688
        %v1709 = vunpack.c.l.b16 %v1689
        %v1710 = vunpack.c.l.b16 %v1690
        %v1711 = vunpack.c.l.b16 %v1691
        %v1712 = vunpack.c.l.b16 %v1692
        %v1713 = vunpack.c.l.b16 %v1693
        %v1714 = vunpack.c.l.b16 %v1694
        %v1715 = vpack.c.b16 %v1708, %v1707
        %v1716 = vpack.c.b16 %v1710, %v1709
        %v1717 = vpack.c.b16 %v1712, %v1711
        %v1718 = vpack.c.b16 %v1714, %v1713
        %vm1723 = vcmask 523264
        %v1725 = vsel %vm1723, %v1686, 0
        %1727 = vmatpush.bf16.msra.mxu0 0
        %1728 = vmatpush.bf16.msra.mxu0 0
        %1729 = vmatpush.bf16.msra.mxu0 0
        %1730 = vmatpush.bf16.msra.mxu0 0
        %1731 = vmatpush.bf16.msra.mxu0 %v1718
        %1732 = vmatpush.bf16.msra.mxu0 %v1717
        %1733 = vmatpush.bf16.msra.mxu0 %v1716
        %1734 = vmatpush.bf16.msra.mxu0 %v1715
        %1735 = vmatmul.bf16.gmra.mxu0 %v1725
        %v1736 = vpop.f32.mrf.mxu0
        %v1737 = vadd.f32 %v1697, %v1736
        %v1738 = vpop.f32.mrf.mxu0
        %v1739 = vadd.f32 %v1697, %v1738
        %1740 = vdwg.mxu0
        %v1741 = vadd.f32 %v1644, %v1737
        %v1742 = vadd.f32 %v1645, %v1739
        %v1743 = vsel %vm831, %v1741, 0.0
        %1744 = vadd.xlane.f32.xlu0 %v1743
        %v1745 = vpop.xlane.xlu0 %1744
        %v1746 = vsel %vm831, %v1742, 0.0
        %1747 = vadd.xlane.f32.xlu0 %v1746
        %v1748 = vpop.xlane.xlu0 %1747
        %v1749 = vmul.f32 %v1745, %v1607
        %v1750 = vmul.f32 %v1748, %v1607
        %v1751 = vsub.f32 %v1741, %v1749
        %v1752 = vsub.f32 %v1742, %v1750
        %v1753 = vmul.f32 %v1751, %v1751
        %v1754 = vmul.f32 %v1752, %v1752
        %v1755 = vsel %vm831, %v1753, 0.0
        %1756 = vadd.xlane.f32.xlu0 %v1755
        %v1757 = vpop.xlane.xlu0 %1756
        %v1758 = vsel %vm831, %v1754, 0.0
        %1759 = vadd.xlane.f32.xlu0 %v1758
        %v1760 = vpop.xlane.xlu0 %1759
        %v1761 = vmul.f32 %v1757, %v1607
        %v1762 = vmul.f32 %v1760, %v1607
        %v1763 = vadd.f32 %v1761, 1e-05
        %v1764 = vadd.f32 %v1762, 1e-05
        %v1765 = vrsqrt.pop %v1763
        %v1766 = vmul.f32 %v1765, %v1763
        %v1767 = vmul.f32 %v1766, %v1765
        %v1768 = vmul.f32 0.5, %v1767
        %v1769 = vsub.f32 1.5, %v1768
        %v1770 = vmul.f32 %v1765, %v1769
        %vm1771 = vweird.f32 %v1763
        %vm1772 = vweird.f32 %v1765
        %vm1773 = vmor %vm1771, %vm1772
        %v1774 = vsel %vm1773, %v1765, %v1770
        %v1775 = vrsqrt.pop %v1764
        %v1776 = vmul.f32 %v1775, %v1764
        %v1777 = vmul.f32 %v1776, %v1775
        %v1778 = vmul.f32 0.5, %v1777
        %v1779 = vsub.f32 1.5, %v1778
        %v1780 = vmul.f32 %v1775, %v1779
        %vm1781 = vweird.f32 %v1764
        %vm1782 = vweird.f32 %v1775
        %vm1783 = vmor %vm1781, %vm1782
        %v1784 = vsel %vm1783, %v1775, %v1780
        %v1785 = vmul.f32 %v1751, %v1774
        %v1786 = vmul.f32 %v1752, %v1784
        %v1787 = vpack.c.bf16 %v1786, %v1785
        %s1788 = scalar_lea.vmem %s11, 64
        %v1789 = vld [vmem:[%s1788] sm:$0xf]
        %v1790 = vld [vmem:[%s1788 + $0x4] sm:$0xf]
        %v1791 = vld [vmem:[%s1788 + $0x8] sm:$0xf]
        %v1792 = vld [vmem:[%s1788 + $0xc] sm:$0xf]
        %v1797 = vunpack.c.l.b16 %v1789
        %v1798 = vunpack.c.l.b16 %v1790
        %v1799 = vunpack.c.l.b16 %v1791
        %v1800 = vunpack.c.l.b16 %v1792
        %v1801 = vpack.c.b16 %v1798, %v1797
        %v1802 = vpack.c.b16 %v1800, %v1799
        %v1806 = vsel %vm831, %v1787, 0
        %1808 = vmatpush.bf16.msra.mxu0 0
        %1809 = vmatpush.bf16.msra.mxu0 0
        %1810 = vmatpush.bf16.msra.mxu0 0
        %1811 = vmatpush.bf16.msra.mxu0 0
        %1812 = vmatpush.bf16.msra.mxu0 0
        %1813 = vmatpush.bf16.msra.mxu0 0
        %1814 = vmatpush.bf16.msra.mxu0 %v1802
        %1815 = vmatpush.bf16.msra.mxu0 %v1801
        %1816 = vmatmul.bf16.gmra.mxu0 %v1806
        %v1817 = vpop.f32.mrf.mxu0
        %v1818 = vadd.f32 0.0, %v1817
        %v1819 = vpop.f32.mrf.mxu0
        %v1820 = vadd.f32 0.0, %v1819
        %1821 = vdwg.mxu0
        %s1822 = scalar_lea.vmem %s12, 64
        %v1823 = vld [vmem:[%s1822] sm:$0xf]
        %v1824 = vld [vmem:[%s1822 + $0x4] sm:$0xf]
        %v1825 = vld [vmem:[%s1822 + $0x8] sm:$0xf]
        %v1826 = vld [vmem:[%s1822 + $0xc] sm:$0xf]
        %v1831 = vunpack.c.l.b16 %v1823
        %v1832 = vunpack.c.l.b16 %v1824
        %v1833 = vunpack.c.l.b16 %v1825
        %v1834 = vunpack.c.l.b16 %v1826
        %v1835 = vpack.c.b16 %v1832, %v1831
        %v1836 = vpack.c.b16 %v1834, %v1833
        %1839 = vmatpush.bf16.msra.mxu0 0
        %1840 = vmatpush.bf16.msra.mxu0 0
        %1841 = vmatpush.bf16.msra.mxu0 0
        %1842 = vmatpush.bf16.msra.mxu0 0
        %1843 = vmatpush.bf16.msra.mxu0 0
        %1844 = vmatpush.bf16.msra.mxu0 0
        %1845 = vmatpush.bf16.msra.mxu0 %v1836
        %1846 = vmatpush.bf16.msra.mxu0 %v1835
        %1847 = vmatmul.bf16.gmra.mxu0 %v866
        %v1848 = vpop.f32.mrf.mxu0
        %v1849 = vadd.f32 0.0, %v1848
        %v1850 = vpop.f32.mrf.mxu0
        %v1851 = vadd.f32 0.0, %v1850
        %1852 = vdwg.mxu0
        %s1853 = scalar_lea.vmem %s13, 64
        %v1854 = vld [vmem:[%s1853] sm:$0xf]
        %v1855 = vld [vmem:[%s1853 + $0x4] sm:$0xf]
        %v1856 = vld [vmem:[%s1853 + $0x8] sm:$0xf]
        %v1857 = vld [vmem:[%s1853 + $0xc] sm:$0xf]
        %v1862 = vunpack.c.l.b16 %v1854
        %v1863 = vunpack.c.l.b16 %v1855
        %v1864 = vunpack.c.l.b16 %v1856
        %v1865 = vunpack.c.l.b16 %v1857
        %v1866 = vpack.c.b16 %v1863, %v1862
        %v1867 = vpack.c.b16 %v1865, %v1864
        %1870 = vmatpush.bf16.msra.mxu0 0
        %1871 = vmatpush.bf16.msra.mxu0 0
        %1872 = vmatpush.bf16.msra.mxu0 0
        %1873 = vmatpush.bf16.msra.mxu0 0
        %1874 = vmatpush.bf16.msra.mxu0 0
        %1875 = vmatpush.bf16.msra.mxu0 0
        %1876 = vmatpush.bf16.msra.mxu0 %v1867
        %1877 = vmatpush.bf16.msra.mxu0 %v1866
        %1878 = vmatmul.bf16.gmra.mxu0 %v866
        %v1879 = vpop.f32.mrf.mxu0
        %v1880 = vadd.f32 0.0, %v1879
        %v1881 = vpop.f32.mrf.mxu0
        %v1882 = vadd.f32 0.0, %v1881
        %1883 = vdwg.mxu0
        %v1885 = vsel %vm912, %v1818, 0
        %v1888 = vsel %vm912, %v1820, 0
        %v1891 = vsel %vm912, %v1849, 0
        %v1894 = vsel %vm912, %v1851, 0
        %1896 = vmatpush.xpose.msra.mxu0 0.0
        %1897 = vmatpush.xpose.msra.mxu0 0.0
        %1898 = vmatpush.xpose.msra.mxu0 0.0
        %1899 = vmatpush.xpose.msra.mxu0 0.0
        %1900 = vmatpush.xpose.msra.mxu0 0.0
        %1901 = vmatpush.xpose.msra.mxu0 0.0
        %1902 = vmatpush.xpose.msra.mxu0 0.0
        %1903 = vmatpush.xpose.msra.mxu0 0.0
        %1904 = vmatpush.xpose.msra.mxu0 0.0
        %1905 = vmatpush.xpose.msra.mxu0 0.0
        %1906 = vmatpush.xpose.msra.mxu0 0.0
        %1907 = vmatpush.xpose.msra.mxu0 0.0
        %1908 = vmatpush.xpose.msra.mxu0 0.0
        %1909 = vmatpush.xpose.msra.mxu0 0.0
        %1910 = vmatpush.xpose.msra.mxu0 %v1894
        %1911 = vmatpush.xpose.msra.mxu0 %v1891
        %1912 = vmatmul.f32.gmra.mxu0 %v1885
        %v1913 = vpop.f32.mrf.mxu0
        %v1914 = vadd.f32 %v811, %v1913
        %1915 = vmatmul.f32.gmra.mxu0 %v1888
        %v1916 = vpop.f32.mrf.mxu0
        %v1917 = vadd.f32 %v812, %v1916
        %1918 = vdwg.mxu0
        %v1919 = vsel %vm948, %v1914, -inf
        %1920 = vmax.xlane.f32.xlu0 %v1919
        %v1921 = vpop.xlane.xlu0 %1920
        %v1922 = vsel %vm948, %v1917, -inf
        %1923 = vmax.xlane.f32.xlu0 %v1922
        %v1924 = vpop.xlane.xlu0 %1923
        %v1925 = vsub.f32 %v1914, %v1921
        %v1926 = vsub.f32 %v1917, %v1924
        %v1927 = vmul.f32 %v1925, 1.442695
        %v1928 = vpow.pop %v1927
        %v1929 = vmul.f32 %v1926, 1.442695
        %v1930 = vpow.pop %v1929
        %v1931 = vsel %vm948, %v1928, 0.0
        %1932 = vadd.xlane.f32.xlu0 %v1931
        %v1933 = vpop.xlane.xlu0 %1932
        %v1934 = vsel %vm948, %v1930, 0.0
        %1935 = vadd.xlane.f32.xlu0 %v1934
        %v1936 = vpop.xlane.xlu0 %1935
        %v1937 = vrcp.pop %v1933
        %v1938 = vrcp.pop %v1936
        %v1939 = vmul.f32 %v1928, %v1937
        %v1940 = vmul.f32 %v1930, %v1938
        %v1941 = vpack.c.bf16 %v1940, %v1939
        %v1942 = vpack.c.bf16 %v1882, %v1880
        %v1944 = vsel %vm948, %v1941, 0
        %1946 = vmatpush.bf16.msra.mxu0 0
        %1947 = vmatpush.bf16.msra.mxu0 0
        %1948 = vmatpush.bf16.msra.mxu0 0
        %1949 = vmatpush.bf16.msra.mxu0 0
        %1950 = vmatpush.bf16.msra.mxu0 0
        %1951 = vmatpush.bf16.msra.mxu0 0
        %1952 = vmatpush.bf16.msra.mxu0 0
        %1953 = vmatpush.bf16.msra.mxu0 %v1942
        %1954 = vmatmul.bf16.gmra.mxu0 %v1944
        %v1955 = vpop.f32.mrf.mxu0
        %v1956 = vadd.f32 0.0, %v1955
        %v1957 = vpop.f32.mrf.mxu0
        %v1958 = vadd.f32 0.0, %v1957
        %1959 = vdwg.mxu0
        %v1960 = vpack.c.bf16 %v1958, %v1956
        %s1961 = scalar_lea.vmem %s14, 16
        %v1962 = vld [vmem:[%s1961] sm:$0xf]
        %s1963 = scalar_lea.vmem %s11, 80
        %v1964 = vld [vmem:[%s1963] sm:$0xf]
        %v1965 = vld [vmem:[%s1963 + $0x4] sm:$0xf]
        %v1966 = vld [vmem:[%s1963 + $0x8] sm:$0xf]
        %v1967 = vld [vmem:[%s1963 + $0xc] sm:$0xf]
        %v1972 = vunpack.c.l.b16 %v1964
        %v1973 = vunpack.c.l.b16 %v1965
        %v1974 = vunpack.c.l.b16 %v1966
        %v1975 = vunpack.c.l.b16 %v1967
        %v1976 = vpack.c.b16 %v1973, %v1972
        %v1977 = vpack.c.b16 %v1975, %v1974
        %1980 = vmatpush.bf16.msra.mxu0 0
        %1981 = vmatpush.bf16.msra.mxu0 0
        %1982 = vmatpush.bf16.msra.mxu0 0
        %1983 = vmatpush.bf16.msra.mxu0 0
        %1984 = vmatpush.bf16.msra.mxu0 0
        %1985 = vmatpush.bf16.msra.mxu0 0
        %1986 = vmatpush.bf16.msra.mxu0 %v1977
        %1987 = vmatpush.bf16.msra.mxu0 %v1976
        %1988 = vmatmul.bf16.gmra.mxu0 %v1806
        %v1989 = vpop.f32.mrf.mxu0
        %v1990 = vadd.f32 0.0, %v1989
        %v1991 = vpop.f32.mrf.mxu0
        %v1992 = vadd.f32 0.0, %v1991
        %1993 = vdwg.mxu0
        %s1994 = scalar_lea.vmem %s12, 80
        %v1995 = vld [vmem:[%s1994] sm:$0xf]
        %v1996 = vld [vmem:[%s1994 + $0x4] sm:$0xf]
        %v1997 = vld [vmem:[%s1994 + $0x8] sm:$0xf]
        %v1998 = vld [vmem:[%s1994 + $0xc] sm:$0xf]
        %v2003 = vunpack.c.l.b16 %v1995
        %v2004 = vunpack.c.l.b16 %v1996
        %v2005 = vunpack.c.l.b16 %v1997
        %v2006 = vunpack.c.l.b16 %v1998
        %v2007 = vpack.c.b16 %v2004, %v2003
        %v2008 = vpack.c.b16 %v2006, %v2005
        %2011 = vmatpush.bf16.msra.mxu0 0
        %2012 = vmatpush.bf16.msra.mxu0 0
        %2013 = vmatpush.bf16.msra.mxu0 0
        %2014 = vmatpush.bf16.msra.mxu0 0
        %2015 = vmatpush.bf16.msra.mxu0 0
        %2016 = vmatpush.bf16.msra.mxu0 0
        %2017 = vmatpush.bf16.msra.mxu0 %v2008
        %2018 = vmatpush.bf16.msra.mxu0 %v2007
        %2019 = vmatmul.bf16.gmra.mxu0 %v866
        %v2020 = vpop.f32.mrf.mxu0
        %v2021 = vadd.f32 0.0, %v2020
        %v2022 = vpop.f32.mrf.mxu0
        %v2023 = vadd.f32 0.0, %v2022
        %2024 = vdwg.mxu0
        %s2025 = scalar_lea.vmem %s13, 80
        %v2026 = vld [vmem:[%s2025] sm:$0xf]
        %v2027 = vld [vmem:[%s2025 + $0x4] sm:$0xf]
        %v2028 = vld [vmem:[%s2025 + $0x8] sm:$0xf]
        %v2029 = vld [vmem:[%s2025 + $0xc] sm:$0xf]
        %v2034 = vunpack.c.l.b16 %v2026
        %v2035 = vunpack.c.l.b16 %v2027
        %v2036 = vunpack.c.l.b16 %v2028
        %v2037 = vunpack.c.l.b16 %v2029
        %v2038 = vpack.c.b16 %v2035, %v2034
        %v2039 = vpack.c.b16 %v2037, %v2036
        %2042 = vmatpush.bf16.msra.mxu0 0
        %2043 = vmatpush.bf16.msra.mxu0 0
        %2044 = vmatpush.bf16.msra.mxu0 0
        %2045 = vmatpush.bf16.msra.mxu0 0
        %2046 = vmatpush.bf16.msra.mxu0 0
        %2047 = vmatpush.bf16.msra.mxu0 0
        %2048 = vmatpush.bf16.msra.mxu0 %v2039
        %2049 = vmatpush.bf16.msra.mxu0 %v2038
        %2050 = vmatmul.bf16.gmra.mxu0 %v866
        %v2051 = vpop.f32.mrf.mxu0
        %v2052 = vadd.f32 0.0, %v2051
        %v2053 = vpop.f32.mrf.mxu0
        %v2054 = vadd.f32 0.0, %v2053
        %2055 = vdwg.mxu0
        %v2057 = vsel %vm912, %v1990, 0
        %v2060 = vsel %vm912, %v1992, 0
        %v2063 = vsel %vm912, %v2021, 0
        %v2066 = vsel %vm912, %v2023, 0
        %2068 = vmatpush.xpose.msra.mxu0 0.0
        %2069 = vmatpush.xpose.msra.mxu0 0.0
        %2070 = vmatpush.xpose.msra.mxu0 0.0
        %2071 = vmatpush.xpose.msra.mxu0 0.0
        %2072 = vmatpush.xpose.msra.mxu0 0.0
        %2073 = vmatpush.xpose.msra.mxu0 0.0
        %2074 = vmatpush.xpose.msra.mxu0 0.0
        %2075 = vmatpush.xpose.msra.mxu0 0.0
        %2076 = vmatpush.xpose.msra.mxu0 0.0
        %2077 = vmatpush.xpose.msra.mxu0 0.0
        %2078 = vmatpush.xpose.msra.mxu0 0.0
        %2079 = vmatpush.xpose.msra.mxu0 0.0
        %2080 = vmatpush.xpose.msra.mxu0 0.0
        %2081 = vmatpush.xpose.msra.mxu0 0.0
        %2082 = vmatpush.xpose.msra.mxu0 %v2066
        %2083 = vmatpush.xpose.msra.mxu0 %v2063
        %2084 = vmatmul.f32.gmra.mxu0 %v2057
        %v2085 = vpop.f32.mrf.mxu0
        %v2086 = vadd.f32 %v811, %v2085
        %2087 = vmatmul.f32.gmra.mxu0 %v2060
        %v2088 = vpop.f32.mrf.mxu0
        %v2089 = vadd.f32 %v812, %v2088
        %2090 = vdwg.mxu0
        %v2091 = vsel %vm948, %v2086, -inf
        %2092 = vmax.xlane.f32.xlu0 %v2091
        %v2093 = vpop.xlane.xlu0 %2092
        %v2094 = vsel %vm948, %v2089, -inf
        %2095 = vmax.xlane.f32.xlu0 %v2094
        %v2096 = vpop.xlane.xlu0 %2095
        %v2097 = vsub.f32 %v2086, %v2093
        %v2098 = vsub.f32 %v2089, %v2096
        %v2099 = vmul.f32 %v2097, 1.442695
        %v2100 = vpow.pop %v2099
        %v2101 = vmul.f32 %v2098, 1.442695
        %v2102 = vpow.pop %v2101
        %v2103 = vsel %vm948, %v2100, 0.0
        %2104 = vadd.xlane.f32.xlu0 %v2103
        %v2105 = vpop.xlane.xlu0 %2104
        %v2106 = vsel %vm948, %v2102, 0.0
        %2107 = vadd.xlane.f32.xlu0 %v2106
        %v2108 = vpop.xlane.xlu0 %2107
        %v2109 = vrcp.pop %v2105
        %v2110 = vrcp.pop %v2108
        %v2111 = vmul.f32 %v2100, %v2109
        %v2112 = vmul.f32 %v2102, %v2110
        %v2113 = vpack.c.bf16 %v2112, %v2111
        %v2114 = vpack.c.bf16 %v2054, %v2052
        %v2116 = vsel %vm948, %v2113, 0
        %2118 = vmatpush.bf16.msra.mxu0 0
        %2119 = vmatpush.bf16.msra.mxu0 0
        %2120 = vmatpush.bf16.msra.mxu0 0
        %2121 = vmatpush.bf16.msra.mxu0 0
        %2122 = vmatpush.bf16.msra.mxu0 0
        %2123 = vmatpush.bf16.msra.mxu0 0
        %2124 = vmatpush.bf16.msra.mxu0 0
        %2125 = vmatpush.bf16.msra.mxu0 %v2114
        %2126 = vmatmul.bf16.gmra.mxu0 %v2116
        %v2127 = vpop.f32.mrf.mxu0
        %v2128 = vadd.f32 0.0, %v2127
        %v2129 = vpop.f32.mrf.mxu0
        %v2130 = vadd.f32 0.0, %v2129
        %2131 = vdwg.mxu0
        %v2132 = vpack.c.bf16 %v2130, %v2128
        %s2133 = scalar_lea.vmem %s14, 20
        %v2134 = vld [vmem:[%s2133] sm:$0xf]
        %v2136 = vsel %vm912, %v2132, 0
        %v2139 = vsel %vm1167, %v2134, 0
        %2141 = vmatpush.bf16.msra.mxu0 0
        %2142 = vmatpush.bf16.msra.mxu0 0
        %2143 = vmatpush.bf16.msra.mxu0 0
        %2144 = vmatpush.bf16.msra.mxu0 0
        %2145 = vmatpush.bf16.msra.mxu0 0
        %2146 = vmatpush.bf16.msra.mxu0 0
        %2147 = vmatpush.bf16.msra.mxu0 0
        %2148 = vmatpush.bf16.msra.mxu0 %v2139
        %2149 = vmatmul.bf16.gmra.mxu0 %v2136
        %v2150 = vpop.f32.mrf.mxu0
        %v2151 = vadd.f32 0.0, %v2150
        %v2152 = vpop.f32.mrf.mxu0
        %v2153 = vadd.f32 0.0, %v2152
        %2154 = vdwg.mxu0
        %v2156 = vsel %vm912, %v1960, 0
        %v2159 = vsel %vm1167, %v1962, 0
        %2161 = vmatpush.bf16.msra.mxu0 0
        %2162 = vmatpush.bf16.msra.mxu0 0
        %2163 = vmatpush.bf16.msra.mxu0 0
        %2164 = vmatpush.bf16.msra.mxu0 0
        %2165 = vmatpush.bf16.msra.mxu0 0
        %2166 = vmatpush.bf16.msra.mxu0 0
        %2167 = vmatpush.bf16.msra.mxu0 0
        %2168 = vmatpush.bf16.msra.mxu0 %v2159
        %2169 = vmatmul.bf16.gmra.mxu0 %v2156
        %v2170 = vpop.f32.mrf.mxu0
        %v2171 = vadd.f32 %v2151, %v2170
        %v2172 = vpop.f32.mrf.mxu0
        %v2173 = vadd.f32 %v2153, %v2172
        %2174 = vdwg.mxu0
        %s2175 = scalar_lea.vmem %s11, 96
        %v2176 = vld [vmem:[%s2175] sm:$0xf]
        %v2177 = vld [vmem:[%s2175 + $0x4] sm:$0xf]
        %v2178 = vld [vmem:[%s2175 + $0x8] sm:$0xf]
        %v2179 = vld [vmem:[%s2175 + $0xc] sm:$0xf]
        %v2184 = vunpack.c.l.b16 %v2176
        %v2185 = vunpack.c.l.b16 %v2177
        %v2186 = vunpack.c.l.b16 %v2178
        %v2187 = vunpack.c.l.b16 %v2179
        %v2188 = vpack.c.b16 %v2185, %v2184
        %v2189 = vpack.c.b16 %v2187, %v2186
        %2192 = vmatpush.bf16.msra.mxu0 0
        %2193 = vmatpush.bf16.msra.mxu0 0
        %2194 = vmatpush.bf16.msra.mxu0 0
        %2195 = vmatpush.bf16.msra.mxu0 0
        %2196 = vmatpush.bf16.msra.mxu0 0
        %2197 = vmatpush.bf16.msra.mxu0 0
        %2198 = vmatpush.bf16.msra.mxu0 %v2189
        %2199 = vmatpush.bf16.msra.mxu0 %v2188
        %2200 = vmatmul.bf16.gmra.mxu0 %v1806
        %v2201 = vpop.f32.mrf.mxu0
        %v2202 = vadd.f32 0.0, %v2201
        %v2203 = vpop.f32.mrf.mxu0
        %v2204 = vadd.f32 0.0, %v2203
        %2205 = vdwg.mxu0
        %s2206 = scalar_lea.vmem %s12, 96
        %v2207 = vld [vmem:[%s2206] sm:$0xf]
        %v2208 = vld [vmem:[%s2206 + $0x4] sm:$0xf]
        %v2209 = vld [vmem:[%s2206 + $0x8] sm:$0xf]
        %v2210 = vld [vmem:[%s2206 + $0xc] sm:$0xf]
        %v2215 = vunpack.c.l.b16 %v2207
        %v2216 = vunpack.c.l.b16 %v2208
        %v2217 = vunpack.c.l.b16 %v2209
        %v2218 = vunpack.c.l.b16 %v2210
        %v2219 = vpack.c.b16 %v2216, %v2215
        %v2220 = vpack.c.b16 %v2218, %v2217
        %2223 = vmatpush.bf16.msra.mxu0 0
        %2224 = vmatpush.bf16.msra.mxu0 0
        %2225 = vmatpush.bf16.msra.mxu0 0
        %2226 = vmatpush.bf16.msra.mxu0 0
        %2227 = vmatpush.bf16.msra.mxu0 0
        %2228 = vmatpush.bf16.msra.mxu0 0
        %2229 = vmatpush.bf16.msra.mxu0 %v2220
        %2230 = vmatpush.bf16.msra.mxu0 %v2219
        %2231 = vmatmul.bf16.gmra.mxu0 %v866
        %v2232 = vpop.f32.mrf.mxu0
        %v2233 = vadd.f32 0.0, %v2232
        %v2234 = vpop.f32.mrf.mxu0
        %v2235 = vadd.f32 0.0, %v2234
        %2236 = vdwg.mxu0
        %s2237 = scalar_lea.vmem %s13, 96
        %v2238 = vld [vmem:[%s2237] sm:$0xf]
        %v2239 = vld [vmem:[%s2237 + $0x4] sm:$0xf]
        %v2240 = vld [vmem:[%s2237 + $0x8] sm:$0xf]
        %v2241 = vld [vmem:[%s2237 + $0xc] sm:$0xf]
        %v2246 = vunpack.c.l.b16 %v2238
        %v2247 = vunpack.c.l.b16 %v2239
        %v2248 = vunpack.c.l.b16 %v2240
        %v2249 = vunpack.c.l.b16 %v2241
        %v2250 = vpack.c.b16 %v2247, %v2246
        %v2251 = vpack.c.b16 %v2249, %v2248
        %2254 = vmatpush.bf16.msra.mxu0 0
        %2255 = vmatpush.bf16.msra.mxu0 0
        %2256 = vmatpush.bf16.msra.mxu0 0
        %2257 = vmatpush.bf16.msra.mxu0 0
        %2258 = vmatpush.bf16.msra.mxu0 0
        %2259 = vmatpush.bf16.msra.mxu0 0
        %2260 = vmatpush.bf16.msra.mxu0 %v2251
        %2261 = vmatpush.bf16.msra.mxu0 %v2250
        %2262 = vmatmul.bf16.gmra.mxu0 %v866
        %v2263 = vpop.f32.mrf.mxu0
        %v2264 = vadd.f32 0.0, %v2263
        %v2265 = vpop.f32.mrf.mxu0
        %v2266 = vadd.f32 0.0, %v2265
        %2267 = vdwg.mxu0
        %v2269 = vsel %vm912, %v2202, 0
        %v2272 = vsel %vm912, %v2204, 0
        %v2275 = vsel %vm912, %v2233, 0
        %v2278 = vsel %vm912, %v2235, 0
        %2280 = vmatpush.xpose.msra.mxu0 0.0
        %2281 = vmatpush.xpose.msra.mxu0 0.0
        %2282 = vmatpush.xpose.msra.mxu0 0.0
        %2283 = vmatpush.xpose.msra.mxu0 0.0
        %2284 = vmatpush.xpose.msra.mxu0 0.0
        %2285 = vmatpush.xpose.msra.mxu0 0.0
        %2286 = vmatpush.xpose.msra.mxu0 0.0
        %2287 = vmatpush.xpose.msra.mxu0 0.0
        %2288 = vmatpush.xpose.msra.mxu0 0.0
        %2289 = vmatpush.xpose.msra.mxu0 0.0
        %2290 = vmatpush.xpose.msra.mxu0 0.0
        %2291 = vmatpush.xpose.msra.mxu0 0.0
        %2292 = vmatpush.xpose.msra.mxu0 0.0
        %2293 = vmatpush.xpose.msra.mxu0 0.0
        %2294 = vmatpush.xpose.msra.mxu0 %v2278
        %2295 = vmatpush.xpose.msra.mxu0 %v2275
        %2296 = vmatmul.f32.gmra.mxu0 %v2269
        %v2297 = vpop.f32.mrf.mxu0
        %v2298 = vadd.f32 %v811, %v2297
        %2299 = vmatmul.f32.gmra.mxu0 %v2272
        %v2300 = vpop.f32.mrf.mxu0
        %v2301 = vadd.f32 %v812, %v2300
        %2302 = vdwg.mxu0
        %v2303 = vsel %vm948, %v2298, -inf
        %2304 = vmax.xlane.f32.xlu0 %v2303
        %v2305 = vpop.xlane.xlu0 %2304
        %v2306 = vsel %vm948, %v2301, -inf
        %2307 = vmax.xlane.f32.xlu0 %v2306
        %v2308 = vpop.xlane.xlu0 %2307
        %v2309 = vsub.f32 %v2298, %v2305
        %v2310 = vsub.f32 %v2301, %v2308
        %v2311 = vmul.f32 %v2309, 1.442695
        %v2312 = vpow.pop %v2311
        %v2313 = vmul.f32 %v2310, 1.442695
        %v2314 = vpow.pop %v2313
        %v2315 = vsel %vm948, %v2312, 0.0
        %2316 = vadd.xlane.f32.xlu0 %v2315
        %v2317 = vpop.xlane.xlu0 %2316
        %v2318 = vsel %vm948, %v2314, 0.0
        %2319 = vadd.xlane.f32.xlu0 %v2318
        %v2320 = vpop.xlane.xlu0 %2319
        %v2321 = vrcp.pop %v2317
        %v2322 = vrcp.pop %v2320
        %v2323 = vmul.f32 %v2312, %v2321
        %v2324 = vmul.f32 %v2314, %v2322
        %v2325 = vpack.c.bf16 %v2324, %v2323
        %v2326 = vpack.c.bf16 %v2266, %v2264
        %v2328 = vsel %vm948, %v2325, 0
        %2330 = vmatpush.bf16.msra.mxu0 0
        %2331 = vmatpush.bf16.msra.mxu0 0
        %2332 = vmatpush.bf16.msra.mxu0 0
        %2333 = vmatpush.bf16.msra.mxu0 0
        %2334 = vmatpush.bf16.msra.mxu0 0
        %2335 = vmatpush.bf16.msra.mxu0 0
        %2336 = vmatpush.bf16.msra.mxu0 0
        %2337 = vmatpush.bf16.msra.mxu0 %v2326
        %2338 = vmatmul.bf16.gmra.mxu0 %v2328
        %v2339 = vpop.f32.mrf.mxu0
        %v2340 = vadd.f32 0.0, %v2339
        %v2341 = vpop.f32.mrf.mxu0
        %v2342 = vadd.f32 0.0, %v2341
        %2343 = vdwg.mxu0
        %v2344 = vpack.c.bf16 %v2342, %v2340
        %s2345 = scalar_lea.vmem %s14, 24
        %v2346 = vld [vmem:[%s2345] sm:$0xf]
        %v2348 = vsel %vm912, %v2344, 0
        %v2351 = vsel %vm1167, %v2346, 0
        %2353 = vmatpush.bf16.msra.mxu0 0
        %2354 = vmatpush.bf16.msra.mxu0 0
        %2355 = vmatpush.bf16.msra.mxu0 0
        %2356 = vmatpush.bf16.msra.mxu0 0
        %2357 = vmatpush.bf16.msra.mxu0 0
        %2358 = vmatpush.bf16.msra.mxu0 0
        %2359 = vmatpush.bf16.msra.mxu0 0
        %2360 = vmatpush.bf16.msra.mxu0 %v2351
        %2361 = vmatmul.bf16.gmra.mxu0 %v2348
        %v2362 = vpop.f32.mrf.mxu0
        %v2363 = vadd.f32 0.0, %v2362
        %v2364 = vpop.f32.mrf.mxu0
        %v2365 = vadd.f32 0.0, %v2364
        %2366 = vdwg.mxu0
        %v2367 = vadd.f32 %v2171, %v2363
        %v2368 = vadd.f32 %v2173, %v2365
        %s2369 = scalar_lea.vmem %s11, 112
        %v2370 = vld [vmem:[%s2369] sm:$0xf]
        %v2371 = vld [vmem:[%s2369 + $0x4] sm:$0xf]
        %v2372 = vld [vmem:[%s2369 + $0x8] sm:$0xf]
        %v2373 = vld [vmem:[%s2369 + $0xc] sm:$0xf]
        %v2378 = vunpack.c.l.b16 %v2370
        %v2379 = vunpack.c.l.b16 %v2371
        %v2380 = vunpack.c.l.b16 %v2372
        %v2381 = vunpack.c.l.b16 %v2373
        %v2382 = vpack.c.b16 %v2379, %v2378
        %v2383 = vpack.c.b16 %v2381, %v2380
        %2386 = vmatpush.bf16.msra.mxu0 0
        %2387 = vmatpush.bf16.msra.mxu0 0
        %2388 = vmatpush.bf16.msra.mxu0 0
        %2389 = vmatpush.bf16.msra.mxu0 0
        %2390 = vmatpush.bf16.msra.mxu0 0
        %2391 = vmatpush.bf16.msra.mxu0 0
        %2392 = vmatpush.bf16.msra.mxu0 %v2383
        %2393 = vmatpush.bf16.msra.mxu0 %v2382
        %2394 = vmatmul.bf16.gmra.mxu0 %v1806
        %v2395 = vpop.f32.mrf.mxu0
        %v2396 = vadd.f32 0.0, %v2395
        %v2397 = vpop.f32.mrf.mxu0
        %v2398 = vadd.f32 0.0, %v2397
        %2399 = vdwg.mxu0
        %s2400 = scalar_lea.vmem %s12, 112
        %v2401 = vld [vmem:[%s2400] sm:$0xf]
        %v2402 = vld [vmem:[%s2400 + $0x4] sm:$0xf]
        %v2403 = vld [vmem:[%s2400 + $0x8] sm:$0xf]
        %v2404 = vld [vmem:[%s2400 + $0xc] sm:$0xf]
        %v2409 = vunpack.c.l.b16 %v2401
        %v2410 = vunpack.c.l.b16 %v2402
        %v2411 = vunpack.c.l.b16 %v2403
        %v2412 = vunpack.c.l.b16 %v2404
        %v2413 = vpack.c.b16 %v2410, %v2409
        %v2414 = vpack.c.b16 %v2412, %v2411
        %2417 = vmatpush.bf16.msra.mxu0 0
        %2418 = vmatpush.bf16.msra.mxu0 0
        %2419 = vmatpush.bf16.msra.mxu0 0
        %2420 = vmatpush.bf16.msra.mxu0 0
        %2421 = vmatpush.bf16.msra.mxu0 0
        %2422 = vmatpush.bf16.msra.mxu0 0
        %2423 = vmatpush.bf16.msra.mxu0 %v2414
        %2424 = vmatpush.bf16.msra.mxu0 %v2413
        %2425 = vmatmul.bf16.gmra.mxu0 %v866
        %v2426 = vpop.f32.mrf.mxu0
        %v2427 = vadd.f32 0.0, %v2426
        %v2428 = vpop.f32.mrf.mxu0
        %v2429 = vadd.f32 0.0, %v2428
        %2430 = vdwg.mxu0
        %s2431 = scalar_lea.vmem %s13, 112
        %v2432 = vld [vmem:[%s2431] sm:$0xf]
        %v2433 = vld [vmem:[%s2431 + $0x4] sm:$0xf]
        %v2434 = vld [vmem:[%s2431 + $0x8] sm:$0xf]
        %v2435 = vld [vmem:[%s2431 + $0xc] sm:$0xf]
        %v2440 = vunpack.c.l.b16 %v2432
        %v2441 = vunpack.c.l.b16 %v2433
        %v2442 = vunpack.c.l.b16 %v2434
        %v2443 = vunpack.c.l.b16 %v2435
        %v2444 = vpack.c.b16 %v2441, %v2440
        %v2445 = vpack.c.b16 %v2443, %v2442
        %2448 = vmatpush.bf16.msra.mxu0 0
        %2449 = vmatpush.bf16.msra.mxu0 0
        %2450 = vmatpush.bf16.msra.mxu0 0
        %2451 = vmatpush.bf16.msra.mxu0 0
        %2452 = vmatpush.bf16.msra.mxu0 0
        %2453 = vmatpush.bf16.msra.mxu0 0
        %2454 = vmatpush.bf16.msra.mxu0 %v2445
        %2455 = vmatpush.bf16.msra.mxu0 %v2444
        %2456 = vmatmul.bf16.gmra.mxu0 %v866
        %v2457 = vpop.f32.mrf.mxu0
        %v2458 = vadd.f32 0.0, %v2457
        %v2459 = vpop.f32.mrf.mxu0
        %v2460 = vadd.f32 0.0, %v2459
        %2461 = vdwg.mxu0
        %v2463 = vsel %vm912, %v2396, 0
        %v2466 = vsel %vm912, %v2398, 0
        %v2469 = vsel %vm912, %v2427, 0
        %v2472 = vsel %vm912, %v2429, 0
        %2474 = vmatpush.xpose.msra.mxu0 0.0
        %2475 = vmatpush.xpose.msra.mxu0 0.0
        %2476 = vmatpush.xpose.msra.mxu0 0.0
        %2477 = vmatpush.xpose.msra.mxu0 0.0
        %2478 = vmatpush.xpose.msra.mxu0 0.0
        %2479 = vmatpush.xpose.msra.mxu0 0.0
        %2480 = vmatpush.xpose.msra.mxu0 0.0
        %2481 = vmatpush.xpose.msra.mxu0 0.0
        %2482 = vmatpush.xpose.msra.mxu0 0.0
        %2483 = vmatpush.xpose.msra.mxu0 0.0
        %2484 = vmatpush.xpose.msra.mxu0 0.0
        %2485 = vmatpush.xpose.msra.mxu0 0.0
        %2486 = vmatpush.xpose.msra.mxu0 0.0
        %2487 = vmatpush.xpose.msra.mxu0 0.0
        %2488 = vmatpush.xpose.msra.mxu0 %v2472
        %2489 = vmatpush.xpose.msra.mxu0 %v2469
        %2490 = vmatmul.f32.gmra.mxu0 %v2463
        %v2491 = vpop.f32.mrf.mxu0
        %v2492 = vadd.f32 %v811, %v2491
        %2493 = vmatmul.f32.gmra.mxu0 %v2466
        %v2494 = vpop.f32.mrf.mxu0
        %v2495 = vadd.f32 %v812, %v2494
        %2496 = vdwg.mxu0
        %v2497 = vsel %vm948, %v2492, -inf
        %2498 = vmax.xlane.f32.xlu0 %v2497
        %v2499 = vpop.xlane.xlu0 %2498
        %v2500 = vsel %vm948, %v2495, -inf
        %2501 = vmax.xlane.f32.xlu0 %v2500
        %v2502 = vpop.xlane.xlu0 %2501
        %v2503 = vsub.f32 %v2492, %v2499
        %v2504 = vsub.f32 %v2495, %v2502
        %v2505 = vmul.f32 %v2503, 1.442695
        %v2506 = vpow.pop %v2505
        %v2507 = vmul.f32 %v2504, 1.442695
        %v2508 = vpow.pop %v2507
        %v2509 = vsel %vm948, %v2506, 0.0
        %2510 = vadd.xlane.f32.xlu0 %v2509
        %v2511 = vpop.xlane.xlu0 %2510
        %v2512 = vsel %vm948, %v2508, 0.0
        %2513 = vadd.xlane.f32.xlu0 %v2512
        %v2514 = vpop.xlane.xlu0 %2513
        %v2515 = vrcp.pop %v2511
        %v2516 = vrcp.pop %v2514
        %v2517 = vmul.f32 %v2506, %v2515
        %v2518 = vmul.f32 %v2508, %v2516
        %v2519 = vpack.c.bf16 %v2518, %v2517
        %v2520 = vpack.c.bf16 %v2460, %v2458
        %v2522 = vsel %vm948, %v2519, 0
        %2524 = vmatpush.bf16.msra.mxu0 0
        %2525 = vmatpush.bf16.msra.mxu0 0
        %2526 = vmatpush.bf16.msra.mxu0 0
        %2527 = vmatpush.bf16.msra.mxu0 0
        %2528 = vmatpush.bf16.msra.mxu0 0
        %2529 = vmatpush.bf16.msra.mxu0 0
        %2530 = vmatpush.bf16.msra.mxu0 0
        %2531 = vmatpush.bf16.msra.mxu0 %v2520
        %2532 = vmatmul.bf16.gmra.mxu0 %v2522
        %v2533 = vpop.f32.mrf.mxu0
        %v2534 = vadd.f32 0.0, %v2533
        %v2535 = vpop.f32.mrf.mxu0
        %v2536 = vadd.f32 0.0, %v2535
        %2537 = vdwg.mxu0
        %v2538 = vpack.c.bf16 %v2536, %v2534
        %s2539 = scalar_lea.vmem %s14, 28
        %v2540 = vld [vmem:[%s2539] sm:$0xf]
        %v2542 = vsel %vm912, %v2538, 0
        %v2545 = vsel %vm1167, %v2540, 0
        %2547 = vmatpush.bf16.msra.mxu0 0
        %2548 = vmatpush.bf16.msra.mxu0 0
        %2549 = vmatpush.bf16.msra.mxu0 0
        %2550 = vmatpush.bf16.msra.mxu0 0
        %2551 = vmatpush.bf16.msra.mxu0 0
        %2552 = vmatpush.bf16.msra.mxu0 0
        %2553 = vmatpush.bf16.msra.mxu0 0
        %2554 = vmatpush.bf16.msra.mxu0 %v2545
        %2555 = vmatmul.bf16.gmra.mxu0 %v2542
        %v2556 = vpop.f32.mrf.mxu0
        %v2557 = vadd.f32 0.0, %v2556
        %v2558 = vpop.f32.mrf.mxu0
        %v2559 = vadd.f32 0.0, %v2558
        %2560 = vdwg.mxu0
        %v2561 = vadd.f32 %v2367, %v2557
        %v2562 = vadd.f32 %v2368, %v2559
        %v2563 = vadd.f32 %v1785, %v2561
        %v2564 = vadd.f32 %v1786, %v2562
        %v2565 = vsel %vm831, %v2563, 0.0
        %2566 = vadd.xlane.f32.xlu0 %v2565
        %v2567 = vpop.xlane.xlu0 %2566
        %v2568 = vsel %vm831, %v2564, 0.0
        %2569 = vadd.xlane.f32.xlu0 %v2568
        %v2570 = vpop.xlane.xlu0 %2569
        %v2571 = vmul.f32 %v2567, %v1607
        %v2572 = vmul.f32 %v2570, %v1607
        %v2573 = vsub.f32 %v2563, %v2571
        %v2574 = vsub.f32 %v2564, %v2572
        %v2575 = vmul.f32 %v2573, %v2573
        %v2576 = vmul.f32 %v2574, %v2574
        %v2577 = vsel %vm831, %v2575, 0.0
        %2578 = vadd.xlane.f32.xlu0 %v2577
        %v2579 = vpop.xlane.xlu0 %2578
        %v2580 = vsel %vm831, %v2576, 0.0
        %2581 = vadd.xlane.f32.xlu0 %v2580
        %v2582 = vpop.xlane.xlu0 %2581
        %v2583 = vmul.f32 %v2579, %v1607
        %v2584 = vmul.f32 %v2582, %v1607
        %v2585 = vadd.f32 %v2583, 1e-05
        %v2586 = vadd.f32 %v2584, 1e-05
        %v2587 = vrsqrt.pop %v2585
        %v2588 = vmul.f32 %v2587, %v2585
        %v2589 = vmul.f32 %v2588, %v2587
        %v2590 = vmul.f32 0.5, %v2589
        %v2591 = vsub.f32 1.5, %v2590
        %v2592 = vmul.f32 %v2587, %v2591
        %vm2593 = vweird.f32 %v2585
        %vm2594 = vweird.f32 %v2587
        %vm2595 = vmor %vm2593, %vm2594
        %v2596 = vsel %vm2595, %v2587, %v2592
        %v2597 = vrsqrt.pop %v2586
        %v2598 = vmul.f32 %v2597, %v2586
        %v2599 = vmul.f32 %v2598, %v2597
        %v2600 = vmul.f32 0.5, %v2599
        %v2601 = vsub.f32 1.5, %v2600
        %v2602 = vmul.f32 %v2597, %v2601
        %vm2603 = vweird.f32 %v2586
        %vm2604 = vweird.f32 %v2597
        %vm2605 = vmor %vm2603, %vm2604
        %v2606 = vsel %vm2605, %v2597, %v2602
        %v2607 = vmul.f32 %v2573, %v2596
        %v2608 = vmul.f32 %v2574, %v2606
        %v2609 = vpack.c.bf16 %v2608, %v2607
        %s2610 = scalar_lea.vmem %s15, 16
        %v2611 = vld [vmem:[%s2610] sm:$0xf]
        %v2612 = vld [vmem:[%s2610 + $0x4] sm:$0xf]
        %v2613 = vld [vmem:[%s2610 + $0x8] sm:$0xf]
        %v2614 = vld [vmem:[%s2610 + $0xc] sm:$0xf]
        %s2615 = scalar_lea.vmem %s16, 1
        %v2616 = vld [vmem:[%s2615] sm:$0x1]
        %v2618 = vperm.slane %v2616, 0
        %v2624 = vunpack.c.l.b16 %v2611
        %v2625 = vunpack.c.l.b16 %v2612
        %v2626 = vunpack.c.l.b16 %v2613
        %v2627 = vunpack.c.l.b16 %v2614
        %v2628 = vpack.c.b16 %v2625, %v2624
        %v2629 = vpack.c.b16 %v2627, %v2626
        %v2633 = vsel %vm831, %v2609, 0
        %2635 = vmatpush.bf16.msra.mxu0 0
        %2636 = vmatpush.bf16.msra.mxu0 0
        %2637 = vmatpush.bf16.msra.mxu0 0
        %2638 = vmatpush.bf16.msra.mxu0 0
        %2639 = vmatpush.bf16.msra.mxu0 0
        %2640 = vmatpush.bf16.msra.mxu0 0
        %2641 = vmatpush.bf16.msra.mxu0 %v2629
        %2642 = vmatpush.bf16.msra.mxu0 %v2628
        %2643 = vmatmul.bf16.gmra.mxu0 %v2633
        %v2644 = vpop.f32.mrf.mxu0
        %v2645 = vadd.f32 %v2618, %v2644
        %v2646 = vpop.f32.mrf.mxu0
        %v2647 = vadd.f32 %v2618, %v2646
        %2648 = vdwg.mxu0
        %v2649 = vmax.f32 %v2645, 0.0
        %v2650 = vmax.f32 %v2647, 0.0
        %v2651 = vpack.c.bf16 %v2650, %v2649
        %s2652 = scalar_lea.vmem %s17, 32
        %v2653 = vld [vmem:[%s2652] sm:$0xf]
        %v2654 = vld [vmem:[%s2652 + $0x4] sm:$0xf]
        %v2655 = vld [vmem:[%s2652 + $0x8] sm:$0xf]
        %v2656 = vld [vmem:[%s2652 + $0xc] sm:$0xf]
        %v2657 = vld [vmem:[%s2652 + $0x10] sm:$0xf]
        %v2658 = vld [vmem:[%s2652 + $0x14] sm:$0xf]
        %v2659 = vld [vmem:[%s2652 + $0x18] sm:$0xf]
        %v2660 = vld [vmem:[%s2652 + $0x1c] sm:$0xf]
        %s2661 = scalar_lea.vmem %s18, 1
        %v2662 = vld [vmem:[%s2661] sm:$0x1]
        %v2664 = vperm.slane %v2662, 0
        %v2674 = vunpack.c.l.b16 %v2653
        %v2675 = vunpack.c.l.b16 %v2654
        %v2676 = vunpack.c.l.b16 %v2655
        %v2677 = vunpack.c.l.b16 %v2656
        %v2678 = vunpack.c.l.b16 %v2657
        %v2679 = vunpack.c.l.b16 %v2658
        %v2680 = vunpack.c.l.b16 %v2659
        %v2681 = vunpack.c.l.b16 %v2660
        %v2682 = vpack.c.b16 %v2675, %v2674
        %v2683 = vpack.c.b16 %v2677, %v2676
        %v2684 = vpack.c.b16 %v2679, %v2678
        %v2685 = vpack.c.b16 %v2681, %v2680
        %v2691 = vsel %vm1723, %v2651, 0
        %2693 = vmatpush.bf16.msra.mxu0 0
        %2694 = vmatpush.bf16.msra.mxu0 0
        %2695 = vmatpush.bf16.msra.mxu0 0
        %2696 = vmatpush.bf16.msra.mxu0 0
        %2697 = vmatpush.bf16.msra.mxu0 %v2685
        %2698 = vmatpush.bf16.msra.mxu0 %v2684
        %2699 = vmatpush.bf16.msra.mxu0 %v2683
        %2700 = vmatpush.bf16.msra.mxu0 %v2682
        %2701 = vmatmul.bf16.gmra.mxu0 %v2691
        %v2702 = vpop.f32.mrf.mxu0
        %v2703 = vadd.f32 %v2664, %v2702
        %v2704 = vpop.f32.mrf.mxu0
        %v2705 = vadd.f32 %v2664, %v2704
        %2706 = vdwg.mxu0
        %v2707 = vadd.f32 %v2607, %v2703
        %v2708 = vadd.f32 %v2608, %v2705
        %v2709 = vsel %vm831, %v2707, 0.0
        %2710 = vadd.xlane.f32.xlu0 %v2709
        %v2711 = vpop.xlane.xlu0 %2710
        %v2712 = vsel %vm831, %v2708, 0.0
        %2713 = vadd.xlane.f32.xlu0 %v2712
        %v2714 = vpop.xlane.xlu0 %2713
        %v2715 = vmul.f32 %v2711, %v1607
        %v2716 = vmul.f32 %v2714, %v1607
        %v2717 = vsub.f32 %v2707, %v2715
        %v2718 = vsub.f32 %v2708, %v2716
        %v2719 = vmul.f32 %v2717, %v2717
        %v2720 = vmul.f32 %v2718, %v2718
        %v2721 = vsel %vm831, %v2719, 0.0
        %2722 = vadd.xlane.f32.xlu0 %v2721
        %v2723 = vpop.xlane.xlu0 %2722
        %v2724 = vsel %vm831, %v2720, 0.0
        %2725 = vadd.xlane.f32.xlu0 %v2724
        %v2726 = vpop.xlane.xlu0 %2725
        %v2727 = vmul.f32 %v2723, %v1607
        %v2728 = vmul.f32 %v2726, %v1607
        %v2729 = vadd.f32 %v2727, 1e-05
        %v2730 = vadd.f32 %v2728, 1e-05
        %v2731 = vrsqrt.pop %v2729
        %v2732 = vmul.f32 %v2731, %v2729
        %v2733 = vmul.f32 %v2732, %v2731
        %v2734 = vmul.f32 0.5, %v2733
        %v2735 = vsub.f32 1.5, %v2734
        %v2736 = vmul.f32 %v2731, %v2735
        %vm2737 = vweird.f32 %v2729
        %vm2738 = vweird.f32 %v2731
        %vm2739 = vmor %vm2737, %vm2738
        %v2740 = vsel %vm2739, %v2731, %v2736
        %v2741 = vrsqrt.pop %v2730
        %v2742 = vmul.f32 %v2741, %v2730
        %v2743 = vmul.f32 %v2742, %v2741
        %v2744 = vmul.f32 0.5, %v2743
        %v2745 = vsub.f32 1.5, %v2744
        %v2746 = vmul.f32 %v2741, %v2745
        %vm2747 = vweird.f32 %v2730
        %vm2748 = vweird.f32 %v2741
        %vm2749 = vmor %vm2747, %vm2748
        %v2750 = vsel %vm2749, %v2741, %v2746
        %v2751 = vmul.f32 %v2717, %v2740
        %v2752 = vmul.f32 %v2718, %v2750
        %v2753 = vpack.c.bf16 %v2752, %v2751
        %v2754 = vld [vmem:[%s19] sm:$0xf]
        %v2755 = vld [vmem:[%s19 + $0x4] sm:$0xf]
        %v2756 = vld [vmem:[%s19 + $0x8] sm:$0xf]
        %v2757 = vld [vmem:[%s19 + $0xc] sm:$0xf]
        %v2758 = vld [vmem:[%s20] sm:$0x1]
        %v2760 = vperm.slane %v2758, 0
        %v2766 = vunpack.c.l.b16 %v2754
        %v2767 = vunpack.c.l.b16 %v2755
        %v2768 = vunpack.c.l.b16 %v2756
        %v2769 = vunpack.c.l.b16 %v2757
        %v2770 = vpack.c.b16 %v2767, %v2766
        %v2771 = vpack.c.b16 %v2769, %v2768
        %v2775 = vsel %vm831, %v2753, 0
        %2777 = vmatpush.bf16.msra.mxu0 0
        %2778 = vmatpush.bf16.msra.mxu0 0
        %2779 = vmatpush.bf16.msra.mxu0 0
        %2780 = vmatpush.bf16.msra.mxu0 0
        %2781 = vmatpush.bf16.msra.mxu0 0
        %2782 = vmatpush.bf16.msra.mxu0 0
        %2783 = vmatpush.bf16.msra.mxu0 %v2771
        %2784 = vmatpush.bf16.msra.mxu0 %v2770
        %2785 = vmatmul.bf16.gmra.mxu0 %v2775
        %v2786 = vpop.f32.mrf.mxu0
        %v2787 = vadd.f32 %v2760, %v2786
        %v2788 = vpop.f32.mrf.mxu0
        %v2789 = vadd.f32 %v2760, %v2788
        %2790 = vdwg.mxu0
        %vm2791 = vcmp.gt.f32.partialorder %v707, 0.5
        %vm2792 = vcmp.gt.f32.partialorder %v708, 0.5
        %v2793 = vsel %vm2791, 1, 0
        %v2794 = vsel %vm2792, 1, 0
        %2795 = vset.pattern.permute.xlu0 0
        %2796 = vperm.xlu0 %2795, %v2793
        %v2797 = vpop.permute.xlu0 %2796
        %2798 = vset.pattern.permute.xlu0 0
        %2799 = vperm.xlu0 %2798, %v2794
        %v2800 = vpop.permute.xlu0 %2799
        %vm2801 = vcmp.eq.s32.totalorder %v2797, 1
        %vm2802 = vcmp.eq.s32.totalorder %v2800, 1
        %v2803 = vsel %vm2801, %v2787, %v719
        %v2804 = vsel %vm2802, %v2789, %v720
        %2805 = vst [vmem:[#allocation2] sm:$0xff] %v2803
        %2806 = vst [vmem:[#allocation2 + $0x8] sm:$0xff] %v2804
        %v2807 = vld [vmem:[%s6] sm:$0xff]
        %v2808 = vld [vmem:[%s6 + $0x8] sm:$0xff]
        %v2809 = vsub.f32 %v2787, %v2807
        %v2810 = vsub.f32 %v2789, %v2808
        %2812 = vset.pattern.permute.xlu0 0
        %2813 = vperm.xlu0 %2812, %v707
        %v2814 = vpop.permute.xlu0 %2813
        %2817 = vset.pattern.permute.xlu0 0
        %2818 = vperm.xlu0 %2817, %v708
        %v2819 = vpop.permute.xlu0 %2818
        %v2821 = vmul.f32 %v2809, %v2814
        %v2822 = vmul.f32 %v2810, %v2819
        %v2823 = vand.u32 2147483647, %v2821
        %v2824 = vand.u32 2147483647, %v2822
        %v2825 = vadd.f32 %v2823, %v2824
        %2826 = vadd.xlane.f32.xlu0 %v2825
        %v2827 = vpop.xlane.xlu0 %2826
        %v2828 = vrot.slane %v2827, 4
        %v2829 = vadd.f32 %v2827, %v2828
        %v2830 = vrot.slane %v2829, 2
        %v2831 = vadd.f32 %v2829, %v2830
        %v2832 = vrot.slane %v2831, 1
        %v2833 = vadd.f32 %v2831, %v2832
        %s2834 = vtos %v2833
        %vm2835 = vcmask 7168
        %v2836 = vsel %vm2835, %v707, 0.0
        %v2837 = vsel %vm2835, %v708, 0.0
        %v2838 = vadd.f32 %v2836, %v2837
        %2839 = vadd.xlane.f32.xlu0 %v2838
        %v2840 = vpop.xlane.xlu0 %2839
        %v2841 = vrot.slane %v2840, 4
        %v2842 = vadd.f32 %v2840, %v2841
        %v2843 = vrot.slane %v2842, 2
        %v2844 = vadd.f32 %v2842, %v2843
        %v2845 = vrot.slane %v2844, 1
        %v2846 = vadd.f32 %v2844, %v2845
        %s2847 = vtos %v2846
        %s2848 = smul.f32 %s2847, 12.0
        %v2849 = vstv %s2848
        %v2850 = vrcp.pop %v2849
        %v2851 = vmul.f32 %v2849, %v2850
        %v2852 = vsub.f32 1.0, %v2851
        %v2853 = vmul.f32 %v2850, %v2852
        %v2854 = vadd.f32 %v2850, %v2853
        %vm2855 = vweird.f32 %v2849
        %vm2856 = vweird.f32 %v2850
        %vm2857 = vmor %vm2855, %vm2856
        %v2858 = vsel %vm2857, %v2850, %v2854
        %v2859 = vand.u32 2147483647, %v2849
        %vm2860 = vcmp.eq.f32.partialorder %v2859, 8.507059e+37
        %v2861 = vand.u32 %v2849, 2147483648
        %v2862 = vor.u32 1.1754944e-38, %v2861
        %v2863 = vsel %vm2860, %v2862, %v2858
        %s2864 = vtos %v2863
        %s2865 = smul.f32 %s2834, %s2864
        %v2866 = vmul.f32 %v2821, %v2821
        %v2867 = vmul.f32 %v2822, %v2822
        %v2868 = vld [vmem:[%s8] sm:$0xff]
        %v2869 = vld [vmem:[%s8 + $0x8] sm:$0xff]
        %v2870 = vld [vmem:[%s8 + $0x10] sm:$0xff]
        %v2871 = vld [vmem:[%s8 + $0x18] sm:$0xff]
        %v2872 = vld [vmem:[%s8 + $0x20] sm:$0xff]
        %v2873 = vld [vmem:[%s8 + $0x28] sm:$0xff]
        %v2874 = vld [vmem:[%s8 + $0x30] sm:$0xff]
        %v2875 = vld [vmem:[%s8 + $0x38] sm:$0xff]
        %v2876 = vld [vmem:[%s8 + $0x40] sm:$0xff]
        %v2877 = vld [vmem:[%s8 + $0x48] sm:$0xff]
        %v2878 = vld [vmem:[%s8 + $0x50] sm:$0xff]
        %v2879 = vld [vmem:[%s8 + $0x58] sm:$0xff]
        %v2880 = vld [vmem:[%s8 + $0x60] sm:$0xff]
        %v2881 = vld [vmem:[%s8 + $0x68] sm:$0xff]
        %v2882 = vld [vmem:[%s8 + $0x70] sm:$0xff]
        %v2883 = vld [vmem:[%s8 + $0x78] sm:$0xff]
        %2884 = vmatpush.msra.mxu0 %v2883
        %2885 = vmatpush.msra.mxu0 %v2882
        %2886 = vmatpush.msra.mxu0 %v2881
        %2887 = vmatpush.msra.mxu0 %v2880
        %2888 = vmatpush.msra.mxu0 %v2879
        %2889 = vmatpush.msra.mxu0 %v2878
        %2890 = vmatpush.msra.mxu0 %v2877
        %2891 = vmatpush.msra.mxu0 %v2876
        %2892 = vmatpush.msra.mxu0 %v2875
        %2893 = vmatpush.msra.mxu0 %v2874
        %2894 = vmatpush.msra.mxu0 %v2873
        %2895 = vmatpush.msra.mxu0 %v2872
        %2896 = vmatpush.msra.mxu0 %v2871
        %2897 = vmatpush.msra.mxu0 %v2870
        %2898 = vmatpush.msra.mxu0 %v2869
        %2899 = vmatpush.msra.mxu0 %v2868
        %2900 = vmatmul.f32.gmra.mxu0 %v2866
        %v2901 = vpop.f32.mrf.mxu0
        %v2902 = vadd.f32 0.0, %v2901
        %2903 = vmatmul.f32.gmra.mxu0 %v2867
        %v2904 = vpop.f32.mrf.mxu0
        %v2905 = vadd.f32 0.0, %v2904
        %2906 = vdwg.mxu0
        %v2907 = vrsqrt.pop %v2902
        %v2908 = vmul.f32 %v2907, %v2902
        %v2909 = vmul.f32 %v2908, %v2907
        %v2910 = vmul.f32 0.5, %v2909
        %v2911 = vsub.f32 1.5, %v2910
        %v2912 = vmul.f32 %v2907, %v2911
        %v2913 = vmul.f32 %v2902, %v2912
        %vm2914 = vcmp.eq.f32.partialorder %v2902, inf
        %v2915 = vsel %vm2914, %v2902, %v2913
        %vm2916 = vcmp.eq.f32.partialorder %v2902, 0.0
        %v2917 = vand.u32 %v2902, 2147483648
        %v2918 = vsel %vm2916, %v2917, %v2915
        %v2919 = vrsqrt.pop %v2905
        %v2920 = vmul.f32 %v2919, %v2905
        %v2921 = vmul.f32 %v2920, %v2919
        %v2922 = vmul.f32 0.5, %v2921
        %v2923 = vsub.f32 1.5, %v2922
        %v2924 = vmul.f32 %v2919, %v2923
        %v2925 = vmul.f32 %v2905, %v2924
        %vm2926 = vcmp.eq.f32.partialorder %v2905, inf
        %v2927 = vsel %vm2926, %v2905, %v2925
        %vm2928 = vcmp.eq.f32.partialorder %v2905, 0.0
        %v2929 = vand.u32 %v2905, 2147483648
        %v2930 = vsel %vm2928, %v2929, %v2927
        %v2931 = vadd.f32 %v2918, %v2930
        %2932 = vadd.xlane.f32.xlu0 %v2931
        %v2933 = vpop.xlane.xlu0 %2932
        %v2934 = vrot.slane %v2933, 4
        %v2935 = vadd.f32 %v2933, %v2934
        %v2936 = vrot.slane %v2935, 2
        %v2937 = vadd.f32 %v2935, %v2936
        %v2938 = vrot.slane %v2937, 1
        %v2939 = vadd.f32 %v2937, %v2938
        %s2940 = vtos %v2939
        %v2941 = vld [vmem:[%s7] sm:$0xff]
        %v2942 = vld [vmem:[%s7 + $0x8] sm:$0xff]
        %v2943 = vsub.f32 1.0, %v2941
        %v2944 = vsub.f32 1.0, %v2942
        %v2945 = vmul.f32 %v2943, %v2814
        %v2946 = vmul.f32 %v2944, %v2819
        %v2947 = vadd.f32 %v2945, %v2946
        %2948 = vadd.xlane.f32.xlu0 %v2947
        %v2949 = vpop.xlane.xlu0 %2948
        %v2950 = vrot.slane %v2949, 4
        %v2951 = vadd.f32 %v2949, %v2950
        %v2952 = vrot.slane %v2951, 2
        %v2953 = vadd.f32 %v2951, %v2952
        %v2954 = vrot.slane %v2953, 1
        %v2955 = vadd.f32 %v2953, %v2954
        %s2956 = vtos %v2955
        %s2957 = smul.f32 %s2956, 0.5
        %s2958 = sld [smem:[#allocation5]]
        %s2959 = sadd.f32 %s2958, %s2865
        %s2960 = scalar_lea.smem [#allocation5], 0
        %2961 = sst [smem:[%s2960]] %s2959
        %s2962 = sld [smem:[#allocation7]]
        %s2963 = sadd.f32 %s2962, %s2940
        %s2964 = scalar_lea.smem [#allocation7], 0
        %2965 = sst [smem:[%s2964]] %s2963
        %s2966 = sld [smem:[#allocation9]]
        %s2967 = sadd.f32 %s2966, %s2957
        %s2968 = scalar_lea.smem [#allocation9], 0
        %2969 = sst [smem:[%s2968]] %s2967
        // Predicated region
        $region105: #{fwd.1} parent=99 // pred_check
          %p2970 = pneg %p488
        $region106: #{fwd.1} parent=99 // pred_check_branch
          %2972 = sbr.rel (%p2970) target = $region108
        $region107: #{fwd.1} parent=99 // pred_region
          %2974 = vsyncadd [#allocation6], 0
          %s2976 = sshll.u32 %s21, 4
          %s2977 = int_to_ptr.hbm [resolvable:$true] %s2976
          %2979 = dma.smem_to_hbm [#allocation5], 16, %s2977, [#allocation6]
        $region108: #{fwd.1} parent=99 // pred_fallthru
          _
        // Predicated region
        $region109: #{fwd.1} parent=99 // pred_check
          %p2980 = pneg %p509
        $region110: #{fwd.1} parent=99 // pred_check_branch
          %2982 = sbr.rel (%p2980) target = $region112
        $region111: #{fwd.1} parent=99 // pred_region
          %2984 = vsyncadd [#allocation8], 0
          %s2986 = sshll.u32 %s22, 4
          %s2987 = int_to_ptr.hbm [resolvable:$true] %s2986
          %2989 = dma.smem_to_hbm [#allocation7], 16, %s2987, [#allocation8]
        $region112: #{fwd.1} parent=99 // pred_fallthru
          _
        // Predicated region
        $region113: #{fwd.1} parent=99 // pred_check
          %p2990 = pneg %p530
        $region114: #{fwd.1} parent=99 // pred_check_branch
          %2992 = sbr.rel (%p2990) target = $region116
        $region115: #{fwd.1} parent=99 // pred_region
          %2994 = vsyncadd [#allocation8], 0
          %s2996 = sshll.u32 %s23, 4
          %s2997 = int_to_ptr.hbm [resolvable:$true] %s2996
          %2999 = dma.smem_to_hbm [#allocation9], 16, %s2997, [#allocation8]
        $region116: #{fwd.1} parent=99 // pred_fallthru
          _
        // Predicated region
        $region117: #{fwd.1} parent=99 // pred_check
          %p3000 = pneg %p488
        $region118: #{fwd.1} parent=99 // pred_check_branch
          %3002 = sbr.rel (%p3000) target = $region120
        $region119: #{fwd.1} parent=99 // pred_region
          %3004 = dma.done [#allocation6], 16
        $region120: #{fwd.1} parent=99 // pred_fallthru
          _
        // Predicated region
        $region121: #{fwd.1} parent=99 // pred_check
          %p3005 = pneg %p509
        $region122: #{fwd.1} parent=99 // pred_check_branch
          %3007 = sbr.rel (%p3005) target = $region124
        $region123: #{fwd.1} parent=99 // pred_region
          %3009 = dma.done [#allocation8], 16
        $region124: #{fwd.1} parent=99 // pred_fallthru
          _
        // Predicated region
        $region125: #{fwd.1} parent=99 // pred_check
          %p3010 = pneg %p530
        $region126: #{fwd.1} parent=99 // pred_check_branch
          %3012 = sbr.rel (%p3010) target = $region128
        $region127: #{fwd.1} parent=99 // pred_region
          %3014 = dma.done [#allocation8], 16
        $region128: #{fwd.1} parent=99 // pred_fallthru
          _
        %3015 = sfence
      $region100: #{fwd.1} parent=5 // pred_fallthru
        _
      %p3016 = scmp.le.s32.totalorder 2, %s40
      // Predicated region
      $region129: #{fwd.1} parent=5 // pred_check
        %p3017 = pneg %p3016
      $region130: #{fwd.1} parent=5 // pred_check_branch
        %3019 = sbr.rel (%p3017) target = $region132
      $region131: #{fwd.1} parent=5 // pred_region
        %s3020 = ssub.s32 %s40, 2
      $region132: #{fwd.1} parent=5 // pred_fallthru
        _
    $region6: #{fwd.1} parent=1 // loop_footer
      %s44 = sadd.s32 1, %s40
    $region7: #{fwd.1} parent=1 // loop_footer_branch
      %39 = sbr.rel target = $region3
    $region8: #{fwd.1} parent=1 // loop_exit
      _
    %3021 = vsyncpa [#allocation6], 1
    %s3022 = scalar_lea.sflag [#allocation6], 1
    %3023 = vsyncpa %s3022, 1
    %3024 = vsyncpa [#allocation8], 1

</llo_original>
